<compile_context>
chip_gen: v6e
topology: v6e:2x2x1
jax: 0.10.0
libtpu: 0.0.40
codegen_flags: <defaults>
</compile_context>

<pallas_src>
import jax
import jax.numpy as jnp
from jax.experimental import pallas as pl
from jax.experimental.pallas import tpu as pltpu

# ---- module hyperparameters (deterministic, in-script) ----------------------
G_INPUTS = 32
MODEL_COMPLEXITY = 16
IMAGE_Y = 16
IMAGE_X = 16
LEAK = 0.2

D1 = 8 * MODEL_COMPLEXITY      # 128
D2 = 16 * MODEL_COMPLEXITY     # 256
D3 = 32 * MODEL_COMPLEXITY     # 512
D_OUT = IMAGE_Y * IMAGE_X      # 256

DOT_DTYPE = jnp.bfloat16       # MXU-native on v5e/v6e/v7x; accumulation stays f32


def _leaky_relu(x, leak):
    return jnp.where(x > 0, x, leak * x)


# ---- fused forward kernel: all 4 layers fit comfortably in VMEM -------------
def g_forward_kernel(x_ref,
                     w1_ref, b1_ref,
                     w2_ref, b2_ref,
                     w3_ref, b3_ref,
                     w4_ref, b4_ref,
                     o_ref):
    # fc1
    h = jnp.dot(x_ref[...].astype(DOT_DTYPE), w1_ref[...],
                preferred_element_type=jnp.float32) + b1_ref[...]
    h = _leaky_relu(h, LEAK)
    # fc2
    h = jnp.dot(h.astype(DOT_DTYPE), w2_ref[...],
                preferred_element_type=jnp.float32) + b2_ref[...]
    h = _leaky_relu(h, LEAK)
    # fc3
    h = jnp.dot(h.astype(DOT_DTYPE), w3_ref[...],
                preferred_element_type=jnp.float32) + b3_ref[...]
    h = _leaky_relu(h, LEAK)
    # fc4 + tanh (tanh runs on the EUP, effectively free next to the matmuls)
    h = jnp.dot(h.astype(DOT_DTYPE), w4_ref[...],
                preferred_element_type=jnp.float32) + b4_ref[...]
    o_ref[...] = jnp.tanh(h)


def g_forward(x, params, *, bm=256):
    """x: (B, G_INPUTS) f32. Returns (B, IMAGE_Y*IMAGE_X) f32 in [-1, 1].

    Arbitrary B supported: the batch is zero-padded up to a multiple of `bm`
    and the padding rows are sliced off after the kernel.
    """
    (w1, b1), (w2, b2), (w3, b3), (w4, b4) = params
    B = x.shape[0]
    Bp = pl.cdiv(B, bm) * bm
    if Bp != B:
        x = jnp.pad(x, ((0, Bp - B), (0, 0)))

    # Weights cast to bf16 once here: halves the resident weight footprint and
    # the per-tile weight DMA; biases stay f32 for the f32 elementwise path.
    w1c, w2c, w3c, w4c = (w.astype(DOT_DTYPE) for w in (w1, w2, w3, w4))

    def resident_spec(shape):
        # weights/biases use a constant block index: same tile for every step
        return pl.BlockSpec(shape, lambda i: (0, 0))

    grid = (Bp // bm,)
    out = pl.pallas_call(
        g_forward_kernel,
        out_shape=jax.ShapeDtypeStruct((Bp, D_OUT), jnp.float32),
        grid_spec=pl.GridSpec(
            grid=grid,
            in_specs=[
                pl.BlockSpec((bm, G_INPUTS), lambda i: (i, 0)),
                resident_spec(w1c.shape), resident_spec(b1.shape),
                resident_spec(w2c.shape), resident_spec(b2.shape),
                resident_spec(w3c.shape), resident_spec(b3.shape),
                resident_spec(w4c.shape), resident_spec(b4.shape),
            ],
            # D_OUT = 256 -> lane-dense, unmasked stores
            out_specs=pl.BlockSpec((bm, D_OUT), lambda i: (i, 0)),
        ),
        compiler_params=pltpu.CompilerParams(
            dimension_semantics=("parallel",)),   # batch tiles shard across TCs (v7x)
    )(x, w1c, b1, w2c, b2, w3c, b3, w4c, b4)

    return out[:B]


# ---- deterministic parameter init (PyTorch-style uniform(-1/sqrt(fan_in))) --
def init_params(key):
    def linear(key, fan_in, fan_out):
        kw, kb = jax.random.split(key)
        bound = 1.0 / jnp.sqrt(fan_in)
        # stored (in, out) for x @ W; biases kept 2-D (1, out) for TPU layout
        w = jax.random.uniform(kw, (fan_in, fan_out), jnp.float32, -bound, bound)
        b = jax.random.uniform(kb, (1, fan_out), jnp.float32, -bound, bound)
        return w, b

    k1, k2, k3, k4 = jax.random.split(key, 4)
    return (
        linear(k1, G_INPUTS, D1),
        linear(k2, D1, D2),
        linear(k3, D2, D3),
        linear(k4, D3, D_OUT),
    )


# ---- pure-JAX reference with matching bf16-dot / f32-accumulate semantics ---
def g_forward_ref(x, params):
    (w1, b1), (w2, b2), (w3, b3), (w4, b4) = params

    def dot(a, w):
        return jnp.dot(a.astype(DOT_DTYPE), w.astype(DOT_DTYPE),
                       preferred_element_type=jnp.float32)

    h = _leaky_relu(dot(x, w1) + b1, LEAK)
    h = _leaky_relu(dot(h, w2) + b2, LEAK)
    h = _leaky_relu(dot(h, w3) + b3, LEAK)
    return jnp.tanh(dot(h, w4) + b4)


# TODO(synk): nn.BCELoss from the original module is a training-time loss, not
# part of forward(); it is intentionally not implemented here.

if __name__ == "__main__":
    key = jax.random.PRNGKey(0)
    kx, kp = jax.random.split(key)
    params = init_params(kp)

    # Multi-tile batch: grid = (2,) with bm=256 -> both TensorCores busy on v7x.
    batch = 512
    x = jax.random.normal(kx, (batch, G_INPUTS), jnp.float32)
    out = jax.block_until_ready(g_forward(x, params, bm=256))
    ref = jax.block_until_ready(g_forward_ref(x, params))
    assert out.shape == (batch, D_OUT)
    assert jnp.allclose(out, ref, atol=1e-3, rtol=1e-3)

    # Ragged small batch: padded internally to a single 256-row tile.
    x_small = jax.random.normal(jax.random.PRNGKey(1), (8, G_INPUTS), jnp.float32)
    out_small = jax.block_until_ready(g_forward(x_small, params, bm=256))
    ref_small = g_forward_ref(x_small, params)
    assert out_small.shape == (8, D_OUT)
    assert jnp.allclose(out_small, ref_small, atol=1e-3, rtol=1e-3)

    print("KERNEL_OK")
</pallas_src>

<mosaic_0001>
module attributes {stable_mosaic.version = 11 : i64} {
  func.func @g_forward_kernel(%arg0: i32, %arg1: memref<256x32xf32, #tpu.memory_space<vmem>>, %arg2: memref<32x128xbf16, #tpu.memory_space<vmem>>, %arg3: memref<1x128xf32, #tpu.memory_space<vmem>>, %arg4: memref<128x256xbf16, #tpu.memory_space<vmem>>, %arg5: memref<1x256xf32, #tpu.memory_space<vmem>>, %arg6: memref<256x512xbf16, #tpu.memory_space<vmem>>, %arg7: memref<1x512xf32, #tpu.memory_space<vmem>>, %arg8: memref<512x256xbf16, #tpu.memory_space<vmem>>, %arg9: memref<1x256xf32, #tpu.memory_space<vmem>>, %arg10: memref<256x256xf32, #tpu.memory_space<vmem>>) attributes {dimension_semantics = [#tpu.dimension_semantics<parallel>], iteration_bounds = array<i64: 2>, scalar_prefetch = 0 : i64, scratch_operands = 0 : i64, tpu.core_type = #tpu.core_type<tc>, window_params = [{transform_indices = @transform_0, window_bounds = array<i64: 256, 32>}, {pipeline_mode = #tpu.pipeline_mode<synchronous>, transform_indices = @transform_1, window_bounds = array<i64: 32, 128>}, {pipeline_mode = #tpu.pipeline_mode<synchronous>, transform_indices = @transform_2, window_bounds = array<i64: 1, 128>}, {pipeline_mode = #tpu.pipeline_mode<synchronous>, transform_indices = @transform_3, window_bounds = array<i64: 128, 256>}, {pipeline_mode = #tpu.pipeline_mode<synchronous>, transform_indices = @transform_4, window_bounds = array<i64: 1, 256>}, {pipeline_mode = #tpu.pipeline_mode<synchronous>, transform_indices = @transform_5, window_bounds = array<i64: 256, 512>}, {pipeline_mode = #tpu.pipeline_mode<synchronous>, transform_indices = @transform_6, window_bounds = array<i64: 1, 512>}, {pipeline_mode = #tpu.pipeline_mode<synchronous>, transform_indices = @transform_7, window_bounds = array<i64: 512, 256>}, {pipeline_mode = #tpu.pipeline_mode<synchronous>, transform_indices = @transform_8, window_bounds = array<i64: 1, 256>}, {transform_indices = @transform_9, window_bounds = array<i64: 256, 256>}]} {
    %c0 = arith.constant 0 : index
    %c0_0 = arith.constant 0 : index
    %0 = vector.load %arg1[%c0, %c0_0] : memref<256x32xf32, #tpu.memory_space<vmem>>, vector<256x32xf32>
    %1 = arith.truncf %0 : vector<256x32xf32> to vector<256x32xbf16>
    %c0_1 = arith.constant 0 : index
    %c0_2 = arith.constant 0 : index
    %2 = vector.load %arg2[%c0_1, %c0_2] : memref<32x128xbf16, #tpu.memory_space<vmem>>, vector<32x128xbf16>
    %cst = arith.constant dense<0.000000e+00> : vector<256x128xf32>
    %3 = tpu.matmul %1, %2, %cst {dimension_numbers = #tpu.dot_dimension_numbers<[1], [0], [0], [1], [0, 0, 1, 1], [], []>} : vector<256x32xbf16>, vector<32x128xbf16>, vector<256x128xf32> -> vector<256x128xf32>
    %c0_3 = arith.constant 0 : index
    %c0_4 = arith.constant 0 : index
    %4 = vector.load %arg3[%c0_3, %c0_4] : memref<1x128xf32, #tpu.memory_space<vmem>>, vector<1x128xf32>
    %5 = vector.broadcast %4 : vector<1x128xf32> to vector<256x128xf32>
    %6 = arith.addf %3, %5 : vector<256x128xf32>
    %cst_5 = arith.constant 0.000000e+00 : f32
    %7 = vector.broadcast %cst_5 : f32 to vector<256x128xf32>
    %8 = arith.cmpf ogt, %6, %7 : vector<256x128xf32>
    %cst_6 = arith.constant 2.000000e-01 : f32
    %9 = vector.broadcast %cst_6 : f32 to vector<256x128xf32>
    %10 = arith.mulf %9, %6 : vector<256x128xf32>
    %11 = arith.select %8, %6, %10 : vector<256x128xi1>, vector<256x128xf32>
    %12 = arith.truncf %11 : vector<256x128xf32> to vector<256x128xbf16>
    %c0_7 = arith.constant 0 : index
    %c0_8 = arith.constant 0 : index
    %13 = vector.load %arg4[%c0_7, %c0_8] : memref<128x256xbf16, #tpu.memory_space<vmem>>, vector<128x256xbf16>
    %cst_9 = arith.constant dense<0.000000e+00> : vector<256x256xf32>
    %14 = tpu.matmul %12, %13, %cst_9 {dimension_numbers = #tpu.dot_dimension_numbers<[1], [0], [0], [1], [0, 0, 1, 1], [], []>} : vector<256x128xbf16>, vector<128x256xbf16>, vector<256x256xf32> -> vector<256x256xf32>
    %c0_10 = arith.constant 0 : index
    %c0_11 = arith.constant 0 : index
    %15 = vector.load %arg5[%c0_10, %c0_11] : memref<1x256xf32, #tpu.memory_space<vmem>>, vector<1x256xf32>
    %16 = vector.broadcast %15 : vector<1x256xf32> to vector<256x256xf32>
    %17 = arith.addf %14, %16 : vector<256x256xf32>
    %cst_12 = arith.constant 0.000000e+00 : f32
    %18 = vector.broadcast %cst_12 : f32 to vector<256x256xf32>
    %19 = arith.cmpf ogt, %17, %18 : vector<256x256xf32>
    %cst_13 = arith.constant 2.000000e-01 : f32
    %20 = vector.broadcast %cst_13 : f32 to vector<256x256xf32>
    %21 = arith.mulf %20, %17 : vector<256x256xf32>
    %22 = arith.select %19, %17, %21 : vector<256x256xi1>, vector<256x256xf32>
    %23 = arith.truncf %22 : vector<256x256xf32> to vector<256x256xbf16>
    %c0_14 = arith.constant 0 : index
    %c0_15 = arith.constant 0 : index
    %24 = vector.load %arg6[%c0_14, %c0_15] : memref<256x512xbf16, #tpu.memory_space<vmem>>, vector<256x512xbf16>
    %cst_16 = arith.constant dense<0.000000e+00> : vector<256x512xf32>
    %25 = tpu.matmul %23, %24, %cst_16 {dimension_numbers = #tpu.dot_dimension_numbers<[1], [0], [0], [1], [0, 0, 1, 1], [], []>} : vector<256x256xbf16>, vector<256x512xbf16>, vector<256x512xf32> -> vector<256x512xf32>
    %c0_17 = arith.constant 0 : index
    %c0_18 = arith.constant 0 : index
    %26 = vector.load %arg7[%c0_17, %c0_18] : memref<1x512xf32, #tpu.memory_space<vmem>>, vector<1x512xf32>
    %27 = vector.broadcast %26 : vector<1x512xf32> to vector<256x512xf32>
    %28 = arith.addf %25, %27 : vector<256x512xf32>
    %cst_19 = arith.constant 0.000000e+00 : f32
    %29 = vector.broadcast %cst_19 : f32 to vector<256x512xf32>
    %30 = arith.cmpf ogt, %28, %29 : vector<256x512xf32>
    %cst_20 = arith.constant 2.000000e-01 : f32
    %31 = vector.broadcast %cst_20 : f32 to vector<256x512xf32>
    %32 = arith.mulf %31, %28 : vector<256x512xf32>
    %33 = arith.select %30, %28, %32 : vector<256x512xi1>, vector<256x512xf32>
    %34 = arith.truncf %33 : vector<256x512xf32> to vector<256x512xbf16>
    %c0_21 = arith.constant 0 : index
    %c0_22 = arith.constant 0 : index
    %35 = vector.load %arg8[%c0_21, %c0_22] : memref<512x256xbf16, #tpu.memory_space<vmem>>, vector<512x256xbf16>
    %cst_23 = arith.constant dense<0.000000e+00> : vector<256x256xf32>
    %36 = tpu.matmul %34, %35, %cst_23 {dimension_numbers = #tpu.dot_dimension_numbers<[1], [0], [0], [1], [0, 0, 1, 1], [], []>} : vector<256x512xbf16>, vector<512x256xbf16>, vector<256x256xf32> -> vector<256x256xf32>
    %c0_24 = arith.constant 0 : index
    %c0_25 = arith.constant 0 : index
    %37 = vector.load %arg9[%c0_24, %c0_25] : memref<1x256xf32, #tpu.memory_space<vmem>>, vector<1x256xf32>
    %38 = vector.broadcast %37 : vector<1x256xf32> to vector<256x256xf32>
    %39 = arith.addf %36, %38 : vector<256x256xf32>
    %40 = math.tanh %39 : vector<256x256xf32>
    %c0_26 = arith.constant 0 : index
    %c0_27 = arith.constant 0 : index
    %41 = vector.load %arg10[%c0_26, %c0_27] : memref<256x256xf32, #tpu.memory_space<vmem>>, vector<256x256xf32>
    tpu.vector_store %arg10[%c0_26, %c0_27], %40 {strides = array<i32>} : memref<256x256xf32, #tpu.memory_space<vmem>>, vector<256x256xf32>,
    return
  }
  func.func @transform_0(%arg0: i32) -> (i32, i32) {
    %c0_i32 = arith.constant 0 : i32
    %c0_i32_0 = arith.constant 0 : i32
    return %arg0, %c0_i32 : i32, i32
  }
  func.func @transform_1(%arg0: i32) -> (i32, i32) {
    %c0_i32 = arith.constant 0 : i32
    %c0_i32_0 = arith.constant 0 : i32
    %c0_i32_1 = arith.constant 0 : i32
    return %c0_i32, %c0_i32_0 : i32, i32
  }
  func.func @transform_2(%arg0: i32) -> (i32, i32) {
    %c0_i32 = arith.constant 0 : i32
    %c0_i32_0 = arith.constant 0 : i32
    %c0_i32_1 = arith.constant 0 : i32
    return %c0_i32, %c0_i32_0 : i32, i32
  }
  func.func @transform_3(%arg0: i32) -> (i32, i32) {
    %c0_i32 = arith.constant 0 : i32
    %c0_i32_0 = arith.constant 0 : i32
    %c0_i32_1 = arith.constant 0 : i32
    return %c0_i32, %c0_i32_0 : i32, i32
  }
  func.func @transform_4(%arg0: i32) -> (i32, i32) {
    %c0_i32 = arith.constant 0 : i32
    %c0_i32_0 = arith.constant 0 : i32
    %c0_i32_1 = arith.constant 0 : i32
    return %c0_i32, %c0_i32_0 : i32, i32
  }
  func.func @transform_5(%arg0: i32) -> (i32, i32) {
    %c0_i32 = arith.constant 0 : i32
    %c0_i32_0 = arith.constant 0 : i32
    %c0_i32_1 = arith.constant 0 : i32
    return %c0_i32, %c0_i32_0 : i32, i32
  }
  func.func @transform_6(%arg0: i32) -> (i32, i32) {
    %c0_i32 = arith.constant 0 : i32
    %c0_i32_0 = arith.constant 0 : i32
    %c0_i32_1 = arith.constant 0 : i32
    return %c0_i32, %c0_i32_0 : i32, i32
  }
  func.func @transform_7(%arg0: i32) -> (i32, i32) {
    %c0_i32 = arith.constant 0 : i32
    %c0_i32_0 = arith.constant 0 : i32
    %c0_i32_1 = arith.constant 0 : i32
    return %c0_i32, %c0_i32_0 : i32, i32
  }
  func.func @transform_8(%arg0: i32) -> (i32, i32) {
    %c0_i32 = arith.constant 0 : i32
    %c0_i32_0 = arith.constant 0 : i32
    %c0_i32_1 = arith.constant 0 : i32
    return %c0_i32, %c0_i32_0 : i32, i32
  }
  func.func @transform_9(%arg0: i32) -> (i32, i32) {
    %c0_i32 = arith.constant 0 : i32
    %c0_i32_0 = arith.constant 0 : i32
    return %arg0, %c0_i32 : i32, i32
  }
}

</mosaic_0001>

<llo_original>
// kernel: tpu_custom_call.1
$region0: #{tpu_custom_call.1}
  #allocation0 [shape = 'u32[]', space=smem, size = 0x4, offset = 0x4, fixed_abs, tag = 'smem constant byte address 0x4 - core index']
  #allocation1 [shape = 'u32[144,128]{1,0:T(1,128)}', space=vmem, size = 0x12000, scoped, tag = 'internal scratch']
  %s0 = inlined_call_operand.vmem [shape: f32[512,32], index: 0, kind: input, shape index: {}]
  %s1 = inlined_call_operand.hbm [shape: bf16[32,128], index: 1, kind: input, shape index: {}]
  %s2 = inlined_call_operand.vmem [shape: f32[1,128], index: 2, kind: input, shape index: {}]
  %s3 = inlined_call_operand.vmem [shape: bf16[128,256], index: 3, kind: input, shape index: {}]
  %s4 = inlined_call_operand.vmem [shape: f32[1,256], index: 4, kind: input, shape index: {}]
  %s5 = inlined_call_operand.vmem [shape: bf16[256,512], index: 5, kind: input, shape index: {}]
  %s6 = inlined_call_operand.vmem [shape: f32[1,512], index: 6, kind: input, shape index: {}]
  %s7 = inlined_call_operand.hbm [shape: bf16[512,256], index: 7, kind: input, shape index: {}]
  %s8 = inlined_call_operand.vmem [shape: f32[1,256], index: 8, kind: input, shape index: {}]
  %s9 = inlined_call_operand.hbm [shape: f32[512,256], index: 9, kind: output, shape index: {}]
  %s10 = sld [smem:[#allocation0]]
  $region77: #{tpu_custom_call.1} parent=0
    _
  %s12 = ssub.s32 1, %s10
  %s13 = scalar_select 0, %s12, %s10
  $region1: #{tpu_custom_call.1} parent=0
    #allocation2 [shape = 'u8[8192]{0}', space=vmem, size = 0x2000, scoped, tag = 'input window, operand 1, single buffered']
    #allocation3 [shape = 's32[2]{0}', space=sflag, size = 0x8, scoped, tag = 'scoped memory for tpu_custom_call.1']
    #allocation4 [shape = 's32[2]{0}', space=sflag, size = 0x8, scoped, tag = 'scoped memory for tpu_custom_call.1']
    #allocation5 [shape = 'u8[262144]{0}', space=vmem, size = 0x40000, scoped, tag = 'input window, operand 7, single buffered']
    #allocation6 [shape = 's32[1]{0}', space=sflag, size = 0x4, scoped, tag = 'scoped memory for tpu_custom_call.1']
    #allocation7 [shape = 'u8[524288]{0}', space=vmem, size = 0x80000, scoped, tag = 'output window, operand 0']
    %14 = vsyncpa [#allocation3], 0
    %15 = vsyncpa [#allocation6], 0
    %16 = vsyncpa [#allocation4], 0
    %s17 = scalar_lea.sflag [#allocation4], 1
    %18 = vsyncpa %s17, 0
    loop: start=0, step=1, limit=4
    $region2: #{tpu_custom_call.1} parent=1 // loop_pre_header
      _
    $region3: #{tpu_custom_call.1} parent=1 // loop_header
      %s20 = sphi 0, %s24
      %p21 = scmp.ge.s32.totalorder %s20, 4
      %s30 = sphi 0, %s32
      %s33 = sphi 0, %s30
      %s34 = sphi 0, %s33
      %s50 = sphi 0, %s34
      %s54 = sphi 0, %s54
      %s56 = sphi 0, %s54
      %s57 = sphi 0, %s56
      %s71 = sphi 0, %s57
      %s75 = sphi 0, %s75
      %s77 = sphi 0, %s75
      %s78 = sphi 0, %s77
      %s92 = sphi 0, %s78
      %s96 = sphi 0, %s96
      %s98 = sphi 0, %s96
      %s99 = sphi 0, %s98
      %s113 = sphi 0, %s99
      %s117 = sphi 0, %s117
      %s119 = sphi 0, %s117
      %s120 = sphi 0, %s119
      %s134 = sphi 0, %s120
      %s138 = sphi 0, %s138
      %s140 = sphi 0, %s138
      %s141 = sphi 0, %s140
      %s155 = sphi 0, %s141
      %s159 = sphi 0, %s159
      %s161 = sphi 0, %s159
      %s162 = sphi 0, %s161
      %s176 = sphi 0, %s162
      %s180 = sphi 0, %s180
      %s182 = sphi 0, %s180
      %s183 = sphi 0, %s182
      %s197 = sphi 0, %s183
      %s201 = sphi 0, %s201
      %s203 = sphi 0, %s201
      %s204 = sphi 0, %s203
      %s218 = sphi 0, %s204
      %s224 = sphi 0, %s226
      %s227 = sphi 0, %s224
      %s228 = sphi 0, %s227
      %s244 = sphi 0, %s228
    $region4: #{tpu_custom_call.1} parent=1 // loop_header_branch
      %23 = sbr.rel (%p21) target = $region8
    $region5: #{tpu_custom_call.1} parent=1 // loop_body
      %s25 = ssub.s32 %s20, 1
      %s26 = ssub.s32 %s20, 2
      %s27 = sadd.s32 %s20, 1
      %s28 = ssub.s32 %s20, %s27
      %p29 = scmp.eq.s32.totalorder %s28, 0
      %s31 = sadd.s32 %s30, 1
      %s32 = scalar_select %p29, %s30, %s31
      %p35 = pneg %p29
      %p36 = scmp.eq.s32.totalorder %s20, 1
      %p37 = por %p35, %p36
      %p38 = scmp.ne.s32.totalorder %s30, %s33
      %p39 = scmp.eq.s32.totalorder %s20, 0
      %p40 = por %p38, %p39
      %p41 = scmp.ne.s32.totalorder %s30, %s33
      %p42 = scmp.eq.s32.totalorder %s25, 1
      %p43 = por %p41, %p42
      %p44 = scmp.ne.s32.totalorder %s33, %s34
      %p45 = scmp.eq.s32.totalorder %s25, 0
      %p46 = por %p44, %p45
      %p47 = scmp.ne.s32.totalorder %s33, %s34
      %p48 = scmp.eq.s32.totalorder %s26, 1
      %p49 = por %p47, %p48
      %p51 = scmp.ne.s32.totalorder %s34, %s50
      %p52 = scmp.eq.s32.totalorder %s26, 0
      %p53 = por %p51, %p52
      %s55 = sadd.s32 %s54, 1
      %p58 = scmp.eq.s32.totalorder %s20, 1
      %p59 = scmp.ne.s32.totalorder %s54, %s56
      %p60 = scmp.eq.s32.totalorder %s20, 0
      %p61 = por %p59, %p60
      %p62 = scmp.ne.s32.totalorder %s54, %s56
      %p63 = scmp.eq.s32.totalorder %s25, 1
      %p64 = por %p62, %p63
      %p65 = scmp.ne.s32.totalorder %s56, %s57
      %p66 = scmp.eq.s32.totalorder %s25, 0
      %p67 = por %p65, %p66
      %p68 = scmp.ne.s32.totalorder %s56, %s57
      %p69 = scmp.eq.s32.totalorder %s26, 1
      %p70 = por %p68, %p69
      %p72 = scmp.ne.s32.totalorder %s57, %s71
      %p73 = scmp.eq.s32.totalorder %s26, 0
      %p74 = por %p72, %p73
      %s76 = sadd.s32 %s75, 1
      %p79 = scmp.eq.s32.totalorder %s20, 1
      %p80 = scmp.ne.s32.totalorder %s75, %s77
      %p81 = scmp.eq.s32.totalorder %s20, 0
      %p82 = por %p80, %p81
      %p83 = scmp.ne.s32.totalorder %s75, %s77
      %p84 = scmp.eq.s32.totalorder %s25, 1
      %p85 = por %p83, %p84
      %p86 = scmp.ne.s32.totalorder %s77, %s78
      %p87 = scmp.eq.s32.totalorder %s25, 0
      %p88 = por %p86, %p87
      %p89 = scmp.ne.s32.totalorder %s77, %s78
      %p90 = scmp.eq.s32.totalorder %s26, 1
      %p91 = por %p89, %p90
      %p93 = scmp.ne.s32.totalorder %s78, %s92
      %p94 = scmp.eq.s32.totalorder %s26, 0
      %p95 = por %p93, %p94
      %s97 = sadd.s32 %s96, 1
      %p100 = scmp.eq.s32.totalorder %s20, 1
      %p101 = scmp.ne.s32.totalorder %s96, %s98
      %p102 = scmp.eq.s32.totalorder %s20, 0
      %p103 = por %p101, %p102
      %p104 = scmp.ne.s32.totalorder %s96, %s98
      %p105 = scmp.eq.s32.totalorder %s25, 1
      %p106 = por %p104, %p105
      %p107 = scmp.ne.s32.totalorder %s98, %s99
      %p108 = scmp.eq.s32.totalorder %s25, 0
      %p109 = por %p107, %p108
      %p110 = scmp.ne.s32.totalorder %s98, %s99
      %p111 = scmp.eq.s32.totalorder %s26, 1
      %p112 = por %p110, %p111
      %p114 = scmp.ne.s32.totalorder %s99, %s113
      %p115 = scmp.eq.s32.totalorder %s26, 0
      %p116 = por %p114, %p115
      %s118 = sadd.s32 %s117, 1
      %p121 = scmp.eq.s32.totalorder %s20, 1
      %p122 = scmp.ne.s32.totalorder %s117, %s119
      %p123 = scmp.eq.s32.totalorder %s20, 0
      %p124 = por %p122, %p123
      %p125 = scmp.ne.s32.totalorder %s117, %s119
      %p126 = scmp.eq.s32.totalorder %s25, 1
      %p127 = por %p125, %p126
      %p128 = scmp.ne.s32.totalorder %s119, %s120
      %p129 = scmp.eq.s32.totalorder %s25, 0
      %p130 = por %p128, %p129
      %p131 = scmp.ne.s32.totalorder %s119, %s120
      %p132 = scmp.eq.s32.totalorder %s26, 1
      %p133 = por %p131, %p132
      %p135 = scmp.ne.s32.totalorder %s120, %s134
      %p136 = scmp.eq.s32.totalorder %s26, 0
      %p137 = por %p135, %p136
      %s139 = sadd.s32 %s138, 1
      %p142 = scmp.eq.s32.totalorder %s20, 1
      %p143 = scmp.ne.s32.totalorder %s138, %s140
      %p144 = scmp.eq.s32.totalorder %s20, 0
      %p145 = por %p143, %p144
      %p146 = scmp.ne.s32.totalorder %s138, %s140
      %p147 = scmp.eq.s32.totalorder %s25, 1
      %p148 = por %p146, %p147
      %p149 = scmp.ne.s32.totalorder %s140, %s141
      %p150 = scmp.eq.s32.totalorder %s25, 0
      %p151 = por %p149, %p150
      %p152 = scmp.ne.s32.totalorder %s140, %s141
      %p153 = scmp.eq.s32.totalorder %s26, 1
      %p154 = por %p152, %p153
      %p156 = scmp.ne.s32.totalorder %s141, %s155
      %p157 = scmp.eq.s32.totalorder %s26, 0
      %p158 = por %p156, %p157
      %s160 = sadd.s32 %s159, 1
      %p163 = scmp.eq.s32.totalorder %s20, 1
      %p164 = scmp.ne.s32.totalorder %s159, %s161
      %p165 = scmp.eq.s32.totalorder %s20, 0
      %p166 = por %p164, %p165
      %p167 = scmp.ne.s32.totalorder %s159, %s161
      %p168 = scmp.eq.s32.totalorder %s25, 1
      %p169 = por %p167, %p168
      %p170 = scmp.ne.s32.totalorder %s161, %s162
      %p171 = scmp.eq.s32.totalorder %s25, 0
      %p172 = por %p170, %p171
      %p173 = scmp.ne.s32.totalorder %s161, %s162
      %p174 = scmp.eq.s32.totalorder %s26, 1
      %p175 = por %p173, %p174
      %p177 = scmp.ne.s32.totalorder %s162, %s176
      %p178 = scmp.eq.s32.totalorder %s26, 0
      %p179 = por %p177, %p178
      %s181 = sadd.s32 %s180, 1
      %p184 = scmp.eq.s32.totalorder %s20, 1
      %p185 = scmp.ne.s32.totalorder %s180, %s182
      %p186 = scmp.eq.s32.totalorder %s20, 0
      %p187 = por %p185, %p186
      %p188 = scmp.ne.s32.totalorder %s180, %s182
      %p189 = scmp.eq.s32.totalorder %s25, 1
      %p190 = por %p188, %p189
      %p191 = scmp.ne.s32.totalorder %s182, %s183
      %p192 = scmp.eq.s32.totalorder %s25, 0
      %p193 = por %p191, %p192
      %p194 = scmp.ne.s32.totalorder %s182, %s183
      %p195 = scmp.eq.s32.totalorder %s26, 1
      %p196 = por %p194, %p195
      %p198 = scmp.ne.s32.totalorder %s183, %s197
      %p199 = scmp.eq.s32.totalorder %s26, 0
      %p200 = por %p198, %p199
      %s202 = sadd.s32 %s201, 1
      %p205 = scmp.eq.s32.totalorder %s20, 1
      %p206 = scmp.ne.s32.totalorder %s201, %s203
      %p207 = scmp.eq.s32.totalorder %s20, 0
      %p208 = por %p206, %p207
      %p209 = scmp.ne.s32.totalorder %s201, %s203
      %p210 = scmp.eq.s32.totalorder %s25, 1
      %p211 = por %p209, %p210
      %p212 = scmp.ne.s32.totalorder %s203, %s204
      %p213 = scmp.eq.s32.totalorder %s25, 0
      %p214 = por %p212, %p213
      %p215 = scmp.ne.s32.totalorder %s203, %s204
      %p216 = scmp.eq.s32.totalorder %s26, 1
      %p217 = por %p215, %p216
      %p219 = scmp.ne.s32.totalorder %s204, %s218
      %p220 = scmp.eq.s32.totalorder %s26, 0
      %p221 = por %p219, %p220
      %s222 = ssub.s32 %s20, %s27
      %p223 = scmp.eq.s32.totalorder %s222, 0
      %s225 = sadd.s32 %s224, 1
      %s226 = scalar_select %p223, %s224, %s225
      %p229 = pneg %p223
      %p230 = scmp.eq.s32.totalorder %s20, 1
      %p231 = por %p229, %p230
      %p232 = scmp.ne.s32.totalorder %s224, %s227
      %p233 = scmp.eq.s32.totalorder %s20, 0
      %p234 = por %p232, %p233
      %p235 = scmp.ne.s32.totalorder %s224, %s227
      %p236 = scmp.eq.s32.totalorder %s25, 1
      %p237 = por %p235, %p236
      %p238 = scmp.ne.s32.totalorder %s227, %s228
      %p239 = scmp.eq.s32.totalorder %s25, 0
      %p240 = por %p238, %p239
      %p241 = scmp.ne.s32.totalorder %s227, %s228
      %p242 = scmp.eq.s32.totalorder %s26, 1
      %p243 = por %p241, %p242
      %p245 = scmp.ne.s32.totalorder %s228, %s244
      %p246 = scmp.eq.s32.totalorder %s26, 0
      %p247 = por %p245, %p246
      %p248 = scmp.le.s32.totalorder 1, %s20
      %p249 = scmp.lt.s32.totalorder %s20, 3
      %p250 = pnand %p248, %p249
      %p251 = pneg %p250
      // Predicated region
      $region9: #{tpu_custom_call.1} parent=5 // pred_check
        _
      $region10: #{tpu_custom_call.1} parent=5 // pred_check_branch
        %253 = sbr.rel (%p250) target = $region12
      $region11: #{tpu_custom_call.1} parent=5 // pred_region
        %s254 = ssub.s32 %s20, 1
        // Predicated region
        $region13: #{tpu_custom_call.1} parent=11 // pred_check
          %p255 = pneg %p67
        $region14: #{tpu_custom_call.1} parent=11 // pred_check_branch
          %257 = sbr.rel (%p255) target = $region16
        $region15: #{tpu_custom_call.1} parent=11 // pred_region
          %s259 = ssub.s32 256, 256
          %260 = vsyncadd [#allocation3], %s259
          %s261 = sshll.u32 [#allocation2], 4
          %s262 = int_to_ptr.vmem [resolvable:$true] %s261
          %267 = dma.hbm_to_vmem [thread:$0]  %s1, 256, %s262, [#allocation3], 64, 64, 4
        $region16: #{tpu_custom_call.1} parent=11 // pred_fallthru
          _
        // Predicated region
        $region17: #{tpu_custom_call.1} parent=11 // pred_check
          %p268 = pneg %p88
        $region18: #{tpu_custom_call.1} parent=11 // pred_check_branch
          %270 = sbr.rel (%p268) target = $region20
        $region19: #{tpu_custom_call.1} parent=11 // pred_region
          _
        $region20: #{tpu_custom_call.1} parent=11 // pred_fallthru
          _
        // Predicated region
        $region21: #{tpu_custom_call.1} parent=11 // pred_check
          %p271 = pneg %p109
        $region22: #{tpu_custom_call.1} parent=11 // pred_check_branch
          %273 = sbr.rel (%p271) target = $region24
        $region23: #{tpu_custom_call.1} parent=11 // pred_region
          _
        $region24: #{tpu_custom_call.1} parent=11 // pred_fallthru
          _
        // Predicated region
        $region25: #{tpu_custom_call.1} parent=11 // pred_check
          %p274 = pneg %p130
        $region26: #{tpu_custom_call.1} parent=11 // pred_check_branch
          %276 = sbr.rel (%p274) target = $region28
        $region27: #{tpu_custom_call.1} parent=11 // pred_region
          _
        $region28: #{tpu_custom_call.1} parent=11 // pred_fallthru
          _
        // Predicated region
        $region29: #{tpu_custom_call.1} parent=11 // pred_check
          %p277 = pneg %p151
        $region30: #{tpu_custom_call.1} parent=11 // pred_check_branch
          %279 = sbr.rel (%p277) target = $region32
        $region31: #{tpu_custom_call.1} parent=11 // pred_region
          _
        $region32: #{tpu_custom_call.1} parent=11 // pred_fallthru
          _
        // Predicated region
        $region33: #{tpu_custom_call.1} parent=11 // pred_check
          %p280 = pneg %p172
        $region34: #{tpu_custom_call.1} parent=11 // pred_check_branch
          %282 = sbr.rel (%p280) target = $region36
        $region35: #{tpu_custom_call.1} parent=11 // pred_region
          _
        $region36: #{tpu_custom_call.1} parent=11 // pred_fallthru
          _
        // Predicated region
        $region37: #{tpu_custom_call.1} parent=11 // pred_check
          %p283 = pneg %p193
        $region38: #{tpu_custom_call.1} parent=11 // pred_check_branch
          %285 = sbr.rel (%p283) target = $region40
        $region39: #{tpu_custom_call.1} parent=11 // pred_region
          %s287 = ssub.s32 8192, 8192
          %288 = vsyncadd [#allocation6], %s287
          %s289 = sshll.u32 [#allocation5], 4
          %s290 = int_to_ptr.vmem [resolvable:$true] %s289
          %295 = dma.hbm_to_vmem [thread:$0]  %s7, 8192, %s290, [#allocation6], 128, 128, 8
        $region40: #{tpu_custom_call.1} parent=11 // pred_fallthru
          _
        // Predicated region
        $region41: #{tpu_custom_call.1} parent=11 // pred_check
          %p296 = pneg %p214
        $region42: #{tpu_custom_call.1} parent=11 // pred_check_branch
          %298 = sbr.rel (%p296) target = $region44
        $region43: #{tpu_custom_call.1} parent=11 // pred_region
          _
        $region44: #{tpu_custom_call.1} parent=11 // pred_fallthru
          _
      $region12: #{tpu_custom_call.1} parent=5 // pred_fallthru
        _
      %p299 = scmp.lt.s32.totalorder %s20, 2
      // Predicated region
      $region45: #{tpu_custom_call.1} parent=5 // pred_check
        %p300 = pneg %p299
      $region46: #{tpu_custom_call.1} parent=5 // pred_check_branch
        %302 = sbr.rel (%p300) target = $region48
      $region47: #{tpu_custom_call.1} parent=5 // pred_region
        // Predicated region
        $region49: #{tpu_custom_call.1} parent=47 // pred_check
          %p303 = pneg %p40
        $region50: #{tpu_custom_call.1} parent=47 // pred_check_branch
          %305 = sbr.rel (%p303) target = $region52
        $region51: #{tpu_custom_call.1} parent=47 // pred_region
          %s306 = smul.u32 32, %s20
          %p307 = scmp.lt.s32.totalorder %s306, 63
          %s308 = scalar_select %p307, %s306, 63
          %s309 = smul.addr %s308, 8
          %s310 = scalar_lea.vmem %s0, %s309
          %s311 = smul.u32 32, %s20
        $region52: #{tpu_custom_call.1} parent=47 // pred_fallthru
          _
      $region48: #{tpu_custom_call.1} parent=5 // pred_fallthru
        _
      %p312 = scmp.le.s32.totalorder 1, %s20
      %p313 = scmp.lt.s32.totalorder %s20, 3
      %p314 = pnand %p312, %p313
      %p315 = pneg %p314
      // Predicated region
      $region53: #{tpu_custom_call.1} parent=5 // pred_check
        _
      $region54: #{tpu_custom_call.1} parent=5 // pred_check_branch
        %317 = sbr.rel (%p314) target = $region56
      $region55: #{tpu_custom_call.1} parent=5 // pred_region
        %s318 = ssub.s32 %s20, 1
        // Predicated region
        $region57: #{tpu_custom_call.1} parent=55 // pred_check
          %p319 = pneg %p67
        $region58: #{tpu_custom_call.1} parent=55 // pred_check_branch
          %321 = sbr.rel (%p319) target = $region60
        $region59: #{tpu_custom_call.1} parent=55 // pred_region
          %322 = dma.done [#allocation3], 256
        $region60: #{tpu_custom_call.1} parent=55 // pred_fallthru
          _
        // Predicated region
        $region61: #{tpu_custom_call.1} parent=55 // pred_check
          %p323 = pneg %p193
        $region62: #{tpu_custom_call.1} parent=55 // pred_check_branch
          %325 = sbr.rel (%p323) target = $region64
        $region63: #{tpu_custom_call.1} parent=55 // pred_region
          %326 = dma.done [#allocation6], 8192
        $region64: #{tpu_custom_call.1} parent=55 // pred_fallthru
          _
        %s327 = smul.u32 32, %s25
        %p328 = scmp.lt.s32.totalorder %s327, 63
        %s329 = scalar_select %p328, %s327, 63
        %s330 = smul.addr %s329, 8
        %s331 = scalar_lea.vmem %s0, %s330
        %p332 = pneg %p46
        %p333 = pneg %p43
        %p334 = pneg %p67
        %p335 = pneg %p64
        %p336 = pneg %p88
        %p337 = pneg %p85
        %p338 = pneg %p109
        %p339 = pneg %p106
        %p340 = pneg %p130
        %p341 = pneg %p127
        %p342 = pneg %p151
        %p343 = pneg %p148
        %p344 = pneg %p172
        %p345 = pneg %p169
        %p346 = pneg %p193
        %p347 = pneg %p190
        %p348 = pneg %p214
        %p349 = pneg %p211
        %p350 = pneg %p240
        %p351 = pneg %p237
        %s352 = sand.u32 %s227, 1
        %s353 = scalar_lea.sflag [#allocation4], %s352
        %s354 = sand.u32 %s227, 1
        %s355 = smul.addr %s354, 512
        %s356 = scalar_lea.vmem [#allocation7], %s355
        %s357 = smul.u32 32, %s25
        %p358 = scmp.lt.s32.totalorder %s357, 63
        %s359 = scalar_select %p358, %s357, 63
        %s360 = smul.addr %s359, 8
        %s361 = scalar_lea.vmem %s0, %s360
        %s362 = smul.u32 32, %s25
        %s363 = smul.u32 32, %s25
        %v365 = vld [vmem:[%s361] sm:$0xff]
        %v366 = vld [vmem:[%s361 + $0x8] sm:$0xff]
        %v367 = vld [vmem:[%s361 + $0x10] sm:$0xff]
        %v368 = vld [vmem:[%s361 + $0x18] sm:$0xff]
        %v369 = vld [vmem:[%s361 + $0x20] sm:$0xff]
        %v370 = vld [vmem:[%s361 + $0x28] sm:$0xff]
        %v371 = vld [vmem:[%s361 + $0x30] sm:$0xff]
        %v372 = vld [vmem:[%s361 + $0x38] sm:$0xff]
        %v373 = vld [vmem:[%s361 + $0x40] sm:$0xff]
        %v374 = vld [vmem:[%s361 + $0x48] sm:$0xff]
        %v375 = vld [vmem:[%s361 + $0x50] sm:$0xff]
        %v376 = vld [vmem:[%s361 + $0x58] sm:$0xff]
        %v377 = vld [vmem:[%s361 + $0x60] sm:$0xff]
        %v378 = vld [vmem:[%s361 + $0x68] sm:$0xff]
        %v379 = vld [vmem:[%s361 + $0x70] sm:$0xff]
        %v380 = vld [vmem:[%s361 + $0x78] sm:$0xff]
        %v381 = vld [vmem:[%s361 + $0x80] sm:$0xff]
        %v382 = vld [vmem:[%s361 + $0x88] sm:$0xff]
        %v383 = vld [vmem:[%s361 + $0x90] sm:$0xff]
        %v384 = vld [vmem:[%s361 + $0x98] sm:$0xff]
        %v385 = vld [vmem:[%s361 + $0xa0] sm:$0xff]
        %v386 = vld [vmem:[%s361 + $0xa8] sm:$0xff]
        %v387 = vld [vmem:[%s361 + $0xb0] sm:$0xff]
        %v388 = vld [vmem:[%s361 + $0xb8] sm:$0xff]
        %v389 = vld [vmem:[%s361 + $0xc0] sm:$0xff]
        %v390 = vld [vmem:[%s361 + $0xc8] sm:$0xff]
        %v391 = vld [vmem:[%s361 + $0xd0] sm:$0xff]
        %v392 = vld [vmem:[%s361 + $0xd8] sm:$0xff]
        %v393 = vld [vmem:[%s361 + $0xe0] sm:$0xff]
        %v394 = vld [vmem:[%s361 + $0xe8] sm:$0xff]
        %v395 = vld [vmem:[%s361 + $0xf0] sm:$0xff]
        %v396 = vld [vmem:[%s361 + $0xf8] sm:$0xff]
        %v397 = vpack.c.bf16 %v366, %v365
        %v398 = vpack.c.bf16 %v368, %v367
        %v399 = vpack.c.bf16 %v370, %v369
        %v400 = vpack.c.bf16 %v372, %v371
        %v401 = vpack.c.bf16 %v374, %v373
        %v402 = vpack.c.bf16 %v376, %v375
        %v403 = vpack.c.bf16 %v378, %v377
        %v404 = vpack.c.bf16 %v380, %v379
        %v405 = vpack.c.bf16 %v382, %v381
        %v406 = vpack.c.bf16 %v384, %v383
        %v407 = vpack.c.bf16 %v386, %v385
        %v408 = vpack.c.bf16 %v388, %v387
        %v409 = vpack.c.bf16 %v390, %v389
        %v410 = vpack.c.bf16 %v392, %v391
        %v411 = vpack.c.bf16 %v394, %v393
        %v412 = vpack.c.bf16 %v396, %v395
        %v413 = vld [vmem:[#allocation2] sm:$0xf]
        %v414 = vld [vmem:[#allocation2 + $0x4] sm:$0xf]
        %v415 = vld [vmem:[#allocation2 + $0x8] sm:$0xf]
        %v416 = vld [vmem:[#allocation2 + $0xc] sm:$0xf]
        %v417 = vld [vmem:[%s2] sm:$0x1]
        %v419 = vlaneseq
        %v420 = vshrl.u32 %v419, 7
        %v421 = vsub.s32 0, %v420
        %v422 = vrot.slane %v417, %v421
        %v428 = vunpack.c.l.b16 %v413
        %v429 = vunpack.c.l.b16 %v414
        %v430 = vunpack.c.l.b16 %v415
        %v431 = vunpack.c.l.b16 %v416
        %v432 = vpack.c.b16 %v429, %v428
        %v433 = vpack.c.b16 %v431, %v430
        %vm436 = vcmask 261120
        %v438 = vsel %vm436, %v397, 0
        %v441 = vsel %vm436, %v398, 0
        %v444 = vsel %vm436, %v399, 0
        %v447 = vsel %vm436, %v400, 0
        %v450 = vsel %vm436, %v401, 0
        %v453 = vsel %vm436, %v402, 0
        %v456 = vsel %vm436, %v403, 0
        %v459 = vsel %vm436, %v404, 0
        %v462 = vsel %vm436, %v405, 0
        %v465 = vsel %vm436, %v406, 0
        %v468 = vsel %vm436, %v407, 0
        %v471 = vsel %vm436, %v408, 0
        %v474 = vsel %vm436, %v409, 0
        %v477 = vsel %vm436, %v410, 0
        %v480 = vsel %vm436, %v411, 0
        %v483 = vsel %vm436, %v412, 0
        %485 = vmatprep.subr.bf16.mxu0 0
        %486 = vmatpush1.bf16.msra.mxu0 0
        %487 = vmatprep.subr.bf16.mxu0 0
        %488 = vmatpush1.bf16.msra.mxu0 0
        %489 = vmatprep.subr.bf16.mxu0 0
        %490 = vmatpush1.bf16.msra.mxu0 0
        %491 = vmatprep.subr.bf16.mxu0 0
        %492 = vmatpush1.bf16.msra.mxu0 0
        %493 = vmatprep.subr.bf16.mxu0 0
        %494 = vmatpush1.bf16.msra.mxu0 0
        %495 = vmatprep.subr.bf16.mxu0 0
        %496 = vmatpush1.bf16.msra.mxu0 0
        %497 = vmatprep.subr.bf16.mxu0 0
        %498 = vmatpush1.bf16.msra.mxu0 %v433
        %499 = vmatprep.subr.bf16.mxu0 0
        %500 = vmatpush1.bf16.msra.mxu0 %v432
        %501 = vmatprep.subr.bf16.mxu0 0
        %502 = vmatpush2.bf16.msra.mxu0 0
        %503 = vmatprep.subr.bf16.mxu0 0
        %504 = vmatpush2.bf16.msra.mxu0 0
        %505 = vmatprep.subr.bf16.mxu0 0
        %506 = vmatpush2.bf16.msra.mxu0 0
        %507 = vmatprep.subr.bf16.mxu0 0
        %508 = vmatpush2.bf16.msra.mxu0 0
        %509 = vmatprep.subr.bf16.mxu0 0
        %510 = vmatpush2.bf16.msra.mxu0 0
        %511 = vmatprep.subr.bf16.mxu0 0
        %512 = vmatpush2.bf16.msra.mxu0 0
        %513 = vmatprep.subr.bf16.mxu0 0
        %514 = vmatpush2.bf16.msra.mxu0 0
        %515 = vmatprep.subr.bf16.mxu0 0
        %516 = vmatpush2.bf16.msra.mxu0 0
        %517 = vmatprep.mubr.bf16.mxu0 0
        %518 = vmatmul.mubr.bf16.gmra.mxu0 %v438
        %v519 = vpop.f32.mrf.mxu0
        %v520 = vadd.f32 %v422, %v519
        %v521 = vpop.f32.mrf.mxu0
        %v522 = vpop.f32.mrf.mxu0
        %v523 = vadd.f32 %v422, %v522
        %v524 = vpop.f32.mrf.mxu0
        %525 = vmatprep.mubr.bf16.mxu0 0
        %526 = vmatmul.mubr.bf16.gmra.mxu0 %v441
        %v527 = vpop.f32.mrf.mxu0
        %v528 = vadd.f32 %v422, %v527
        %v529 = vpop.f32.mrf.mxu0
        %v530 = vpop.f32.mrf.mxu0
        %v531 = vadd.f32 %v422, %v530
        %v532 = vpop.f32.mrf.mxu0
        %533 = vmatprep.mubr.bf16.mxu0 0
        %534 = vmatmul.mubr.bf16.gmra.mxu0 %v444
        %v535 = vpop.f32.mrf.mxu0
        %v536 = vadd.f32 %v422, %v535
        %v537 = vpop.f32.mrf.mxu0
        %v538 = vpop.f32.mrf.mxu0
        %v539 = vadd.f32 %v422, %v538
        %v540 = vpop.f32.mrf.mxu0
        %541 = vmatprep.mubr.bf16.mxu0 0
        %542 = vmatmul.mubr.bf16.gmra.mxu0 %v447
        %v543 = vpop.f32.mrf.mxu0
        %v544 = vadd.f32 %v422, %v543
        %v545 = vpop.f32.mrf.mxu0
        %v546 = vpop.f32.mrf.mxu0
        %v547 = vadd.f32 %v422, %v546
        %v548 = vpop.f32.mrf.mxu0
        %549 = vmatprep.mubr.bf16.mxu0 0
        %550 = vmatmul.mubr.bf16.gmra.mxu0 %v450
        %v551 = vpop.f32.mrf.mxu0
        %v552 = vadd.f32 %v422, %v551
        %v553 = vpop.f32.mrf.mxu0
        %v554 = vpop.f32.mrf.mxu0
        %v555 = vadd.f32 %v422, %v554
        %v556 = vpop.f32.mrf.mxu0
        %557 = vmatprep.mubr.bf16.mxu0 0
        %558 = vmatmul.mubr.bf16.gmra.mxu0 %v453
        %v559 = vpop.f32.mrf.mxu0
        %v560 = vadd.f32 %v422, %v559
        %v561 = vpop.f32.mrf.mxu0
        %v562 = vpop.f32.mrf.mxu0
        %v563 = vadd.f32 %v422, %v562
        %v564 = vpop.f32.mrf.mxu0
        %565 = vmatprep.mubr.bf16.mxu0 0
        %566 = vmatmul.mubr.bf16.gmra.mxu0 %v456
        %v567 = vpop.f32.mrf.mxu0
        %v568 = vadd.f32 %v422, %v567
        %v569 = vpop.f32.mrf.mxu0
        %v570 = vpop.f32.mrf.mxu0
        %v571 = vadd.f32 %v422, %v570
        %v572 = vpop.f32.mrf.mxu0
        %573 = vmatprep.mubr.bf16.mxu0 0
        %574 = vmatmul.mubr.bf16.gmra.mxu0 %v459
        %v575 = vpop.f32.mrf.mxu0
        %v576 = vadd.f32 %v422, %v575
        %v577 = vpop.f32.mrf.mxu0
        %v578 = vpop.f32.mrf.mxu0
        %v579 = vadd.f32 %v422, %v578
        %v580 = vpop.f32.mrf.mxu0
        %581 = vmatprep.mubr.bf16.mxu0 0
        %582 = vmatmul.mubr.bf16.gmra.mxu0 %v462
        %v583 = vpop.f32.mrf.mxu0
        %v584 = vadd.f32 %v422, %v583
        %v585 = vpop.f32.mrf.mxu0
        %v586 = vpop.f32.mrf.mxu0
        %v587 = vadd.f32 %v422, %v586
        %v588 = vpop.f32.mrf.mxu0
        %589 = vmatprep.mubr.bf16.mxu0 0
        %590 = vmatmul.mubr.bf16.gmra.mxu0 %v465
        %v591 = vpop.f32.mrf.mxu0
        %v592 = vadd.f32 %v422, %v591
        %v593 = vpop.f32.mrf.mxu0
        %v594 = vpop.f32.mrf.mxu0
        %v595 = vadd.f32 %v422, %v594
        %v596 = vpop.f32.mrf.mxu0
        %597 = vmatprep.mubr.bf16.mxu0 0
        %598 = vmatmul.mubr.bf16.gmra.mxu0 %v468
        %v599 = vpop.f32.mrf.mxu0
        %v600 = vadd.f32 %v422, %v599
        %v601 = vpop.f32.mrf.mxu0
        %v602 = vpop.f32.mrf.mxu0
        %v603 = vadd.f32 %v422, %v602
        %v604 = vpop.f32.mrf.mxu0
        %605 = vmatprep.mubr.bf16.mxu0 0
        %606 = vmatmul.mubr.bf16.gmra.mxu0 %v471
        %v607 = vpop.f32.mrf.mxu0
        %v608 = vadd.f32 %v422, %v607
        %v609 = vpop.f32.mrf.mxu0
        %v610 = vpop.f32.mrf.mxu0
        %v611 = vadd.f32 %v422, %v610
        %v612 = vpop.f32.mrf.mxu0
        %613 = vmatprep.mubr.bf16.mxu0 0
        %614 = vmatmul.mubr.bf16.gmra.mxu0 %v474
        %v615 = vpop.f32.mrf.mxu0
        %v616 = vadd.f32 %v422, %v615
        %v617 = vpop.f32.mrf.mxu0
        %v618 = vpop.f32.mrf.mxu0
        %v619 = vadd.f32 %v422, %v618
        %v620 = vpop.f32.mrf.mxu0
        %621 = vmatprep.mubr.bf16.mxu0 0
        %622 = vmatmul.mubr.bf16.gmra.mxu0 %v477
        %v623 = vpop.f32.mrf.mxu0
        %v624 = vadd.f32 %v422, %v623
        %v625 = vpop.f32.mrf.mxu0
        %v626 = vpop.f32.mrf.mxu0
        %v627 = vadd.f32 %v422, %v626
        %v628 = vpop.f32.mrf.mxu0
        %629 = vmatprep.mubr.bf16.mxu0 0
        %630 = vmatmul.mubr.bf16.gmra.mxu0 %v480
        %v631 = vpop.f32.mrf.mxu0
        %v632 = vadd.f32 %v422, %v631
        %v633 = vpop.f32.mrf.mxu0
        %v634 = vpop.f32.mrf.mxu0
        %v635 = vadd.f32 %v422, %v634
        %v636 = vpop.f32.mrf.mxu0
        %637 = vmatprep.mubr.bf16.mxu0 0
        %638 = vmatmul.mubr.bf16.gmra.mxu0 %v483
        %v639 = vpop.f32.mrf.mxu0
        %v640 = vadd.f32 %v422, %v639
        %v641 = vpop.f32.mrf.mxu0
        %v642 = vpop.f32.mrf.mxu0
        %v643 = vadd.f32 %v422, %v642
        %v644 = vpop.f32.mrf.mxu0
        %645 = vdwg.mxu0
        %vm646 = vcmp.gt.f32.partialorder %v520, 0.0
        %vm647 = vcmp.gt.f32.partialorder %v523, 0.0
        %vm648 = vcmp.gt.f32.partialorder %v528, 0.0
        %vm649 = vcmp.gt.f32.partialorder %v531, 0.0
        %vm650 = vcmp.gt.f32.partialorder %v536, 0.0
        %vm651 = vcmp.gt.f32.partialorder %v539, 0.0
        %vm652 = vcmp.gt.f32.partialorder %v544, 0.0
        %vm653 = vcmp.gt.f32.partialorder %v547, 0.0
        %vm654 = vcmp.gt.f32.partialorder %v552, 0.0
        %vm655 = vcmp.gt.f32.partialorder %v555, 0.0
        %vm656 = vcmp.gt.f32.partialorder %v560, 0.0
        %vm657 = vcmp.gt.f32.partialorder %v563, 0.0
        %vm658 = vcmp.gt.f32.partialorder %v568, 0.0
        %vm659 = vcmp.gt.f32.partialorder %v571, 0.0
        %vm660 = vcmp.gt.f32.partialorder %v576, 0.0
        %vm661 = vcmp.gt.f32.partialorder %v579, 0.0
        %vm662 = vcmp.gt.f32.partialorder %v584, 0.0
        %vm663 = vcmp.gt.f32.partialorder %v587, 0.0
        %vm664 = vcmp.gt.f32.partialorder %v592, 0.0
        %vm665 = vcmp.gt.f32.partialorder %v595, 0.0
        %vm666 = vcmp.gt.f32.partialorder %v600, 0.0
        %vm667 = vcmp.gt.f32.partialorder %v603, 0.0
        %vm668 = vcmp.gt.f32.partialorder %v608, 0.0
        %vm669 = vcmp.gt.f32.partialorder %v611, 0.0
        %vm670 = vcmp.gt.f32.partialorder %v616, 0.0
        %vm671 = vcmp.gt.f32.partialorder %v619, 0.0
        %vm672 = vcmp.gt.f32.partialorder %v624, 0.0
        %vm673 = vcmp.gt.f32.partialorder %v627, 0.0
        %vm674 = vcmp.gt.f32.partialorder %v632, 0.0
        %vm675 = vcmp.gt.f32.partialorder %v635, 0.0
        %vm676 = vcmp.gt.f32.partialorder %v640, 0.0
        %vm677 = vcmp.gt.f32.partialorder %v643, 0.0
        %v678 = vmul.f32 %v520, 0.2
        %v679 = vmul.f32 %v523, 0.2
        %v680 = vmul.f32 %v528, 0.2
        %v681 = vmul.f32 %v531, 0.2
        %v682 = vmul.f32 %v536, 0.2
        %v683 = vmul.f32 %v539, 0.2
        %v684 = vmul.f32 %v544, 0.2
        %v685 = vmul.f32 %v547, 0.2
        %v686 = vmul.f32 %v552, 0.2
        %v687 = vmul.f32 %v555, 0.2
        %v688 = vmul.f32 %v560, 0.2
        %v689 = vmul.f32 %v563, 0.2
        %v690 = vmul.f32 %v568, 0.2
        %v691 = vmul.f32 %v571, 0.2
        %v692 = vmul.f32 %v576, 0.2
        %v693 = vmul.f32 %v579, 0.2
        %v694 = vmul.f32 %v584, 0.2
        %v695 = vmul.f32 %v587, 0.2
        %v696 = vmul.f32 %v592, 0.2
        %v697 = vmul.f32 %v595, 0.2
        %v698 = vmul.f32 %v600, 0.2
        %v699 = vmul.f32 %v603, 0.2
        %v700 = vmul.f32 %v608, 0.2
        %v701 = vmul.f32 %v611, 0.2
        %v702 = vmul.f32 %v616, 0.2
        %v703 = vmul.f32 %v619, 0.2
        %v704 = vmul.f32 %v624, 0.2
        %v705 = vmul.f32 %v627, 0.2
        %v706 = vmul.f32 %v632, 0.2
        %v707 = vmul.f32 %v635, 0.2
        %v708 = vmul.f32 %v640, 0.2
        %v709 = vmul.f32 %v643, 0.2
        %v710 = vsel %vm646, %v520, %v678
        %v711 = vsel %vm647, %v523, %v679
        %v712 = vsel %vm648, %v528, %v680
        %v713 = vsel %vm649, %v531, %v681
        %v714 = vsel %vm650, %v536, %v682
        %v715 = vsel %vm651, %v539, %v683
        %v716 = vsel %vm652, %v544, %v684
        %v717 = vsel %vm653, %v547, %v685
        %v718 = vsel %vm654, %v552, %v686
        %v719 = vsel %vm655, %v555, %v687
        %v720 = vsel %vm656, %v560, %v688
        %v721 = vsel %vm657, %v563, %v689
        %v722 = vsel %vm658, %v568, %v690
        %v723 = vsel %vm659, %v571, %v691
        %v724 = vsel %vm660, %v576, %v692
        %v725 = vsel %vm661, %v579, %v693
        %v726 = vsel %vm662, %v584, %v694
        %v727 = vsel %vm663, %v587, %v695
        %v728 = vsel %vm664, %v592, %v696
        %v729 = vsel %vm665, %v595, %v697
        %v730 = vsel %vm666, %v600, %v698
        %v731 = vsel %vm667, %v603, %v699
        %v732 = vsel %vm668, %v608, %v700
        %v733 = vsel %vm669, %v611, %v701
        %v734 = vsel %vm670, %v616, %v702
        %v735 = vsel %vm671, %v619, %v703
        %v736 = vsel %vm672, %v624, %v704
        %v737 = vsel %vm673, %v627, %v705
        %v738 = vsel %vm674, %v632, %v706
        %v739 = vsel %vm675, %v635, %v707
        %v740 = vsel %vm676, %v640, %v708
        %v741 = vsel %vm677, %v643, %v709
        %v742 = vpack.c.bf16 %v711, %v710
        %v743 = vpack.c.bf16 %v713, %v712
        %v744 = vpack.c.bf16 %v715, %v714
        %v745 = vpack.c.bf16 %v717, %v716
        %v746 = vpack.c.bf16 %v719, %v718
        %v747 = vpack.c.bf16 %v721, %v720
        %v748 = vpack.c.bf16 %v723, %v722
        %v749 = vpack.c.bf16 %v725, %v724
        %v750 = vpack.c.bf16 %v727, %v726
        %v751 = vpack.c.bf16 %v729, %v728
        %v752 = vpack.c.bf16 %v731, %v730
        %v753 = vpack.c.bf16 %v733, %v732
        %v754 = vpack.c.bf16 %v735, %v734
        %v755 = vpack.c.bf16 %v737, %v736
        %v756 = vpack.c.bf16 %v739, %v738
        %v757 = vpack.c.bf16 %v741, %v740
        %v758 = vld [vmem:[%s3] sm:$0xff]
        %v759 = vld [vmem:[%s3 + $0x8] sm:$0xff]
        %v760 = vld [vmem:[%s3 + $0x10] sm:$0xff]
        %v761 = vld [vmem:[%s3 + $0x18] sm:$0xff]
        %v762 = vld [vmem:[%s3 + $0x20] sm:$0xff]
        %v763 = vld [vmem:[%s3 + $0x28] sm:$0xff]
        %v764 = vld [vmem:[%s3 + $0x30] sm:$0xff]
        %v765 = vld [vmem:[%s3 + $0x38] sm:$0xff]
        %v766 = vld [vmem:[%s3 + $0x40] sm:$0xff]
        %v767 = vld [vmem:[%s3 + $0x48] sm:$0xff]
        %v768 = vld [vmem:[%s3 + $0x50] sm:$0xff]
        %v769 = vld [vmem:[%s3 + $0x58] sm:$0xff]
        %v770 = vld [vmem:[%s3 + $0x60] sm:$0xff]
        %v771 = vld [vmem:[%s3 + $0x68] sm:$0xff]
        %v772 = vld [vmem:[%s3 + $0x70] sm:$0xff]
        %v773 = vld [vmem:[%s3 + $0x78] sm:$0xff]
        %v774 = vld [vmem:[%s4] sm:$0x3]
        %v776 = vlaneseq
        %v777 = vshrl.u32 %v776, 7
        %v778 = vsub.s32 0, %v777
        %v779 = vrot.slane %v774, %v778
        %v780 = vlaneseq
        %v781 = vshrl.u32 %v780, 7
        %v782 = vsub.s32 1, %v781
        %v783 = vrot.slane %v774, %v782
        %v802 = vunpack.c.l.b16 %v758
        %v803 = vunpack.c.h.b16 %v758
        %v804 = vunpack.c.l.b16 %v759
        %v805 = vunpack.c.h.b16 %v759
        %v806 = vunpack.c.l.b16 %v760
        %v807 = vunpack.c.h.b16 %v760
        %v808 = vunpack.c.l.b16 %v761
        %v809 = vunpack.c.h.b16 %v761
        %v810 = vunpack.c.l.b16 %v762
        %v811 = vunpack.c.h.b16 %v762
        %v812 = vunpack.c.l.b16 %v763
        %v813 = vunpack.c.h.b16 %v763
        %v814 = vunpack.c.l.b16 %v764
        %v815 = vunpack.c.h.b16 %v764
        %v816 = vunpack.c.l.b16 %v765
        %v817 = vunpack.c.h.b16 %v765
        %v818 = vunpack.c.l.b16 %v766
        %v819 = vunpack.c.h.b16 %v766
        %v820 = vunpack.c.l.b16 %v767
        %v821 = vunpack.c.h.b16 %v767
        %v822 = vunpack.c.l.b16 %v768
        %v823 = vunpack.c.h.b16 %v768
        %v824 = vunpack.c.l.b16 %v769
        %v825 = vunpack.c.h.b16 %v769
        %v826 = vunpack.c.l.b16 %v770
        %v827 = vunpack.c.h.b16 %v770
        %v828 = vunpack.c.l.b16 %v771
        %v829 = vunpack.c.h.b16 %v771
        %v830 = vunpack.c.l.b16 %v772
        %v831 = vunpack.c.h.b16 %v772
        %v832 = vunpack.c.l.b16 %v773
        %v833 = vunpack.c.h.b16 %v773
        %v834 = vpack.c.b16 %v804, %v802
        %v835 = vpack.c.b16 %v805, %v803
        %v836 = vpack.c.b16 %v808, %v806
        %v837 = vpack.c.b16 %v809, %v807
        %v838 = vpack.c.b16 %v812, %v810
        %v839 = vpack.c.b16 %v813, %v811
        %v840 = vpack.c.b16 %v816, %v814
        %v841 = vpack.c.b16 %v817, %v815
        %v842 = vpack.c.b16 %v820, %v818
        %v843 = vpack.c.b16 %v821, %v819
        %v844 = vpack.c.b16 %v824, %v822
        %v845 = vpack.c.b16 %v825, %v823
        %v846 = vpack.c.b16 %v828, %v826
        %v847 = vpack.c.b16 %v829, %v827
        %v848 = vpack.c.b16 %v832, %v830
        %v849 = vpack.c.b16 %v833, %v831
        %866 = vmatprep.subr.bf16.mxu0 %v849
        %867 = vmatpush1.bf16.msra.mxu0 %v848
        %868 = vmatprep.subr.bf16.mxu0 %v847
        %869 = vmatpush1.bf16.msra.mxu0 %v846
        %870 = vmatprep.subr.bf16.mxu0 %v845
        %871 = vmatpush1.bf16.msra.mxu0 %v844
        %872 = vmatprep.subr.bf16.mxu0 %v843
        %873 = vmatpush1.bf16.msra.mxu0 %v842
        %874 = vmatprep.subr.bf16.mxu0 %v841
        %875 = vmatpush1.bf16.msra.mxu0 %v840
        %876 = vmatprep.subr.bf16.mxu0 %v839
        %877 = vmatpush1.bf16.msra.mxu0 %v838
        %878 = vmatprep.subr.bf16.mxu0 %v837
        %879 = vmatpush1.bf16.msra.mxu0 %v836
        %880 = vmatprep.subr.bf16.mxu0 %v835
        %881 = vmatpush1.bf16.msra.mxu0 %v834
        %882 = vmatprep.subr.bf16.mxu0 0
        %883 = vmatpush2.bf16.msra.mxu0 0
        %884 = vmatprep.subr.bf16.mxu0 0
        %885 = vmatpush2.bf16.msra.mxu0 0
        %886 = vmatprep.subr.bf16.mxu0 0
        %887 = vmatpush2.bf16.msra.mxu0 0
        %888 = vmatprep.subr.bf16.mxu0 0
        %889 = vmatpush2.bf16.msra.mxu0 0
        %890 = vmatprep.subr.bf16.mxu0 0
        %891 = vmatpush2.bf16.msra.mxu0 0
        %892 = vmatprep.subr.bf16.mxu0 0
        %893 = vmatpush2.bf16.msra.mxu0 0
        %894 = vmatprep.subr.bf16.mxu0 0
        %895 = vmatpush2.bf16.msra.mxu0 0
        %896 = vmatprep.subr.bf16.mxu0 0
        %897 = vmatpush2.bf16.msra.mxu0 0
        %898 = vmatprep.mubr.bf16.mxu0 0
        %899 = vmatmul.mubr.bf16.gmra.mxu0 %v742
        %v900 = vpop.f32.mrf.mxu0
        %v901 = vadd.f32 %v779, %v900
        %v902 = vpop.f32.mrf.mxu0
        %v903 = vadd.f32 %v783, %v902
        %v904 = vpop.f32.mrf.mxu0
        %v905 = vadd.f32 %v779, %v904
        %v906 = vpop.f32.mrf.mxu0
        %v907 = vadd.f32 %v783, %v906
        %908 = vmatprep.mubr.bf16.mxu0 0
        %909 = vmatmul.mubr.bf16.gmra.mxu0 %v743
        %v910 = vpop.f32.mrf.mxu0
        %v911 = vadd.f32 %v779, %v910
        %v912 = vpop.f32.mrf.mxu0
        %v913 = vadd.f32 %v783, %v912
        %v914 = vpop.f32.mrf.mxu0
        %v915 = vadd.f32 %v779, %v914
        %v916 = vpop.f32.mrf.mxu0
        %v917 = vadd.f32 %v783, %v916
        %918 = vmatprep.mubr.bf16.mxu0 0
        %919 = vmatmul.mubr.bf16.gmra.mxu0 %v744
        %v920 = vpop.f32.mrf.mxu0
        %v921 = vadd.f32 %v779, %v920
        %v922 = vpop.f32.mrf.mxu0
        %v923 = vadd.f32 %v783, %v922
        %v924 = vpop.f32.mrf.mxu0
        %v925 = vadd.f32 %v779, %v924
        %v926 = vpop.f32.mrf.mxu0
        %v927 = vadd.f32 %v783, %v926
        %928 = vmatprep.mubr.bf16.mxu0 0
        %929 = vmatmul.mubr.bf16.gmra.mxu0 %v745
        %v930 = vpop.f32.mrf.mxu0
        %v931 = vadd.f32 %v779, %v930
        %v932 = vpop.f32.mrf.mxu0
        %v933 = vadd.f32 %v783, %v932
        %v934 = vpop.f32.mrf.mxu0
        %v935 = vadd.f32 %v779, %v934
        %v936 = vpop.f32.mrf.mxu0
        %v937 = vadd.f32 %v783, %v936
        %938 = vmatprep.mubr.bf16.mxu0 0
        %939 = vmatmul.mubr.bf16.gmra.mxu0 %v746
        %v940 = vpop.f32.mrf.mxu0
        %v941 = vadd.f32 %v779, %v940
        %v942 = vpop.f32.mrf.mxu0
        %v943 = vadd.f32 %v783, %v942
        %v944 = vpop.f32.mrf.mxu0
        %v945 = vadd.f32 %v779, %v944
        %v946 = vpop.f32.mrf.mxu0
        %v947 = vadd.f32 %v783, %v946
        %948 = vmatprep.mubr.bf16.mxu0 0
        %949 = vmatmul.mubr.bf16.gmra.mxu0 %v747
        %v950 = vpop.f32.mrf.mxu0
        %v951 = vadd.f32 %v779, %v950
        %v952 = vpop.f32.mrf.mxu0
        %v953 = vadd.f32 %v783, %v952
        %v954 = vpop.f32.mrf.mxu0
        %v955 = vadd.f32 %v779, %v954
        %v956 = vpop.f32.mrf.mxu0
        %v957 = vadd.f32 %v783, %v956
        %958 = vmatprep.mubr.bf16.mxu0 0
        %959 = vmatmul.mubr.bf16.gmra.mxu0 %v748
        %v960 = vpop.f32.mrf.mxu0
        %v961 = vadd.f32 %v779, %v960
        %v962 = vpop.f32.mrf.mxu0
        %v963 = vadd.f32 %v783, %v962
        %v964 = vpop.f32.mrf.mxu0
        %v965 = vadd.f32 %v779, %v964
        %v966 = vpop.f32.mrf.mxu0
        %v967 = vadd.f32 %v783, %v966
        %968 = vmatprep.mubr.bf16.mxu0 0
        %969 = vmatmul.mubr.bf16.gmra.mxu0 %v749
        %v970 = vpop.f32.mrf.mxu0
        %v971 = vadd.f32 %v779, %v970
        %v972 = vpop.f32.mrf.mxu0
        %v973 = vadd.f32 %v783, %v972
        %v974 = vpop.f32.mrf.mxu0
        %v975 = vadd.f32 %v779, %v974
        %v976 = vpop.f32.mrf.mxu0
        %v977 = vadd.f32 %v783, %v976
        %978 = vmatprep.mubr.bf16.mxu0 0
        %979 = vmatmul.mubr.bf16.gmra.mxu0 %v750
        %v980 = vpop.f32.mrf.mxu0
        %v981 = vadd.f32 %v779, %v980
        %v982 = vpop.f32.mrf.mxu0
        %v983 = vadd.f32 %v783, %v982
        %v984 = vpop.f32.mrf.mxu0
        %v985 = vadd.f32 %v779, %v984
        %v986 = vpop.f32.mrf.mxu0
        %v987 = vadd.f32 %v783, %v986
        %988 = vmatprep.mubr.bf16.mxu0 0
        %989 = vmatmul.mubr.bf16.gmra.mxu0 %v751
        %v990 = vpop.f32.mrf.mxu0
        %v991 = vadd.f32 %v779, %v990
        %v992 = vpop.f32.mrf.mxu0
        %v993 = vadd.f32 %v783, %v992
        %v994 = vpop.f32.mrf.mxu0
        %v995 = vadd.f32 %v779, %v994
        %v996 = vpop.f32.mrf.mxu0
        %v997 = vadd.f32 %v783, %v996
        %998 = vmatprep.mubr.bf16.mxu0 0
        %999 = vmatmul.mubr.bf16.gmra.mxu0 %v752
        %v1000 = vpop.f32.mrf.mxu0
        %v1001 = vadd.f32 %v779, %v1000
        %v1002 = vpop.f32.mrf.mxu0
        %v1003 = vadd.f32 %v783, %v1002
        %v1004 = vpop.f32.mrf.mxu0
        %v1005 = vadd.f32 %v779, %v1004
        %v1006 = vpop.f32.mrf.mxu0
        %v1007 = vadd.f32 %v783, %v1006
        %1008 = vmatprep.mubr.bf16.mxu0 0
        %1009 = vmatmul.mubr.bf16.gmra.mxu0 %v753
        %v1010 = vpop.f32.mrf.mxu0
        %v1011 = vadd.f32 %v779, %v1010
        %v1012 = vpop.f32.mrf.mxu0
        %v1013 = vadd.f32 %v783, %v1012
        %v1014 = vpop.f32.mrf.mxu0
        %v1015 = vadd.f32 %v779, %v1014
        %v1016 = vpop.f32.mrf.mxu0
        %v1017 = vadd.f32 %v783, %v1016
        %1018 = vmatprep.mubr.bf16.mxu0 0
        %1019 = vmatmul.mubr.bf16.gmra.mxu0 %v754
        %v1020 = vpop.f32.mrf.mxu0
        %v1021 = vadd.f32 %v779, %v1020
        %v1022 = vpop.f32.mrf.mxu0
        %v1023 = vadd.f32 %v783, %v1022
        %v1024 = vpop.f32.mrf.mxu0
        %v1025 = vadd.f32 %v779, %v1024
        %v1026 = vpop.f32.mrf.mxu0
        %v1027 = vadd.f32 %v783, %v1026
        %1028 = vmatprep.mubr.bf16.mxu0 0
        %1029 = vmatmul.mubr.bf16.gmra.mxu0 %v755
        %v1030 = vpop.f32.mrf.mxu0
        %v1031 = vadd.f32 %v779, %v1030
        %v1032 = vpop.f32.mrf.mxu0
        %v1033 = vadd.f32 %v783, %v1032
        %v1034 = vpop.f32.mrf.mxu0
        %v1035 = vadd.f32 %v779, %v1034
        %v1036 = vpop.f32.mrf.mxu0
        %v1037 = vadd.f32 %v783, %v1036
        %1038 = vmatprep.mubr.bf16.mxu0 0
        %1039 = vmatmul.mubr.bf16.gmra.mxu0 %v756
        %v1040 = vpop.f32.mrf.mxu0
        %v1041 = vadd.f32 %v779, %v1040
        %v1042 = vpop.f32.mrf.mxu0
        %v1043 = vadd.f32 %v783, %v1042
        %v1044 = vpop.f32.mrf.mxu0
        %v1045 = vadd.f32 %v779, %v1044
        %v1046 = vpop.f32.mrf.mxu0
        %v1047 = vadd.f32 %v783, %v1046
        %1048 = vmatprep.mubr.bf16.mxu0 0
        %1049 = vmatmul.mubr.bf16.gmra.mxu0 %v757
        %v1050 = vpop.f32.mrf.mxu0
        %v1051 = vadd.f32 %v779, %v1050
        %v1052 = vpop.f32.mrf.mxu0
        %v1053 = vadd.f32 %v783, %v1052
        %v1054 = vpop.f32.mrf.mxu0
        %v1055 = vadd.f32 %v779, %v1054
        %v1056 = vpop.f32.mrf.mxu0
        %v1057 = vadd.f32 %v783, %v1056
        %1058 = vdwg.mxu0
        %vm1059 = vcmp.gt.f32.partialorder %v901, 0.0
        %vm1060 = vcmp.gt.f32.partialorder %v903, 0.0
        %vm1061 = vcmp.gt.f32.partialorder %v905, 0.0
        %vm1062 = vcmp.gt.f32.partialorder %v907, 0.0
        %vm1063 = vcmp.gt.f32.partialorder %v911, 0.0
        %vm1064 = vcmp.gt.f32.partialorder %v913, 0.0
        %vm1065 = vcmp.gt.f32.partialorder %v915, 0.0
        %vm1066 = vcmp.gt.f32.partialorder %v917, 0.0
        %vm1067 = vcmp.gt.f32.partialorder %v921, 0.0
        %vm1068 = vcmp.gt.f32.partialorder %v923, 0.0
        %vm1069 = vcmp.gt.f32.partialorder %v925, 0.0
        %vm1070 = vcmp.gt.f32.partialorder %v927, 0.0
        %vm1071 = vcmp.gt.f32.partialorder %v931, 0.0
        %vm1072 = vcmp.gt.f32.partialorder %v933, 0.0
        %vm1073 = vcmp.gt.f32.partialorder %v935, 0.0
        %vm1074 = vcmp.gt.f32.partialorder %v937, 0.0
        %vm1075 = vcmp.gt.f32.partialorder %v941, 0.0
        %vm1076 = vcmp.gt.f32.partialorder %v943, 0.0
        %vm1077 = vcmp.gt.f32.partialorder %v945, 0.0
        %vm1078 = vcmp.gt.f32.partialorder %v947, 0.0
        %vm1079 = vcmp.gt.f32.partialorder %v951, 0.0
        %vm1080 = vcmp.gt.f32.partialorder %v953, 0.0
        %vm1081 = vcmp.gt.f32.partialorder %v955, 0.0
        %vm1082 = vcmp.gt.f32.partialorder %v957, 0.0
        %vm1083 = vcmp.gt.f32.partialorder %v961, 0.0
        %vm1084 = vcmp.gt.f32.partialorder %v963, 0.0
        %vm1085 = vcmp.gt.f32.partialorder %v965, 0.0
        %vm1086 = vcmp.gt.f32.partialorder %v967, 0.0
        %vm1087 = vcmp.gt.f32.partialorder %v971, 0.0
        %vm1088 = vcmp.gt.f32.partialorder %v973, 0.0
        %vm1089 = vcmp.gt.f32.partialorder %v975, 0.0
        %vm1090 = vcmp.gt.f32.partialorder %v977, 0.0
        %vm1091 = vcmp.gt.f32.partialorder %v981, 0.0
        %vm1092 = vcmp.gt.f32.partialorder %v983, 0.0
        %vm1093 = vcmp.gt.f32.partialorder %v985, 0.0
        %vm1094 = vcmp.gt.f32.partialorder %v987, 0.0
        %vm1095 = vcmp.gt.f32.partialorder %v991, 0.0
        %vm1096 = vcmp.gt.f32.partialorder %v993, 0.0
        %vm1097 = vcmp.gt.f32.partialorder %v995, 0.0
        %vm1098 = vcmp.gt.f32.partialorder %v997, 0.0
        %vm1099 = vcmp.gt.f32.partialorder %v1001, 0.0
        %vm1100 = vcmp.gt.f32.partialorder %v1003, 0.0
        %vm1101 = vcmp.gt.f32.partialorder %v1005, 0.0
        %vm1102 = vcmp.gt.f32.partialorder %v1007, 0.0
        %vm1103 = vcmp.gt.f32.partialorder %v1011, 0.0
        %vm1104 = vcmp.gt.f32.partialorder %v1013, 0.0
        %vm1105 = vcmp.gt.f32.partialorder %v1015, 0.0
        %vm1106 = vcmp.gt.f32.partialorder %v1017, 0.0
        %vm1107 = vcmp.gt.f32.partialorder %v1021, 0.0
        %vm1108 = vcmp.gt.f32.partialorder %v1023, 0.0
        %vm1109 = vcmp.gt.f32.partialorder %v1025, 0.0
        %vm1110 = vcmp.gt.f32.partialorder %v1027, 0.0
        %vm1111 = vcmp.gt.f32.partialorder %v1031, 0.0
        %vm1112 = vcmp.gt.f32.partialorder %v1033, 0.0
        %vm1113 = vcmp.gt.f32.partialorder %v1035, 0.0
        %vm1114 = vcmp.gt.f32.partialorder %v1037, 0.0
        %vm1115 = vcmp.gt.f32.partialorder %v1041, 0.0
        %vm1116 = vcmp.gt.f32.partialorder %v1043, 0.0
        %vm1117 = vcmp.gt.f32.partialorder %v1045, 0.0
        %vm1118 = vcmp.gt.f32.partialorder %v1047, 0.0
        %vm1119 = vcmp.gt.f32.partialorder %v1051, 0.0
        %vm1120 = vcmp.gt.f32.partialorder %v1053, 0.0
        %vm1121 = vcmp.gt.f32.partialorder %v1055, 0.0
        %vm1122 = vcmp.gt.f32.partialorder %v1057, 0.0
        %v1123 = vmul.f32 %v901, 0.2
        %v1124 = vmul.f32 %v903, 0.2
        %v1125 = vmul.f32 %v905, 0.2
        %v1126 = vmul.f32 %v907, 0.2
        %v1127 = vmul.f32 %v911, 0.2
        %v1128 = vmul.f32 %v913, 0.2
        %v1129 = vmul.f32 %v915, 0.2
        %v1130 = vmul.f32 %v917, 0.2
        %v1131 = vmul.f32 %v921, 0.2
        %v1132 = vmul.f32 %v923, 0.2
        %v1133 = vmul.f32 %v925, 0.2
        %v1134 = vmul.f32 %v927, 0.2
        %v1135 = vmul.f32 %v931, 0.2
        %v1136 = vmul.f32 %v933, 0.2
        %v1137 = vmul.f32 %v935, 0.2
        %v1138 = vmul.f32 %v937, 0.2
        %v1139 = vmul.f32 %v941, 0.2
        %v1140 = vmul.f32 %v943, 0.2
        %v1141 = vmul.f32 %v945, 0.2
        %v1142 = vmul.f32 %v947, 0.2
        %v1143 = vmul.f32 %v951, 0.2
        %v1144 = vmul.f32 %v953, 0.2
        %v1145 = vmul.f32 %v955, 0.2
        %v1146 = vmul.f32 %v957, 0.2
        %v1147 = vmul.f32 %v961, 0.2
        %v1148 = vmul.f32 %v963, 0.2
        %v1149 = vmul.f32 %v965, 0.2
        %v1150 = vmul.f32 %v967, 0.2
        %v1151 = vmul.f32 %v971, 0.2
        %v1152 = vmul.f32 %v973, 0.2
        %v1153 = vmul.f32 %v975, 0.2
        %v1154 = vmul.f32 %v977, 0.2
        %v1155 = vmul.f32 %v981, 0.2
        %v1156 = vmul.f32 %v983, 0.2
        %v1157 = vmul.f32 %v985, 0.2
        %v1158 = vmul.f32 %v987, 0.2
        %v1159 = vmul.f32 %v991, 0.2
        %v1160 = vmul.f32 %v993, 0.2
        %v1161 = vmul.f32 %v995, 0.2
        %v1162 = vmul.f32 %v997, 0.2
        %v1163 = vmul.f32 %v1001, 0.2
        %v1164 = vmul.f32 %v1003, 0.2
        %v1165 = vmul.f32 %v1005, 0.2
        %v1166 = vmul.f32 %v1007, 0.2
        %v1167 = vmul.f32 %v1011, 0.2
        %v1168 = vmul.f32 %v1013, 0.2
        %v1169 = vmul.f32 %v1015, 0.2
        %v1170 = vmul.f32 %v1017, 0.2
        %v1171 = vmul.f32 %v1021, 0.2
        %v1172 = vmul.f32 %v1023, 0.2
        %v1173 = vmul.f32 %v1025, 0.2
        %v1174 = vmul.f32 %v1027, 0.2
        %v1175 = vmul.f32 %v1031, 0.2
        %v1176 = vmul.f32 %v1033, 0.2
        %v1177 = vmul.f32 %v1035, 0.2
        %v1178 = vmul.f32 %v1037, 0.2
        %v1179 = vmul.f32 %v1041, 0.2
        %v1180 = vmul.f32 %v1043, 0.2
        %v1181 = vmul.f32 %v1045, 0.2
        %v1182 = vmul.f32 %v1047, 0.2
        %v1183 = vmul.f32 %v1051, 0.2
        %v1184 = vmul.f32 %v1053, 0.2
        %v1185 = vmul.f32 %v1055, 0.2
        %v1186 = vmul.f32 %v1057, 0.2
        %v1187 = vsel %vm1059, %v901, %v1123
        %v1188 = vsel %vm1060, %v903, %v1124
        %v1189 = vsel %vm1061, %v905, %v1125
        %v1190 = vsel %vm1062, %v907, %v1126
        %v1191 = vsel %vm1063, %v911, %v1127
        %v1192 = vsel %vm1064, %v913, %v1128
        %v1193 = vsel %vm1065, %v915, %v1129
        %v1194 = vsel %vm1066, %v917, %v1130
        %v1195 = vsel %vm1067, %v921, %v1131
        %v1196 = vsel %vm1068, %v923, %v1132
        %v1197 = vsel %vm1069, %v925, %v1133
        %v1198 = vsel %vm1070, %v927, %v1134
        %v1199 = vsel %vm1071, %v931, %v1135
        %v1200 = vsel %vm1072, %v933, %v1136
        %v1201 = vsel %vm1073, %v935, %v1137
        %v1202 = vsel %vm1074, %v937, %v1138
        %v1203 = vsel %vm1075, %v941, %v1139
        %v1204 = vsel %vm1076, %v943, %v1140
        %v1205 = vsel %vm1077, %v945, %v1141
        %v1206 = vsel %vm1078, %v947, %v1142
        %v1207 = vsel %vm1079, %v951, %v1143
        %v1208 = vsel %vm1080, %v953, %v1144
        %v1209 = vsel %vm1081, %v955, %v1145
        %v1210 = vsel %vm1082, %v957, %v1146
        %v1211 = vsel %vm1083, %v961, %v1147
        %v1212 = vsel %vm1084, %v963, %v1148
        %v1213 = vsel %vm1085, %v965, %v1149
        %v1214 = vsel %vm1086, %v967, %v1150
        %v1215 = vsel %vm1087, %v971, %v1151
        %v1216 = vsel %vm1088, %v973, %v1152
        %v1217 = vsel %vm1089, %v975, %v1153
        %v1218 = vsel %vm1090, %v977, %v1154
        %v1219 = vsel %vm1091, %v981, %v1155
        %v1220 = vsel %vm1092, %v983, %v1156
        %v1221 = vsel %vm1093, %v985, %v1157
        %v1222 = vsel %vm1094, %v987, %v1158
        %v1223 = vsel %vm1095, %v991, %v1159
        %v1224 = vsel %vm1096, %v993, %v1160
        %v1225 = vsel %vm1097, %v995, %v1161
        %v1226 = vsel %vm1098, %v997, %v1162
        %v1227 = vsel %vm1099, %v1001, %v1163
        %v1228 = vsel %vm1100, %v1003, %v1164
        %v1229 = vsel %vm1101, %v1005, %v1165
        %v1230 = vsel %vm1102, %v1007, %v1166
        %v1231 = vsel %vm1103, %v1011, %v1167
        %v1232 = vsel %vm1104, %v1013, %v1168
        %v1233 = vsel %vm1105, %v1015, %v1169
        %v1234 = vsel %vm1106, %v1017, %v1170
        %v1235 = vsel %vm1107, %v1021, %v1171
        %v1236 = vsel %vm1108, %v1023, %v1172
        %v1237 = vsel %vm1109, %v1025, %v1173
        %v1238 = vsel %vm1110, %v1027, %v1174
        %v1239 = vsel %vm1111, %v1031, %v1175
        %v1240 = vsel %vm1112, %v1033, %v1176
        %v1241 = vsel %vm1113, %v1035, %v1177
        %v1242 = vsel %vm1114, %v1037, %v1178
        %v1243 = vsel %vm1115, %v1041, %v1179
        %v1244 = vsel %vm1116, %v1043, %v1180
        %v1245 = vsel %vm1117, %v1045, %v1181
        %v1246 = vsel %vm1118, %v1047, %v1182
        %v1247 = vsel %vm1119, %v1051, %v1183
        %v1248 = vsel %vm1120, %v1053, %v1184
        %v1249 = vsel %vm1121, %v1055, %v1185
        %v1250 = vsel %vm1122, %v1057, %v1186
        %v1251 = vpack.c.bf16 %v1189, %v1187
        %v1252 = vpack.c.bf16 %v1190, %v1188
        %v1253 = vpack.c.bf16 %v1193, %v1191
        %v1254 = vpack.c.bf16 %v1194, %v1192
        %v1255 = vpack.c.bf16 %v1197, %v1195
        %v1256 = vpack.c.bf16 %v1198, %v1196
        %v1257 = vpack.c.bf16 %v1201, %v1199
        %v1258 = vpack.c.bf16 %v1202, %v1200
        %v1259 = vpack.c.bf16 %v1205, %v1203
        %v1260 = vpack.c.bf16 %v1206, %v1204
        %v1261 = vpack.c.bf16 %v1209, %v1207
        %v1262 = vpack.c.bf16 %v1210, %v1208
        %v1263 = vpack.c.bf16 %v1213, %v1211
        %v1264 = vpack.c.bf16 %v1214, %v1212
        %v1265 = vpack.c.bf16 %v1217, %v1215
        %v1266 = vpack.c.bf16 %v1218, %v1216
        %v1267 = vpack.c.bf16 %v1221, %v1219
        %v1268 = vpack.c.bf16 %v1222, %v1220
        %v1269 = vpack.c.bf16 %v1225, %v1223
        %v1270 = vpack.c.bf16 %v1226, %v1224
        %v1271 = vpack.c.bf16 %v1229, %v1227
        %v1272 = vpack.c.bf16 %v1230, %v1228
        %v1273 = vpack.c.bf16 %v1233, %v1231
        %v1274 = vpack.c.bf16 %v1234, %v1232
        %v1275 = vpack.c.bf16 %v1237, %v1235
        %v1276 = vpack.c.bf16 %v1238, %v1236
        %v1277 = vpack.c.bf16 %v1241, %v1239
        %v1278 = vpack.c.bf16 %v1242, %v1240
        %v1279 = vpack.c.bf16 %v1245, %v1243
        %v1280 = vpack.c.bf16 %v1246, %v1244
        %v1281 = vpack.c.bf16 %v1249, %v1247
        %v1282 = vpack.c.bf16 %v1250, %v1248
        %v1283 = vld [vmem:[%s5] sm:$0xff]
        %v1284 = vld [vmem:[%s5 + $0x8] sm:$0xff]
        %v1285 = vld [vmem:[%s5 + $0x10] sm:$0xff]
        %v1286 = vld [vmem:[%s5 + $0x18] sm:$0xff]
        %v1287 = vld [vmem:[%s5 + $0x20] sm:$0xff]
        %v1288 = vld [vmem:[%s5 + $0x28] sm:$0xff]
        %v1289 = vld [vmem:[%s5 + $0x30] sm:$0xff]
        %v1290 = vld [vmem:[%s5 + $0x38] sm:$0xff]
        %v1291 = vld [vmem:[%s5 + $0x40] sm:$0xff]
        %v1292 = vld [vmem:[%s5 + $0x48] sm:$0xff]
        %v1293 = vld [vmem:[%s5 + $0x50] sm:$0xff]
        %v1294 = vld [vmem:[%s5 + $0x58] sm:$0xff]
        %v1295 = vld [vmem:[%s5 + $0x60] sm:$0xff]
        %v1296 = vld [vmem:[%s5 + $0x68] sm:$0xff]
        %v1297 = vld [vmem:[%s5 + $0x70] sm:$0xff]
        %v1298 = vld [vmem:[%s5 + $0x78] sm:$0xff]
        %v1299 = vld [vmem:[%s5 + $0x80] sm:$0xff]
        %v1300 = vld [vmem:[%s5 + $0x88] sm:$0xff]
        %v1301 = vld [vmem:[%s5 + $0x90] sm:$0xff]
        %v1302 = vld [vmem:[%s5 + $0x98] sm:$0xff]
        %v1303 = vld [vmem:[%s5 + $0xa0] sm:$0xff]
        %v1304 = vld [vmem:[%s5 + $0xa8] sm:$0xff]
        %v1305 = vld [vmem:[%s5 + $0xb0] sm:$0xff]
        %v1306 = vld [vmem:[%s5 + $0xb8] sm:$0xff]
        %v1307 = vld [vmem:[%s5 + $0xc0] sm:$0xff]
        %v1308 = vld [vmem:[%s5 + $0xc8] sm:$0xff]
        %v1309 = vld [vmem:[%s5 + $0xd0] sm:$0xff]
        %v1310 = vld [vmem:[%s5 + $0xd8] sm:$0xff]
        %v1311 = vld [vmem:[%s5 + $0xe0] sm:$0xff]
        %v1312 = vld [vmem:[%s5 + $0xe8] sm:$0xff]
        %v1313 = vld [vmem:[%s5 + $0xf0] sm:$0xff]
        %v1314 = vld [vmem:[%s5 + $0xf8] sm:$0xff]
        %v1315 = vld [vmem:[%s5 + $0x100] sm:$0xff]
        %v1316 = vld [vmem:[%s5 + $0x108] sm:$0xff]
        %v1317 = vld [vmem:[%s5 + $0x110] sm:$0xff]
        %v1318 = vld [vmem:[%s5 + $0x118] sm:$0xff]
        %v1319 = vld [vmem:[%s5 + $0x120] sm:$0xff]
        %v1320 = vld [vmem:[%s5 + $0x128] sm:$0xff]
        %v1321 = vld [vmem:[%s5 + $0x130] sm:$0xff]
        %v1322 = vld [vmem:[%s5 + $0x138] sm:$0xff]
        %v1323 = vld [vmem:[%s5 + $0x140] sm:$0xff]
        %v1324 = vld [vmem:[%s5 + $0x148] sm:$0xff]
        %v1325 = vld [vmem:[%s5 + $0x150] sm:$0xff]
        %v1326 = vld [vmem:[%s5 + $0x158] sm:$0xff]
        %v1327 = vld [vmem:[%s5 + $0x160] sm:$0xff]
        %v1328 = vld [vmem:[%s5 + $0x168] sm:$0xff]
        %v1329 = vld [vmem:[%s5 + $0x170] sm:$0xff]
        %v1330 = vld [vmem:[%s5 + $0x178] sm:$0xff]
        %v1331 = vld [vmem:[%s5 + $0x180] sm:$0xff]
        %v1332 = vld [vmem:[%s5 + $0x188] sm:$0xff]
        %v1333 = vld [vmem:[%s5 + $0x190] sm:$0xff]
        %v1334 = vld [vmem:[%s5 + $0x198] sm:$0xff]
        %v1335 = vld [vmem:[%s5 + $0x1a0] sm:$0xff]
        %v1336 = vld [vmem:[%s5 + $0x1a8] sm:$0xff]
        %v1337 = vld [vmem:[%s5 + $0x1b0] sm:$0xff]
        %v1338 = vld [vmem:[%s5 + $0x1b8] sm:$0xff]
        %v1339 = vld [vmem:[%s5 + $0x1c0] sm:$0xff]
        %v1340 = vld [vmem:[%s5 + $0x1c8] sm:$0xff]
        %v1341 = vld [vmem:[%s5 + $0x1d0] sm:$0xff]
        %v1342 = vld [vmem:[%s5 + $0x1d8] sm:$0xff]
        %v1343 = vld [vmem:[%s5 + $0x1e0] sm:$0xff]
        %v1344 = vld [vmem:[%s5 + $0x1e8] sm:$0xff]
        %v1345 = vld [vmem:[%s5 + $0x1f0] sm:$0xff]
        %v1346 = vld [vmem:[%s5 + $0x1f8] sm:$0xff]
        %v1347 = vld [vmem:[%s6] sm:$0xf]
        %v1349 = vlaneseq
        %v1350 = vshrl.u32 %v1349, 7
        %v1351 = vsub.s32 0, %v1350
        %v1352 = vrot.slane %v1347, %v1351
        %v1353 = vlaneseq
        %v1354 = vshrl.u32 %v1353, 7
        %v1355 = vsub.s32 1, %v1354
        %v1356 = vrot.slane %v1347, %v1355
        %v1357 = vlaneseq
        %v1358 = vshrl.u32 %v1357, 7
        %v1359 = vsub.s32 2, %v1358
        %v1360 = vrot.slane %v1347, %v1359
        %v1361 = vlaneseq
        %v1362 = vshrl.u32 %v1361, 7
        %v1363 = vsub.s32 3, %v1362
        %v1364 = vrot.slane %v1347, %v1363
        %v1433 = vunpack.c.l.b16 %v1283
        %v1434 = vunpack.c.h.b16 %v1283
        %v1435 = vunpack.c.l.b16 %v1284
        %v1436 = vunpack.c.h.b16 %v1284
        %v1437 = vunpack.c.l.b16 %v1285
        %v1438 = vunpack.c.h.b16 %v1285
        %v1439 = vunpack.c.l.b16 %v1286
        %v1440 = vunpack.c.h.b16 %v1286
        %v1441 = vunpack.c.l.b16 %v1287
        %v1442 = vunpack.c.h.b16 %v1287
        %v1443 = vunpack.c.l.b16 %v1288
        %v1444 = vunpack.c.h.b16 %v1288
        %v1445 = vunpack.c.l.b16 %v1289
        %v1446 = vunpack.c.h.b16 %v1289
        %v1447 = vunpack.c.l.b16 %v1290
        %v1448 = vunpack.c.h.b16 %v1290
        %v1449 = vunpack.c.l.b16 %v1291
        %v1450 = vunpack.c.h.b16 %v1291
        %v1451 = vunpack.c.l.b16 %v1292
        %v1452 = vunpack.c.h.b16 %v1292
        %v1453 = vunpack.c.l.b16 %v1293
        %v1454 = vunpack.c.h.b16 %v1293
        %v1455 = vunpack.c.l.b16 %v1294
        %v1456 = vunpack.c.h.b16 %v1294
        %v1457 = vunpack.c.l.b16 %v1295
        %v1458 = vunpack.c.h.b16 %v1295
        %v1459 = vunpack.c.l.b16 %v1296
        %v1460 = vunpack.c.h.b16 %v1296
        %v1461 = vunpack.c.l.b16 %v1297
        %v1462 = vunpack.c.h.b16 %v1297
        %v1463 = vunpack.c.l.b16 %v1298
        %v1464 = vunpack.c.h.b16 %v1298
        %v1465 = vunpack.c.l.b16 %v1299
        %v1466 = vunpack.c.h.b16 %v1299
        %v1467 = vunpack.c.l.b16 %v1300
        %v1468 = vunpack.c.h.b16 %v1300
        %v1469 = vunpack.c.l.b16 %v1301
        %v1470 = vunpack.c.h.b16 %v1301
        %v1471 = vunpack.c.l.b16 %v1302
        %v1472 = vunpack.c.h.b16 %v1302
        %v1473 = vunpack.c.l.b16 %v1303
        %v1474 = vunpack.c.h.b16 %v1303
        %v1475 = vunpack.c.l.b16 %v1304
        %v1476 = vunpack.c.h.b16 %v1304
        %v1477 = vunpack.c.l.b16 %v1305
        %v1478 = vunpack.c.h.b16 %v1305
        %v1479 = vunpack.c.l.b16 %v1306
        %v1480 = vunpack.c.h.b16 %v1306
        %v1481 = vunpack.c.l.b16 %v1307
        %v1482 = vunpack.c.h.b16 %v1307
        %v1483 = vunpack.c.l.b16 %v1308
        %v1484 = vunpack.c.h.b16 %v1308
        %v1485 = vunpack.c.l.b16 %v1309
        %v1486 = vunpack.c.h.b16 %v1309
        %v1487 = vunpack.c.l.b16 %v1310
        %v1488 = vunpack.c.h.b16 %v1310
        %v1489 = vunpack.c.l.b16 %v1311
        %v1490 = vunpack.c.h.b16 %v1311
        %v1491 = vunpack.c.l.b16 %v1312
        %v1492 = vunpack.c.h.b16 %v1312
        %v1493 = vunpack.c.l.b16 %v1313
        %v1494 = vunpack.c.h.b16 %v1313
        %v1495 = vunpack.c.l.b16 %v1314
        %v1496 = vunpack.c.h.b16 %v1314
        %v1497 = vunpack.c.l.b16 %v1315
        %v1498 = vunpack.c.h.b16 %v1315
        %v1499 = vunpack.c.l.b16 %v1316
        %v1500 = vunpack.c.h.b16 %v1316
        %v1501 = vunpack.c.l.b16 %v1317
        %v1502 = vunpack.c.h.b16 %v1317
        %v1503 = vunpack.c.l.b16 %v1318
        %v1504 = vunpack.c.h.b16 %v1318
        %v1505 = vunpack.c.l.b16 %v1319
        %v1506 = vunpack.c.h.b16 %v1319
        %v1507 = vunpack.c.l.b16 %v1320
        %v1508 = vunpack.c.h.b16 %v1320
        %v1509 = vunpack.c.l.b16 %v1321
        %v1510 = vunpack.c.h.b16 %v1321
        %v1511 = vunpack.c.l.b16 %v1322
        %v1512 = vunpack.c.h.b16 %v1322
        %v1513 = vunpack.c.l.b16 %v1323
        %v1514 = vunpack.c.h.b16 %v1323
        %v1515 = vunpack.c.l.b16 %v1324
        %v1516 = vunpack.c.h.b16 %v1324
        %v1517 = vunpack.c.l.b16 %v1325
        %v1518 = vunpack.c.h.b16 %v1325
        %v1519 = vunpack.c.l.b16 %v1326
        %v1520 = vunpack.c.h.b16 %v1326
        %v1521 = vunpack.c.l.b16 %v1327
        %v1522 = vunpack.c.h.b16 %v1327
        %v1523 = vunpack.c.l.b16 %v1328
        %v1524 = vunpack.c.h.b16 %v1328
        %v1525 = vunpack.c.l.b16 %v1329
        %v1526 = vunpack.c.h.b16 %v1329
        %v1527 = vunpack.c.l.b16 %v1330
        %v1528 = vunpack.c.h.b16 %v1330
        %v1529 = vunpack.c.l.b16 %v1331
        %v1530 = vunpack.c.h.b16 %v1331
        %v1531 = vunpack.c.l.b16 %v1332
        %v1532 = vunpack.c.h.b16 %v1332
        %v1533 = vunpack.c.l.b16 %v1333
        %v1534 = vunpack.c.h.b16 %v1333
        %v1535 = vunpack.c.l.b16 %v1334
        %v1536 = vunpack.c.h.b16 %v1334
        %v1537 = vunpack.c.l.b16 %v1335
        %v1538 = vunpack.c.h.b16 %v1335
        %v1539 = vunpack.c.l.b16 %v1336
        %v1540 = vunpack.c.h.b16 %v1336
        %v1541 = vunpack.c.l.b16 %v1337
        %v1542 = vunpack.c.h.b16 %v1337
        %v1543 = vunpack.c.l.b16 %v1338
        %v1544 = vunpack.c.h.b16 %v1338
        %v1545 = vunpack.c.l.b16 %v1339
        %v1546 = vunpack.c.h.b16 %v1339
        %v1547 = vunpack.c.l.b16 %v1340
        %v1548 = vunpack.c.h.b16 %v1340
        %v1549 = vunpack.c.l.b16 %v1341
        %v1550 = vunpack.c.h.b16 %v1341
        %v1551 = vunpack.c.l.b16 %v1342
        %v1552 = vunpack.c.h.b16 %v1342
        %v1553 = vunpack.c.l.b16 %v1343
        %v1554 = vunpack.c.h.b16 %v1343
        %v1555 = vunpack.c.l.b16 %v1344
        %v1556 = vunpack.c.h.b16 %v1344
        %v1557 = vunpack.c.l.b16 %v1345
        %v1558 = vunpack.c.h.b16 %v1345
        %v1559 = vunpack.c.l.b16 %v1346
        %v1560 = vunpack.c.h.b16 %v1346
        %v1561 = vpack.c.b16 %v1437, %v1433
        %v1562 = vpack.c.b16 %v1438, %v1434
        %v1563 = vpack.c.b16 %v1439, %v1435
        %v1564 = vpack.c.b16 %v1440, %v1436
        %v1565 = vpack.c.b16 %v1445, %v1441
        %v1566 = vpack.c.b16 %v1446, %v1442
        %v1567 = vpack.c.b16 %v1447, %v1443
        %v1568 = vpack.c.b16 %v1448, %v1444
        %v1569 = vpack.c.b16 %v1453, %v1449
        %v1570 = vpack.c.b16 %v1454, %v1450
        %v1571 = vpack.c.b16 %v1455, %v1451
        %v1572 = vpack.c.b16 %v1456, %v1452
        %v1573 = vpack.c.b16 %v1461, %v1457
        %v1574 = vpack.c.b16 %v1462, %v1458
        %v1575 = vpack.c.b16 %v1463, %v1459
        %v1576 = vpack.c.b16 %v1464, %v1460
        %v1577 = vpack.c.b16 %v1469, %v1465
        %v1578 = vpack.c.b16 %v1470, %v1466
        %v1579 = vpack.c.b16 %v1471, %v1467
        %v1580 = vpack.c.b16 %v1472, %v1468
        %v1581 = vpack.c.b16 %v1477, %v1473
        %v1582 = vpack.c.b16 %v1478, %v1474
        %v1583 = vpack.c.b16 %v1479, %v1475
        %v1584 = vpack.c.b16 %v1480, %v1476
        %v1585 = vpack.c.b16 %v1485, %v1481
        %v1586 = vpack.c.b16 %v1486, %v1482
        %v1587 = vpack.c.b16 %v1487, %v1483
        %v1588 = vpack.c.b16 %v1488, %v1484
        %v1589 = vpack.c.b16 %v1493, %v1489
        %v1590 = vpack.c.b16 %v1494, %v1490
        %v1591 = vpack.c.b16 %v1495, %v1491
        %v1592 = vpack.c.b16 %v1496, %v1492
        %v1593 = vpack.c.b16 %v1501, %v1497
        %v1594 = vpack.c.b16 %v1502, %v1498
        %v1595 = vpack.c.b16 %v1503, %v1499
        %v1596 = vpack.c.b16 %v1504, %v1500
        %v1597 = vpack.c.b16 %v1509, %v1505
        %v1598 = vpack.c.b16 %v1510, %v1506
        %v1599 = vpack.c.b16 %v1511, %v1507
        %v1600 = vpack.c.b16 %v1512, %v1508
        %v1601 = vpack.c.b16 %v1517, %v1513
        %v1602 = vpack.c.b16 %v1518, %v1514
        %v1603 = vpack.c.b16 %v1519, %v1515
        %v1604 = vpack.c.b16 %v1520, %v1516
        %v1605 = vpack.c.b16 %v1525, %v1521
        %v1606 = vpack.c.b16 %v1526, %v1522
        %v1607 = vpack.c.b16 %v1527, %v1523
        %v1608 = vpack.c.b16 %v1528, %v1524
        %v1609 = vpack.c.b16 %v1533, %v1529
        %v1610 = vpack.c.b16 %v1534, %v1530
        %v1611 = vpack.c.b16 %v1535, %v1531
        %v1612 = vpack.c.b16 %v1536, %v1532
        %v1613 = vpack.c.b16 %v1541, %v1537
        %v1614 = vpack.c.b16 %v1542, %v1538
        %v1615 = vpack.c.b16 %v1543, %v1539
        %v1616 = vpack.c.b16 %v1544, %v1540
        %v1617 = vpack.c.b16 %v1549, %v1545
        %v1618 = vpack.c.b16 %v1550, %v1546
        %v1619 = vpack.c.b16 %v1551, %v1547
        %v1620 = vpack.c.b16 %v1552, %v1548
        %v1621 = vpack.c.b16 %v1557, %v1553
        %v1622 = vpack.c.b16 %v1558, %v1554
        %v1623 = vpack.c.b16 %v1559, %v1555
        %v1624 = vpack.c.b16 %v1560, %v1556
        %1689 = vmatprep.subr.bf16.mxu0 %v1590
        %1690 = vmatpush1.bf16.msra.mxu0 %v1589
        %1691 = vmatprep.subr.bf16.mxu0 %v1586
        %1692 = vmatpush1.bf16.msra.mxu0 %v1585
        %1693 = vmatprep.subr.bf16.mxu0 %v1582
        %1694 = vmatpush1.bf16.msra.mxu0 %v1581
        %1695 = vmatprep.subr.bf16.mxu0 %v1578
        %1696 = vmatpush1.bf16.msra.mxu0 %v1577
        %1697 = vmatprep.subr.bf16.mxu0 %v1574
        %1698 = vmatpush1.bf16.msra.mxu0 %v1573
        %1699 = vmatprep.subr.bf16.mxu0 %v1570
        %1700 = vmatpush1.bf16.msra.mxu0 %v1569
        %1701 = vmatprep.subr.bf16.mxu0 %v1566
        %1702 = vmatpush1.bf16.msra.mxu0 %v1565
        %1703 = vmatprep.subr.bf16.mxu0 %v1562
        %1704 = vmatpush1.bf16.msra.mxu0 %v1561
        %1705 = vmatprep.subr.bf16.mxu0 %v1622
        %1706 = vmatpush2.bf16.msra.mxu0 %v1621
        %1707 = vmatprep.subr.bf16.mxu0 %v1618
        %1708 = vmatpush2.bf16.msra.mxu0 %v1617
        %1709 = vmatprep.subr.bf16.mxu0 %v1614
        %1710 = vmatpush2.bf16.msra.mxu0 %v1613
        %1711 = vmatprep.subr.bf16.mxu0 %v1610
        %1712 = vmatpush2.bf16.msra.mxu0 %v1609
        %1713 = vmatprep.subr.bf16.mxu0 %v1606
        %1714 = vmatpush2.bf16.msra.mxu0 %v1605
        %1715 = vmatprep.subr.bf16.mxu0 %v1602
        %1716 = vmatpush2.bf16.msra.mxu0 %v1601
        %1717 = vmatprep.subr.bf16.mxu0 %v1598
        %1718 = vmatpush2.bf16.msra.mxu0 %v1597
        %1719 = vmatprep.subr.bf16.mxu0 %v1594
        %1720 = vmatpush2.bf16.msra.mxu0 %v1593
        %1721 = vmatprep.mubr.bf16.mxu0 %v1252
        %1722 = vmatmul.mubr.bf16.gmra.mxu0 %v1251
        %v1723 = vpop.f32.mrf.mxu0
        %v1724 = vadd.f32 %v1352, %v1723
        %v1725 = vpop.f32.mrf.mxu0
        %v1726 = vadd.f32 %v1356, %v1725
        %v1727 = vpop.f32.mrf.mxu0
        %v1728 = vadd.f32 %v1352, %v1727
        %v1729 = vpop.f32.mrf.mxu0
        %v1730 = vadd.f32 %v1356, %v1729
        %1731 = vmatprep.mubr.bf16.mxu0 %v1254
        %1732 = vmatmul.mubr.bf16.gmra.mxu0 %v1253
        %v1733 = vpop.f32.mrf.mxu0
        %v1734 = vadd.f32 %v1352, %v1733
        %v1735 = vpop.f32.mrf.mxu0
        %v1736 = vadd.f32 %v1356, %v1735
        %v1737 = vpop.f32.mrf.mxu0
        %v1738 = vadd.f32 %v1352, %v1737
        %v1739 = vpop.f32.mrf.mxu0
        %v1740 = vadd.f32 %v1356, %v1739
        %1741 = vmatprep.mubr.bf16.mxu0 %v1256
        %1742 = vmatmul.mubr.bf16.gmra.mxu0 %v1255
        %v1743 = vpop.f32.mrf.mxu0
        %v1744 = vadd.f32 %v1352, %v1743
        %v1745 = vpop.f32.mrf.mxu0
        %v1746 = vadd.f32 %v1356, %v1745
        %v1747 = vpop.f32.mrf.mxu0
        %v1748 = vadd.f32 %v1352, %v1747
        %v1749 = vpop.f32.mrf.mxu0
        %v1750 = vadd.f32 %v1356, %v1749
        %1751 = vmatprep.mubr.bf16.mxu0 %v1258
        %1752 = vmatmul.mubr.bf16.gmra.mxu0 %v1257
        %v1753 = vpop.f32.mrf.mxu0
        %v1754 = vadd.f32 %v1352, %v1753
        %v1755 = vpop.f32.mrf.mxu0
        %v1756 = vadd.f32 %v1356, %v1755
        %v1757 = vpop.f32.mrf.mxu0
        %v1758 = vadd.f32 %v1352, %v1757
        %v1759 = vpop.f32.mrf.mxu0
        %v1760 = vadd.f32 %v1356, %v1759
        %1761 = vmatprep.mubr.bf16.mxu0 %v1260
        %1762 = vmatmul.mubr.bf16.gmra.mxu0 %v1259
        %v1763 = vpop.f32.mrf.mxu0
        %v1764 = vadd.f32 %v1352, %v1763
        %v1765 = vpop.f32.mrf.mxu0
        %v1766 = vadd.f32 %v1356, %v1765
        %v1767 = vpop.f32.mrf.mxu0
        %v1768 = vadd.f32 %v1352, %v1767
        %v1769 = vpop.f32.mrf.mxu0
        %v1770 = vadd.f32 %v1356, %v1769
        %1771 = vmatprep.mubr.bf16.mxu0 %v1262
        %1772 = vmatmul.mubr.bf16.gmra.mxu0 %v1261
        %v1773 = vpop.f32.mrf.mxu0
        %v1774 = vadd.f32 %v1352, %v1773
        %v1775 = vpop.f32.mrf.mxu0
        %v1776 = vadd.f32 %v1356, %v1775
        %v1777 = vpop.f32.mrf.mxu0
        %v1778 = vadd.f32 %v1352, %v1777
        %v1779 = vpop.f32.mrf.mxu0
        %v1780 = vadd.f32 %v1356, %v1779
        %1781 = vmatprep.mubr.bf16.mxu0 %v1264
        %1782 = vmatmul.mubr.bf16.gmra.mxu0 %v1263
        %v1783 = vpop.f32.mrf.mxu0
        %v1784 = vadd.f32 %v1352, %v1783
        %v1785 = vpop.f32.mrf.mxu0
        %v1786 = vadd.f32 %v1356, %v1785
        %v1787 = vpop.f32.mrf.mxu0
        %v1788 = vadd.f32 %v1352, %v1787
        %v1789 = vpop.f32.mrf.mxu0
        %v1790 = vadd.f32 %v1356, %v1789
        %1791 = vmatprep.mubr.bf16.mxu0 %v1266
        %1792 = vmatmul.mubr.bf16.gmra.mxu0 %v1265
        %v1793 = vpop.f32.mrf.mxu0
        %v1794 = vadd.f32 %v1352, %v1793
        %v1795 = vpop.f32.mrf.mxu0
        %v1796 = vadd.f32 %v1356, %v1795
        %v1797 = vpop.f32.mrf.mxu0
        %v1798 = vadd.f32 %v1352, %v1797
        %v1799 = vpop.f32.mrf.mxu0
        %v1800 = vadd.f32 %v1356, %v1799
        %1801 = vmatprep.mubr.bf16.mxu0 %v1268
        %1802 = vmatmul.mubr.bf16.gmra.mxu0 %v1267
        %v1803 = vpop.f32.mrf.mxu0
        %v1804 = vadd.f32 %v1352, %v1803
        %v1805 = vpop.f32.mrf.mxu0
        %v1806 = vadd.f32 %v1356, %v1805
        %v1807 = vpop.f32.mrf.mxu0
        %v1808 = vadd.f32 %v1352, %v1807
        %v1809 = vpop.f32.mrf.mxu0
        %v1810 = vadd.f32 %v1356, %v1809
        %1811 = vmatprep.mubr.bf16.mxu0 %v1270
        %1812 = vmatmul.mubr.bf16.gmra.mxu0 %v1269
        %v1813 = vpop.f32.mrf.mxu0
        %v1814 = vadd.f32 %v1352, %v1813
        %v1815 = vpop.f32.mrf.mxu0
        %v1816 = vadd.f32 %v1356, %v1815
        %v1817 = vpop.f32.mrf.mxu0
        %v1818 = vadd.f32 %v1352, %v1817
        %v1819 = vpop.f32.mrf.mxu0
        %v1820 = vadd.f32 %v1356, %v1819
        %1821 = vmatprep.mubr.bf16.mxu0 %v1272
        %1822 = vmatmul.mubr.bf16.gmra.mxu0 %v1271
        %v1823 = vpop.f32.mrf.mxu0
        %v1824 = vadd.f32 %v1352, %v1823
        %v1825 = vpop.f32.mrf.mxu0
        %v1826 = vadd.f32 %v1356, %v1825
        %v1827 = vpop.f32.mrf.mxu0
        %v1828 = vadd.f32 %v1352, %v1827
        %v1829 = vpop.f32.mrf.mxu0
        %v1830 = vadd.f32 %v1356, %v1829
        %1831 = vmatprep.mubr.bf16.mxu0 %v1274
        %1832 = vmatmul.mubr.bf16.gmra.mxu0 %v1273
        %v1833 = vpop.f32.mrf.mxu0
        %v1834 = vadd.f32 %v1352, %v1833
        %v1835 = vpop.f32.mrf.mxu0
        %v1836 = vadd.f32 %v1356, %v1835
        %v1837 = vpop.f32.mrf.mxu0
        %v1838 = vadd.f32 %v1352, %v1837
        %v1839 = vpop.f32.mrf.mxu0
        %v1840 = vadd.f32 %v1356, %v1839
        %1841 = vmatprep.mubr.bf16.mxu0 %v1276
        %1842 = vmatmul.mubr.bf16.gmra.mxu0 %v1275
        %v1843 = vpop.f32.mrf.mxu0
        %v1844 = vadd.f32 %v1352, %v1843
        %v1845 = vpop.f32.mrf.mxu0
        %v1846 = vadd.f32 %v1356, %v1845
        %v1847 = vpop.f32.mrf.mxu0
        %v1848 = vadd.f32 %v1352, %v1847
        %v1849 = vpop.f32.mrf.mxu0
        %v1850 = vadd.f32 %v1356, %v1849
        %1851 = vmatprep.mubr.bf16.mxu0 %v1278
        %1852 = vmatmul.mubr.bf16.gmra.mxu0 %v1277
        %v1853 = vpop.f32.mrf.mxu0
        %v1854 = vadd.f32 %v1352, %v1853
        %v1855 = vpop.f32.mrf.mxu0
        %v1856 = vadd.f32 %v1356, %v1855
        %v1857 = vpop.f32.mrf.mxu0
        %v1858 = vadd.f32 %v1352, %v1857
        %v1859 = vpop.f32.mrf.mxu0
        %v1860 = vadd.f32 %v1356, %v1859
        %1861 = vmatprep.mubr.bf16.mxu0 %v1280
        %1862 = vmatmul.mubr.bf16.gmra.mxu0 %v1279
        %v1863 = vpop.f32.mrf.mxu0
        %v1864 = vadd.f32 %v1352, %v1863
        %v1865 = vpop.f32.mrf.mxu0
        %v1866 = vadd.f32 %v1356, %v1865
        %v1867 = vpop.f32.mrf.mxu0
        %v1868 = vadd.f32 %v1352, %v1867
        %v1869 = vpop.f32.mrf.mxu0
        %v1870 = vadd.f32 %v1356, %v1869
        %1871 = vmatprep.mubr.bf16.mxu0 %v1282
        %1872 = vmatmul.mubr.bf16.gmra.mxu0 %v1281
        %v1873 = vpop.f32.mrf.mxu0
        %v1874 = vadd.f32 %v1352, %v1873
        %v1875 = vpop.f32.mrf.mxu0
        %v1876 = vadd.f32 %v1356, %v1875
        %v1877 = vpop.f32.mrf.mxu0
        %v1878 = vadd.f32 %v1352, %v1877
        %v1879 = vpop.f32.mrf.mxu0
        %v1880 = vadd.f32 %v1356, %v1879
        %1881 = vdwg.mxu0
        %1882 = vmatprep.subr.bf16.mxu0 %v1592
        %1883 = vmatpush1.bf16.msra.mxu0 %v1591
        %1884 = vmatprep.subr.bf16.mxu0 %v1588
        %1885 = vmatpush1.bf16.msra.mxu0 %v1587
        %1886 = vmatprep.subr.bf16.mxu0 %v1584
        %1887 = vmatpush1.bf16.msra.mxu0 %v1583
        %1888 = vmatprep.subr.bf16.mxu0 %v1580
        %1889 = vmatpush1.bf16.msra.mxu0 %v1579
        %1890 = vmatprep.subr.bf16.mxu0 %v1576
        %1891 = vmatpush1.bf16.msra.mxu0 %v1575
        %1892 = vmatprep.subr.bf16.mxu0 %v1572
        %1893 = vmatpush1.bf16.msra.mxu0 %v1571
        %1894 = vmatprep.subr.bf16.mxu0 %v1568
        %1895 = vmatpush1.bf16.msra.mxu0 %v1567
        %1896 = vmatprep.subr.bf16.mxu0 %v1564
        %1897 = vmatpush1.bf16.msra.mxu0 %v1563
        %1898 = vmatprep.subr.bf16.mxu0 %v1624
        %1899 = vmatpush2.bf16.msra.mxu0 %v1623
        %1900 = vmatprep.subr.bf16.mxu0 %v1620
        %1901 = vmatpush2.bf16.msra.mxu0 %v1619
        %1902 = vmatprep.subr.bf16.mxu0 %v1616
        %1903 = vmatpush2.bf16.msra.mxu0 %v1615
        %1904 = vmatprep.subr.bf16.mxu0 %v1612
        %1905 = vmatpush2.bf16.msra.mxu0 %v1611
        %1906 = vmatprep.subr.bf16.mxu0 %v1608
        %1907 = vmatpush2.bf16.msra.mxu0 %v1607
        %1908 = vmatprep.subr.bf16.mxu0 %v1604
        %1909 = vmatpush2.bf16.msra.mxu0 %v1603
        %1910 = vmatprep.subr.bf16.mxu0 %v1600
        %1911 = vmatpush2.bf16.msra.mxu0 %v1599
        %1912 = vmatprep.subr.bf16.mxu0 %v1596
        %1913 = vmatpush2.bf16.msra.mxu0 %v1595
        %1914 = vmatprep.mubr.bf16.mxu0 %v1252
        %1915 = vmatmul.mubr.bf16.gmra.mxu0 %v1251
        %v1916 = vpop.f32.mrf.mxu0
        %v1917 = vadd.f32 %v1360, %v1916
        %v1918 = vpop.f32.mrf.mxu0
        %v1919 = vadd.f32 %v1364, %v1918
        %v1920 = vpop.f32.mrf.mxu0
        %v1921 = vadd.f32 %v1360, %v1920
        %v1922 = vpop.f32.mrf.mxu0
        %v1923 = vadd.f32 %v1364, %v1922
        %1924 = vmatprep.mubr.bf16.mxu0 %v1254
        %1925 = vmatmul.mubr.bf16.gmra.mxu0 %v1253
        %v1926 = vpop.f32.mrf.mxu0
        %v1927 = vadd.f32 %v1360, %v1926
        %v1928 = vpop.f32.mrf.mxu0
        %v1929 = vadd.f32 %v1364, %v1928
        %v1930 = vpop.f32.mrf.mxu0
        %v1931 = vadd.f32 %v1360, %v1930
        %v1932 = vpop.f32.mrf.mxu0
        %v1933 = vadd.f32 %v1364, %v1932
        %1934 = vmatprep.mubr.bf16.mxu0 %v1256
        %1935 = vmatmul.mubr.bf16.gmra.mxu0 %v1255
        %v1936 = vpop.f32.mrf.mxu0
        %v1937 = vadd.f32 %v1360, %v1936
        %v1938 = vpop.f32.mrf.mxu0
        %v1939 = vadd.f32 %v1364, %v1938
        %v1940 = vpop.f32.mrf.mxu0
        %v1941 = vadd.f32 %v1360, %v1940
        %v1942 = vpop.f32.mrf.mxu0
        %v1943 = vadd.f32 %v1364, %v1942
        %1944 = vmatprep.mubr.bf16.mxu0 %v1258
        %1945 = vmatmul.mubr.bf16.gmra.mxu0 %v1257
        %v1946 = vpop.f32.mrf.mxu0
        %v1947 = vadd.f32 %v1360, %v1946
        %v1948 = vpop.f32.mrf.mxu0
        %v1949 = vadd.f32 %v1364, %v1948
        %v1950 = vpop.f32.mrf.mxu0
        %v1951 = vadd.f32 %v1360, %v1950
        %v1952 = vpop.f32.mrf.mxu0
        %v1953 = vadd.f32 %v1364, %v1952
        %1954 = vmatprep.mubr.bf16.mxu0 %v1260
        %1955 = vmatmul.mubr.bf16.gmra.mxu0 %v1259
        %v1956 = vpop.f32.mrf.mxu0
        %v1957 = vadd.f32 %v1360, %v1956
        %v1958 = vpop.f32.mrf.mxu0
        %v1959 = vadd.f32 %v1364, %v1958
        %v1960 = vpop.f32.mrf.mxu0
        %v1961 = vadd.f32 %v1360, %v1960
        %v1962 = vpop.f32.mrf.mxu0
        %v1963 = vadd.f32 %v1364, %v1962
        %1964 = vmatprep.mubr.bf16.mxu0 %v1262
        %1965 = vmatmul.mubr.bf16.gmra.mxu0 %v1261
        %v1966 = vpop.f32.mrf.mxu0
        %v1967 = vadd.f32 %v1360, %v1966
        %v1968 = vpop.f32.mrf.mxu0
        %v1969 = vadd.f32 %v1364, %v1968
        %v1970 = vpop.f32.mrf.mxu0
        %v1971 = vadd.f32 %v1360, %v1970
        %v1972 = vpop.f32.mrf.mxu0
        %v1973 = vadd.f32 %v1364, %v1972
        %1974 = vmatprep.mubr.bf16.mxu0 %v1264
        %1975 = vmatmul.mubr.bf16.gmra.mxu0 %v1263
        %v1976 = vpop.f32.mrf.mxu0
        %v1977 = vadd.f32 %v1360, %v1976
        %v1978 = vpop.f32.mrf.mxu0
        %v1979 = vadd.f32 %v1364, %v1978
        %v1980 = vpop.f32.mrf.mxu0
        %v1981 = vadd.f32 %v1360, %v1980
        %v1982 = vpop.f32.mrf.mxu0
        %v1983 = vadd.f32 %v1364, %v1982
        %1984 = vmatprep.mubr.bf16.mxu0 %v1266
        %1985 = vmatmul.mubr.bf16.gmra.mxu0 %v1265
        %v1986 = vpop.f32.mrf.mxu0
        %v1987 = vadd.f32 %v1360, %v1986
        %v1988 = vpop.f32.mrf.mxu0
        %v1989 = vadd.f32 %v1364, %v1988
        %v1990 = vpop.f32.mrf.mxu0
        %v1991 = vadd.f32 %v1360, %v1990
        %v1992 = vpop.f32.mrf.mxu0
        %v1993 = vadd.f32 %v1364, %v1992
        %1994 = vmatprep.mubr.bf16.mxu0 %v1268
        %1995 = vmatmul.mubr.bf16.gmra.mxu0 %v1267
        %v1996 = vpop.f32.mrf.mxu0
        %v1997 = vadd.f32 %v1360, %v1996
        %v1998 = vpop.f32.mrf.mxu0
        %v1999 = vadd.f32 %v1364, %v1998
        %v2000 = vpop.f32.mrf.mxu0
        %v2001 = vadd.f32 %v1360, %v2000
        %v2002 = vpop.f32.mrf.mxu0
        %v2003 = vadd.f32 %v1364, %v2002
        %2004 = vmatprep.mubr.bf16.mxu0 %v1270
        %2005 = vmatmul.mubr.bf16.gmra.mxu0 %v1269
        %v2006 = vpop.f32.mrf.mxu0
        %v2007 = vadd.f32 %v1360, %v2006
        %v2008 = vpop.f32.mrf.mxu0
        %v2009 = vadd.f32 %v1364, %v2008
        %v2010 = vpop.f32.mrf.mxu0
        %v2011 = vadd.f32 %v1360, %v2010
        %v2012 = vpop.f32.mrf.mxu0
        %v2013 = vadd.f32 %v1364, %v2012
        %2014 = vmatprep.mubr.bf16.mxu0 %v1272
        %2015 = vmatmul.mubr.bf16.gmra.mxu0 %v1271
        %v2016 = vpop.f32.mrf.mxu0
        %v2017 = vadd.f32 %v1360, %v2016
        %v2018 = vpop.f32.mrf.mxu0
        %v2019 = vadd.f32 %v1364, %v2018
        %v2020 = vpop.f32.mrf.mxu0
        %v2021 = vadd.f32 %v1360, %v2020
        %v2022 = vpop.f32.mrf.mxu0
        %v2023 = vadd.f32 %v1364, %v2022
        %2024 = vmatprep.mubr.bf16.mxu0 %v1274
        %2025 = vmatmul.mubr.bf16.gmra.mxu0 %v1273
        %v2026 = vpop.f32.mrf.mxu0
        %v2027 = vadd.f32 %v1360, %v2026
        %v2028 = vpop.f32.mrf.mxu0
        %v2029 = vadd.f32 %v1364, %v2028
        %v2030 = vpop.f32.mrf.mxu0
        %v2031 = vadd.f32 %v1360, %v2030
        %v2032 = vpop.f32.mrf.mxu0
        %v2033 = vadd.f32 %v1364, %v2032
        %2034 = vmatprep.mubr.bf16.mxu0 %v1276
        %2035 = vmatmul.mubr.bf16.gmra.mxu0 %v1275
        %v2036 = vpop.f32.mrf.mxu0
        %v2037 = vadd.f32 %v1360, %v2036
        %v2038 = vpop.f32.mrf.mxu0
        %v2039 = vadd.f32 %v1364, %v2038
        %v2040 = vpop.f32.mrf.mxu0
        %v2041 = vadd.f32 %v1360, %v2040
        %v2042 = vpop.f32.mrf.mxu0
        %v2043 = vadd.f32 %v1364, %v2042
        %2044 = vmatprep.mubr.bf16.mxu0 %v1278
        %2045 = vmatmul.mubr.bf16.gmra.mxu0 %v1277
        %v2046 = vpop.f32.mrf.mxu0
        %v2047 = vadd.f32 %v1360, %v2046
        %v2048 = vpop.f32.mrf.mxu0
        %v2049 = vadd.f32 %v1364, %v2048
        %v2050 = vpop.f32.mrf.mxu0
        %v2051 = vadd.f32 %v1360, %v2050
        %v2052 = vpop.f32.mrf.mxu0
        %v2053 = vadd.f32 %v1364, %v2052
        %2054 = vmatprep.mubr.bf16.mxu0 %v1280
        %2055 = vmatmul.mubr.bf16.gmra.mxu0 %v1279
        %v2056 = vpop.f32.mrf.mxu0
        %v2057 = vadd.f32 %v1360, %v2056
        %v2058 = vpop.f32.mrf.mxu0
        %v2059 = vadd.f32 %v1364, %v2058
        %v2060 = vpop.f32.mrf.mxu0
        %v2061 = vadd.f32 %v1360, %v2060
        %v2062 = vpop.f32.mrf.mxu0
        %v2063 = vadd.f32 %v1364, %v2062
        %2064 = vmatprep.mubr.bf16.mxu0 %v1282
        %2065 = vmatmul.mubr.bf16.gmra.mxu0 %v1281
        %v2066 = vpop.f32.mrf.mxu0
        %v2067 = vadd.f32 %v1360, %v2066
        %v2068 = vpop.f32.mrf.mxu0
        %v2069 = vadd.f32 %v1364, %v2068
        %v2070 = vpop.f32.mrf.mxu0
        %v2071 = vadd.f32 %v1360, %v2070
        %v2072 = vpop.f32.mrf.mxu0
        %v2073 = vadd.f32 %v1364, %v2072
        %2074 = vdwg.mxu0
        %vm2075 = vcmp.gt.f32.partialorder %v1724, 0.0
        %vm2076 = vcmp.gt.f32.partialorder %v1726, 0.0
        %vm2077 = vcmp.gt.f32.partialorder %v1917, 0.0
        %vm2078 = vcmp.gt.f32.partialorder %v1919, 0.0
        %vm2079 = vcmp.gt.f32.partialorder %v1728, 0.0
        %vm2080 = vcmp.gt.f32.partialorder %v1730, 0.0
        %vm2081 = vcmp.gt.f32.partialorder %v1921, 0.0
        %vm2082 = vcmp.gt.f32.partialorder %v1923, 0.0
        %vm2083 = vcmp.gt.f32.partialorder %v1734, 0.0
        %vm2084 = vcmp.gt.f32.partialorder %v1736, 0.0
        %vm2085 = vcmp.gt.f32.partialorder %v1927, 0.0
        %vm2086 = vcmp.gt.f32.partialorder %v1929, 0.0
        %vm2087 = vcmp.gt.f32.partialorder %v1738, 0.0
        %vm2088 = vcmp.gt.f32.partialorder %v1740, 0.0
        %vm2089 = vcmp.gt.f32.partialorder %v1931, 0.0
        %vm2090 = vcmp.gt.f32.partialorder %v1933, 0.0
        %vm2091 = vcmp.gt.f32.partialorder %v1744, 0.0
        %vm2092 = vcmp.gt.f32.partialorder %v1746, 0.0
        %vm2093 = vcmp.gt.f32.partialorder %v1937, 0.0
        %vm2094 = vcmp.gt.f32.partialorder %v1939, 0.0
        %vm2095 = vcmp.gt.f32.partialorder %v1748, 0.0
        %vm2096 = vcmp.gt.f32.partialorder %v1750, 0.0
        %vm2097 = vcmp.gt.f32.partialorder %v1941, 0.0
        %vm2098 = vcmp.gt.f32.partialorder %v1943, 0.0
        %vm2099 = vcmp.gt.f32.partialorder %v1754, 0.0
        %vm2100 = vcmp.gt.f32.partialorder %v1756, 0.0
        %vm2101 = vcmp.gt.f32.partialorder %v1947, 0.0
        %vm2102 = vcmp.gt.f32.partialorder %v1949, 0.0
        %vm2103 = vcmp.gt.f32.partialorder %v1758, 0.0
        %vm2104 = vcmp.gt.f32.partialorder %v1760, 0.0
        %vm2105 = vcmp.gt.f32.partialorder %v1951, 0.0
        %vm2106 = vcmp.gt.f32.partialorder %v1953, 0.0
        %vm2107 = vcmp.gt.f32.partialorder %v1764, 0.0
        %vm2108 = vcmp.gt.f32.partialorder %v1766, 0.0
        %vm2109 = vcmp.gt.f32.partialorder %v1957, 0.0
        %vm2110 = vcmp.gt.f32.partialorder %v1959, 0.0
        %vm2111 = vcmp.gt.f32.partialorder %v1768, 0.0
        %vm2112 = vcmp.gt.f32.partialorder %v1770, 0.0
        %vm2113 = vcmp.gt.f32.partialorder %v1961, 0.0
        %vm2114 = vcmp.gt.f32.partialorder %v1963, 0.0
        %vm2115 = vcmp.gt.f32.partialorder %v1774, 0.0
        %vm2116 = vcmp.gt.f32.partialorder %v1776, 0.0
        %vm2117 = vcmp.gt.f32.partialorder %v1967, 0.0
        %vm2118 = vcmp.gt.f32.partialorder %v1969, 0.0
        %vm2119 = vcmp.gt.f32.partialorder %v1778, 0.0
        %vm2120 = vcmp.gt.f32.partialorder %v1780, 0.0
        %vm2121 = vcmp.gt.f32.partialorder %v1971, 0.0
        %vm2122 = vcmp.gt.f32.partialorder %v1973, 0.0
        %vm2123 = vcmp.gt.f32.partialorder %v1784, 0.0
        %vm2124 = vcmp.gt.f32.partialorder %v1786, 0.0
        %vm2125 = vcmp.gt.f32.partialorder %v1977, 0.0
        %vm2126 = vcmp.gt.f32.partialorder %v1979, 0.0
        %vm2127 = vcmp.gt.f32.partialorder %v1788, 0.0
        %vm2128 = vcmp.gt.f32.partialorder %v1790, 0.0
        %vm2129 = vcmp.gt.f32.partialorder %v1981, 0.0
        %vm2130 = vcmp.gt.f32.partialorder %v1983, 0.0
        %vm2131 = vcmp.gt.f32.partialorder %v1794, 0.0
        %vm2132 = vcmp.gt.f32.partialorder %v1796, 0.0
        %vm2133 = vcmp.gt.f32.partialorder %v1987, 0.0
        %vm2134 = vcmp.gt.f32.partialorder %v1989, 0.0
        %vm2135 = vcmp.gt.f32.partialorder %v1798, 0.0
        %vm2136 = vcmp.gt.f32.partialorder %v1800, 0.0
        %vm2137 = vcmp.gt.f32.partialorder %v1991, 0.0
        %vm2138 = vcmp.gt.f32.partialorder %v1993, 0.0
        %vm2139 = vcmp.gt.f32.partialorder %v1804, 0.0
        %vm2140 = vcmp.gt.f32.partialorder %v1806, 0.0
        %vm2141 = vcmp.gt.f32.partialorder %v1997, 0.0
        %vm2142 = vcmp.gt.f32.partialorder %v1999, 0.0
        %vm2143 = vcmp.gt.f32.partialorder %v1808, 0.0
        %vm2144 = vcmp.gt.f32.partialorder %v1810, 0.0
        %vm2145 = vcmp.gt.f32.partialorder %v2001, 0.0
        %vm2146 = vcmp.gt.f32.partialorder %v2003, 0.0
        %vm2147 = vcmp.gt.f32.partialorder %v1814, 0.0
        %vm2148 = vcmp.gt.f32.partialorder %v1816, 0.0
        %vm2149 = vcmp.gt.f32.partialorder %v2007, 0.0
        %vm2150 = vcmp.gt.f32.partialorder %v2009, 0.0
        %vm2151 = vcmp.gt.f32.partialorder %v1818, 0.0
        %vm2152 = vcmp.gt.f32.partialorder %v1820, 0.0
        %vm2153 = vcmp.gt.f32.partialorder %v2011, 0.0
        %vm2154 = vcmp.gt.f32.partialorder %v2013, 0.0
        %vm2155 = vcmp.gt.f32.partialorder %v1824, 0.0
        %vm2156 = vcmp.gt.f32.partialorder %v1826, 0.0
        %vm2157 = vcmp.gt.f32.partialorder %v2017, 0.0
        %vm2158 = vcmp.gt.f32.partialorder %v2019, 0.0
        %vm2159 = vcmp.gt.f32.partialorder %v1828, 0.0
        %vm2160 = vcmp.gt.f32.partialorder %v1830, 0.0
        %vm2161 = vcmp.gt.f32.partialorder %v2021, 0.0
        %vm2162 = vcmp.gt.f32.partialorder %v2023, 0.0
        %vm2163 = vcmp.gt.f32.partialorder %v1834, 0.0
        %vm2164 = vcmp.gt.f32.partialorder %v1836, 0.0
        %vm2165 = vcmp.gt.f32.partialorder %v2027, 0.0
        %vm2166 = vcmp.gt.f32.partialorder %v2029, 0.0
        %vm2167 = vcmp.gt.f32.partialorder %v1838, 0.0
        %vm2168 = vcmp.gt.f32.partialorder %v1840, 0.0
        %vm2169 = vcmp.gt.f32.partialorder %v2031, 0.0
        %vm2170 = vcmp.gt.f32.partialorder %v2033, 0.0
        %vm2171 = vcmp.gt.f32.partialorder %v1844, 0.0
        %vm2172 = vcmp.gt.f32.partialorder %v1846, 0.0
        %vm2173 = vcmp.gt.f32.partialorder %v2037, 0.0
        %vm2174 = vcmp.gt.f32.partialorder %v2039, 0.0
        %vm2175 = vcmp.gt.f32.partialorder %v1848, 0.0
        %vm2176 = vcmp.gt.f32.partialorder %v1850, 0.0
        %vm2177 = vcmp.gt.f32.partialorder %v2041, 0.0
        %vm2178 = vcmp.gt.f32.partialorder %v2043, 0.0
        %vm2179 = vcmp.gt.f32.partialorder %v1854, 0.0
        %vm2180 = vcmp.gt.f32.partialorder %v1856, 0.0
        %vm2181 = vcmp.gt.f32.partialorder %v2047, 0.0
        %vm2182 = vcmp.gt.f32.partialorder %v2049, 0.0
        %vm2183 = vcmp.gt.f32.partialorder %v1858, 0.0
        %vm2184 = vcmp.gt.f32.partialorder %v1860, 0.0
        %vm2185 = vcmp.gt.f32.partialorder %v2051, 0.0
        %vm2186 = vcmp.gt.f32.partialorder %v2053, 0.0
        %vm2187 = vcmp.gt.f32.partialorder %v1864, 0.0
        %vm2188 = vcmp.gt.f32.partialorder %v1866, 0.0
        %vm2189 = vcmp.gt.f32.partialorder %v2057, 0.0
        %vm2190 = vcmp.gt.f32.partialorder %v2059, 0.0
        %vm2191 = vcmp.gt.f32.partialorder %v1868, 0.0
        %vm2192 = vcmp.gt.f32.partialorder %v1870, 0.0
        %vm2193 = vcmp.gt.f32.partialorder %v2061, 0.0
        %vm2194 = vcmp.gt.f32.partialorder %v2063, 0.0
        %vm2195 = vcmp.gt.f32.partialorder %v1874, 0.0
        %vm2196 = vcmp.gt.f32.partialorder %v1876, 0.0
        %vm2197 = vcmp.gt.f32.partialorder %v2067, 0.0
        %vm2198 = vcmp.gt.f32.partialorder %v2069, 0.0
        %vm2199 = vcmp.gt.f32.partialorder %v1878, 0.0
        %vm2200 = vcmp.gt.f32.partialorder %v1880, 0.0
        %vm2201 = vcmp.gt.f32.partialorder %v2071, 0.0
        %vm2202 = vcmp.gt.f32.partialorder %v2073, 0.0
        %v2203 = vmul.f32 %v1724, 0.2
        %v2204 = vmul.f32 %v1726, 0.2
        %v2205 = vmul.f32 %v1917, 0.2
        %v2206 = vmul.f32 %v1919, 0.2
        %v2207 = vmul.f32 %v1728, 0.2
        %v2208 = vmul.f32 %v1730, 0.2
        %v2209 = vmul.f32 %v1921, 0.2
        %v2210 = vmul.f32 %v1923, 0.2
        %v2211 = vmul.f32 %v1734, 0.2
        %v2212 = vmul.f32 %v1736, 0.2
        %v2213 = vmul.f32 %v1927, 0.2
        %v2214 = vmul.f32 %v1929, 0.2
        %v2215 = vmul.f32 %v1738, 0.2
        %v2216 = vmul.f32 %v1740, 0.2
        %v2217 = vmul.f32 %v1931, 0.2
        %v2218 = vmul.f32 %v1933, 0.2
        %v2219 = vmul.f32 %v1744, 0.2
        %v2220 = vmul.f32 %v1746, 0.2
        %v2221 = vmul.f32 %v1937, 0.2
        %v2222 = vmul.f32 %v1939, 0.2
        %v2223 = vmul.f32 %v1748, 0.2
        %v2224 = vmul.f32 %v1750, 0.2
        %v2225 = vmul.f32 %v1941, 0.2
        %v2226 = vmul.f32 %v1943, 0.2
        %v2227 = vmul.f32 %v1754, 0.2
        %v2228 = vmul.f32 %v1756, 0.2
        %v2229 = vmul.f32 %v1947, 0.2
        %v2230 = vmul.f32 %v1949, 0.2
        %v2231 = vmul.f32 %v1758, 0.2
        %v2232 = vmul.f32 %v1760, 0.2
        %v2233 = vmul.f32 %v1951, 0.2
        %v2234 = vmul.f32 %v1953, 0.2
        %v2235 = vmul.f32 %v1764, 0.2
        %v2236 = vmul.f32 %v1766, 0.2
        %v2237 = vmul.f32 %v1957, 0.2
        %v2238 = vmul.f32 %v1959, 0.2
        %v2239 = vmul.f32 %v1768, 0.2
        %v2240 = vmul.f32 %v1770, 0.2
        %v2241 = vmul.f32 %v1961, 0.2
        %v2242 = vmul.f32 %v1963, 0.2
        %v2243 = vmul.f32 %v1774, 0.2
        %v2244 = vmul.f32 %v1776, 0.2
        %v2245 = vmul.f32 %v1967, 0.2
        %v2246 = vmul.f32 %v1969, 0.2
        %v2247 = vmul.f32 %v1778, 0.2
        %v2248 = vmul.f32 %v1780, 0.2
        %v2249 = vmul.f32 %v1971, 0.2
        %v2250 = vmul.f32 %v1973, 0.2
        %v2251 = vmul.f32 %v1784, 0.2
        %v2252 = vmul.f32 %v1786, 0.2
        %v2253 = vmul.f32 %v1977, 0.2
        %v2254 = vmul.f32 %v1979, 0.2
        %v2255 = vmul.f32 %v1788, 0.2
        %v2256 = vmul.f32 %v1790, 0.2
        %v2257 = vmul.f32 %v1981, 0.2
        %v2258 = vmul.f32 %v1983, 0.2
        %v2259 = vmul.f32 %v1794, 0.2
        %v2260 = vmul.f32 %v1796, 0.2
        %v2261 = vmul.f32 %v1987, 0.2
        %v2262 = vmul.f32 %v1989, 0.2
        %v2263 = vmul.f32 %v1798, 0.2
        %v2264 = vmul.f32 %v1800, 0.2
        %v2265 = vmul.f32 %v1991, 0.2
        %v2266 = vmul.f32 %v1993, 0.2
        %v2267 = vmul.f32 %v1804, 0.2
        %v2268 = vmul.f32 %v1806, 0.2
        %v2269 = vmul.f32 %v1997, 0.2
        %v2270 = vmul.f32 %v1999, 0.2
        %v2271 = vmul.f32 %v1808, 0.2
        %v2272 = vmul.f32 %v1810, 0.2
        %v2273 = vmul.f32 %v2001, 0.2
        %v2274 = vmul.f32 %v2003, 0.2
        %v2275 = vmul.f32 %v1814, 0.2
        %v2276 = vmul.f32 %v1816, 0.2
        %v2277 = vmul.f32 %v2007, 0.2
        %v2278 = vmul.f32 %v2009, 0.2
        %v2279 = vmul.f32 %v1818, 0.2
        %v2280 = vmul.f32 %v1820, 0.2
        %v2281 = vmul.f32 %v2011, 0.2
        %v2282 = vmul.f32 %v2013, 0.2
        %v2283 = vmul.f32 %v1824, 0.2
        %v2284 = vmul.f32 %v1826, 0.2
        %v2285 = vmul.f32 %v2017, 0.2
        %v2286 = vmul.f32 %v2019, 0.2
        %v2287 = vmul.f32 %v1828, 0.2
        %v2288 = vmul.f32 %v1830, 0.2
        %v2289 = vmul.f32 %v2021, 0.2
        %v2290 = vmul.f32 %v2023, 0.2
        %v2291 = vmul.f32 %v1834, 0.2
        %v2292 = vmul.f32 %v1836, 0.2
        %v2293 = vmul.f32 %v2027, 0.2
        %v2294 = vmul.f32 %v2029, 0.2
        %v2295 = vmul.f32 %v1838, 0.2
        %v2296 = vmul.f32 %v1840, 0.2
        %v2297 = vmul.f32 %v2031, 0.2
        %v2298 = vmul.f32 %v2033, 0.2
        %v2299 = vmul.f32 %v1844, 0.2
        %v2300 = vmul.f32 %v1846, 0.2
        %v2301 = vmul.f32 %v2037, 0.2
        %v2302 = vmul.f32 %v2039, 0.2
        %v2303 = vmul.f32 %v1848, 0.2
        %v2304 = vmul.f32 %v1850, 0.2
        %v2305 = vmul.f32 %v2041, 0.2
        %v2306 = vmul.f32 %v2043, 0.2
        %v2307 = vmul.f32 %v1854, 0.2
        %v2308 = vmul.f32 %v1856, 0.2
        %v2309 = vmul.f32 %v2047, 0.2
        %v2310 = vmul.f32 %v2049, 0.2
        %v2311 = vmul.f32 %v1858, 0.2
        %v2312 = vmul.f32 %v1860, 0.2
        %v2313 = vmul.f32 %v2051, 0.2
        %v2314 = vmul.f32 %v2053, 0.2
        %v2315 = vmul.f32 %v1864, 0.2
        %v2316 = vmul.f32 %v1866, 0.2
        %v2317 = vmul.f32 %v2057, 0.2
        %v2318 = vmul.f32 %v2059, 0.2
        %v2319 = vmul.f32 %v1868, 0.2
        %v2320 = vmul.f32 %v1870, 0.2
        %v2321 = vmul.f32 %v2061, 0.2
        %v2322 = vmul.f32 %v2063, 0.2
        %v2323 = vmul.f32 %v1874, 0.2
        %v2324 = vmul.f32 %v1876, 0.2
        %v2325 = vmul.f32 %v2067, 0.2
        %v2326 = vmul.f32 %v2069, 0.2
        %v2327 = vmul.f32 %v1878, 0.2
        %v2328 = vmul.f32 %v1880, 0.2
        %v2329 = vmul.f32 %v2071, 0.2
        %v2330 = vmul.f32 %v2073, 0.2
        %v2331 = vsel %vm2075, %v1724, %v2203
        %v2332 = vsel %vm2076, %v1726, %v2204
        %v2333 = vsel %vm2077, %v1917, %v2205
        %v2334 = vsel %vm2078, %v1919, %v2206
        %v2335 = vsel %vm2079, %v1728, %v2207
        %v2336 = vsel %vm2080, %v1730, %v2208
        %v2337 = vsel %vm2081, %v1921, %v2209
        %v2338 = vsel %vm2082, %v1923, %v2210
        %v2339 = vsel %vm2083, %v1734, %v2211
        %v2340 = vsel %vm2084, %v1736, %v2212
        %v2341 = vsel %vm2085, %v1927, %v2213
        %v2342 = vsel %vm2086, %v1929, %v2214
        %v2343 = vsel %vm2087, %v1738, %v2215
        %v2344 = vsel %vm2088, %v1740, %v2216
        %v2345 = vsel %vm2089, %v1931, %v2217
        %v2346 = vsel %vm2090, %v1933, %v2218
        %v2347 = vsel %vm2091, %v1744, %v2219
        %v2348 = vsel %vm2092, %v1746, %v2220
        %v2349 = vsel %vm2093, %v1937, %v2221
        %v2350 = vsel %vm2094, %v1939, %v2222
        %v2351 = vsel %vm2095, %v1748, %v2223
        %v2352 = vsel %vm2096, %v1750, %v2224
        %v2353 = vsel %vm2097, %v1941, %v2225
        %v2354 = vsel %vm2098, %v1943, %v2226
        %v2355 = vsel %vm2099, %v1754, %v2227
        %v2356 = vsel %vm2100, %v1756, %v2228
        %v2357 = vsel %vm2101, %v1947, %v2229
        %v2358 = vsel %vm2102, %v1949, %v2230
        %v2359 = vsel %vm2103, %v1758, %v2231
        %v2360 = vsel %vm2104, %v1760, %v2232
        %v2361 = vsel %vm2105, %v1951, %v2233
        %v2362 = vsel %vm2106, %v1953, %v2234
        %v2363 = vsel %vm2107, %v1764, %v2235
        %v2364 = vsel %vm2108, %v1766, %v2236
        %v2365 = vsel %vm2109, %v1957, %v2237
        %v2366 = vsel %vm2110, %v1959, %v2238
        %v2367 = vsel %vm2111, %v1768, %v2239
        %v2368 = vsel %vm2112, %v1770, %v2240
        %v2369 = vsel %vm2113, %v1961, %v2241
        %v2370 = vsel %vm2114, %v1963, %v2242
        %v2371 = vsel %vm2115, %v1774, %v2243
        %v2372 = vsel %vm2116, %v1776, %v2244
        %v2373 = vsel %vm2117, %v1967, %v2245
        %v2374 = vsel %vm2118, %v1969, %v2246
        %v2375 = vsel %vm2119, %v1778, %v2247
        %v2376 = vsel %vm2120, %v1780, %v2248
        %v2377 = vsel %vm2121, %v1971, %v2249
        %v2378 = vsel %vm2122, %v1973, %v2250
        %v2379 = vsel %vm2123, %v1784, %v2251
        %v2380 = vsel %vm2124, %v1786, %v2252
        %v2381 = vsel %vm2125, %v1977, %v2253
        %v2382 = vsel %vm2126, %v1979, %v2254
        %v2383 = vsel %vm2127, %v1788, %v2255
        %v2384 = vsel %vm2128, %v1790, %v2256
        %v2385 = vsel %vm2129, %v1981, %v2257
        %v2386 = vsel %vm2130, %v1983, %v2258
        %v2387 = vsel %vm2131, %v1794, %v2259
        %v2388 = vsel %vm2132, %v1796, %v2260
        %v2389 = vsel %vm2133, %v1987, %v2261
        %v2390 = vsel %vm2134, %v1989, %v2262
        %v2391 = vsel %vm2135, %v1798, %v2263
        %v2392 = vsel %vm2136, %v1800, %v2264
        %v2393 = vsel %vm2137, %v1991, %v2265
        %v2394 = vsel %vm2138, %v1993, %v2266
        %v2395 = vsel %vm2139, %v1804, %v2267
        %v2396 = vsel %vm2140, %v1806, %v2268
        %v2397 = vsel %vm2141, %v1997, %v2269
        %v2398 = vsel %vm2142, %v1999, %v2270
        %v2399 = vsel %vm2143, %v1808, %v2271
        %v2400 = vsel %vm2144, %v1810, %v2272
        %v2401 = vsel %vm2145, %v2001, %v2273
        %v2402 = vsel %vm2146, %v2003, %v2274
        %v2403 = vsel %vm2147, %v1814, %v2275
        %v2404 = vsel %vm2148, %v1816, %v2276
        %v2405 = vsel %vm2149, %v2007, %v2277
        %v2406 = vsel %vm2150, %v2009, %v2278
        %v2407 = vsel %vm2151, %v1818, %v2279
        %v2408 = vsel %vm2152, %v1820, %v2280
        %v2409 = vsel %vm2153, %v2011, %v2281
        %v2410 = vsel %vm2154, %v2013, %v2282
        %v2411 = vsel %vm2155, %v1824, %v2283
        %v2412 = vsel %vm2156, %v1826, %v2284
        %v2413 = vsel %vm2157, %v2017, %v2285
        %v2414 = vsel %vm2158, %v2019, %v2286
        %v2415 = vsel %vm2159, %v1828, %v2287
        %v2416 = vsel %vm2160, %v1830, %v2288
        %v2417 = vsel %vm2161, %v2021, %v2289
        %v2418 = vsel %vm2162, %v2023, %v2290
        %v2419 = vsel %vm2163, %v1834, %v2291
        %v2420 = vsel %vm2164, %v1836, %v2292
        %v2421 = vsel %vm2165, %v2027, %v2293
        %v2422 = vsel %vm2166, %v2029, %v2294
        %v2423 = vsel %vm2167, %v1838, %v2295
        %v2424 = vsel %vm2168, %v1840, %v2296
        %v2425 = vsel %vm2169, %v2031, %v2297
        %v2426 = vsel %vm2170, %v2033, %v2298
        %v2427 = vsel %vm2171, %v1844, %v2299
        %v2428 = vsel %vm2172, %v1846, %v2300
        %v2429 = vsel %vm2173, %v2037, %v2301
        %v2430 = vsel %vm2174, %v2039, %v2302
        %v2431 = vsel %vm2175, %v1848, %v2303
        %v2432 = vsel %vm2176, %v1850, %v2304
        %v2433 = vsel %vm2177, %v2041, %v2305
        %v2434 = vsel %vm2178, %v2043, %v2306
        %v2435 = vsel %vm2179, %v1854, %v2307
        %v2436 = vsel %vm2180, %v1856, %v2308
        %v2437 = vsel %vm2181, %v2047, %v2309
        %v2438 = vsel %vm2182, %v2049, %v2310
        %v2439 = vsel %vm2183, %v1858, %v2311
        %v2440 = vsel %vm2184, %v1860, %v2312
        %v2441 = vsel %vm2185, %v2051, %v2313
        %v2442 = vsel %vm2186, %v2053, %v2314
        %v2443 = vsel %vm2187, %v1864, %v2315
        %v2444 = vsel %vm2188, %v1866, %v2316
        %v2445 = vsel %vm2189, %v2057, %v2317
        %v2446 = vsel %vm2190, %v2059, %v2318
        %v2447 = vsel %vm2191, %v1868, %v2319
        %v2448 = vsel %vm2192, %v1870, %v2320
        %v2449 = vsel %vm2193, %v2061, %v2321
        %v2450 = vsel %vm2194, %v2063, %v2322
        %v2451 = vsel %vm2195, %v1874, %v2323
        %v2452 = vsel %vm2196, %v1876, %v2324
        %v2453 = vsel %vm2197, %v2067, %v2325
        %v2454 = vsel %vm2198, %v2069, %v2326
        %v2455 = vsel %vm2199, %v1878, %v2327
        %v2456 = vsel %vm2200, %v1880, %v2328
        %v2457 = vsel %vm2201, %v2071, %v2329
        %v2458 = vsel %vm2202, %v2073, %v2330
        %v2459 = vpack.c.bf16 %v2335, %v2331
        %v2460 = vpack.c.bf16 %v2336, %v2332
        %v2461 = vpack.c.bf16 %v2337, %v2333
        %v2462 = vpack.c.bf16 %v2338, %v2334
        %v2463 = vpack.c.bf16 %v2343, %v2339
        %v2464 = vpack.c.bf16 %v2344, %v2340
        %v2465 = vpack.c.bf16 %v2345, %v2341
        %v2466 = vpack.c.bf16 %v2346, %v2342
        %v2467 = vpack.c.bf16 %v2351, %v2347
        %v2468 = vpack.c.bf16 %v2352, %v2348
        %v2469 = vpack.c.bf16 %v2353, %v2349
        %v2470 = vpack.c.bf16 %v2354, %v2350
        %v2471 = vpack.c.bf16 %v2359, %v2355
        %v2472 = vpack.c.bf16 %v2360, %v2356
        %v2473 = vpack.c.bf16 %v2361, %v2357
        %v2474 = vpack.c.bf16 %v2362, %v2358
        %v2475 = vpack.c.bf16 %v2367, %v2363
        %v2476 = vpack.c.bf16 %v2368, %v2364
        %v2477 = vpack.c.bf16 %v2369, %v2365
        %v2478 = vpack.c.bf16 %v2370, %v2366
        %v2479 = vpack.c.bf16 %v2375, %v2371
        %v2480 = vpack.c.bf16 %v2376, %v2372
        %v2481 = vpack.c.bf16 %v2377, %v2373
        %v2482 = vpack.c.bf16 %v2378, %v2374
        %v2483 = vpack.c.bf16 %v2383, %v2379
        %v2484 = vpack.c.bf16 %v2384, %v2380
        %v2485 = vpack.c.bf16 %v2385, %v2381
        %v2486 = vpack.c.bf16 %v2386, %v2382
        %v2487 = vpack.c.bf16 %v2391, %v2387
        %v2488 = vpack.c.bf16 %v2392, %v2388
        %v2489 = vpack.c.bf16 %v2393, %v2389
        %v2490 = vpack.c.bf16 %v2394, %v2390
        %v2491 = vpack.c.bf16 %v2399, %v2395
        %v2492 = vpack.c.bf16 %v2400, %v2396
        %v2493 = vpack.c.bf16 %v2401, %v2397
        %v2494 = vpack.c.bf16 %v2402, %v2398
        %v2495 = vpack.c.bf16 %v2407, %v2403
        %v2496 = vpack.c.bf16 %v2408, %v2404
        %v2497 = vpack.c.bf16 %v2409, %v2405
        %v2498 = vpack.c.bf16 %v2410, %v2406
        %v2499 = vpack.c.bf16 %v2415, %v2411
        %v2500 = vpack.c.bf16 %v2416, %v2412
        %v2501 = vpack.c.bf16 %v2417, %v2413
        %v2502 = vpack.c.bf16 %v2418, %v2414
        %v2503 = vpack.c.bf16 %v2423, %v2419
        %v2504 = vpack.c.bf16 %v2424, %v2420
        %v2505 = vpack.c.bf16 %v2425, %v2421
        %v2506 = vpack.c.bf16 %v2426, %v2422
        %v2507 = vpack.c.bf16 %v2431, %v2427
        %v2508 = vpack.c.bf16 %v2432, %v2428
        %v2509 = vpack.c.bf16 %v2433, %v2429
        %v2510 = vpack.c.bf16 %v2434, %v2430
        %v2511 = vpack.c.bf16 %v2439, %v2435
        %v2512 = vpack.c.bf16 %v2440, %v2436
        %v2513 = vpack.c.bf16 %v2441, %v2437
        %v2514 = vpack.c.bf16 %v2442, %v2438
        %v2515 = vpack.c.bf16 %v2447, %v2443
        %v2516 = vpack.c.bf16 %v2448, %v2444
        %v2517 = vpack.c.bf16 %v2449, %v2445
        %v2518 = vpack.c.bf16 %v2450, %v2446
        %v2519 = vpack.c.bf16 %v2455, %v2451
        %v2520 = vpack.c.bf16 %v2456, %v2452
        %v2521 = vpack.c.bf16 %v2457, %v2453
        %v2522 = vpack.c.bf16 %v2458, %v2454
        %v2523 = vld [vmem:[#allocation5] sm:$0xff]
        %v2524 = vld [vmem:[#allocation5 + $0x8] sm:$0xff]
        %v2525 = vld [vmem:[#allocation5 + $0x10] sm:$0xff]
        %v2526 = vld [vmem:[#allocation5 + $0x18] sm:$0xff]
        %v2527 = vld [vmem:[#allocation5 + $0x20] sm:$0xff]
        %v2528 = vld [vmem:[#allocation5 + $0x28] sm:$0xff]
        %v2529 = vld [vmem:[#allocation5 + $0x30] sm:$0xff]
        %v2530 = vld [vmem:[#allocation5 + $0x38] sm:$0xff]
        %v2531 = vld [vmem:[#allocation5 + $0x40] sm:$0xff]
        %v2532 = vld [vmem:[#allocation5 + $0x48] sm:$0xff]
        %v2533 = vld [vmem:[#allocation5 + $0x50] sm:$0xff]
        %v2534 = vld [vmem:[#allocation5 + $0x58] sm:$0xff]
        %v2535 = vld [vmem:[#allocation5 + $0x60] sm:$0xff]
        %v2536 = vld [vmem:[#allocation5 + $0x68] sm:$0xff]
        %v2537 = vld [vmem:[#allocation5 + $0x70] sm:$0xff]
        %v2538 = vld [vmem:[#allocation5 + $0x78] sm:$0xff]
        %v2539 = vld [vmem:[#allocation5 + $0x80] sm:$0xff]
        %v2540 = vld [vmem:[#allocation5 + $0x88] sm:$0xff]
        %v2541 = vld [vmem:[#allocation5 + $0x90] sm:$0xff]
        %v2542 = vld [vmem:[#allocation5 + $0x98] sm:$0xff]
        %v2543 = vld [vmem:[#allocation5 + $0xa0] sm:$0xff]
        %v2544 = vld [vmem:[#allocation5 + $0xa8] sm:$0xff]
        %v2545 = vld [vmem:[#allocation5 + $0xb0] sm:$0xff]
        %v2546 = vld [vmem:[#allocation5 + $0xb8] sm:$0xff]
        %v2547 = vld [vmem:[#allocation5 + $0xc0] sm:$0xff]
        %v2548 = vld [vmem:[#allocation5 + $0xc8] sm:$0xff]
        %v2549 = vld [vmem:[#allocation5 + $0xd0] sm:$0xff]
        %v2550 = vld [vmem:[#allocation5 + $0xd8] sm:$0xff]
        %v2551 = vld [vmem:[#allocation5 + $0xe0] sm:$0xff]
        %v2552 = vld [vmem:[#allocation5 + $0xe8] sm:$0xff]
        %v2553 = vld [vmem:[#allocation5 + $0xf0] sm:$0xff]
        %v2554 = vld [vmem:[#allocation5 + $0xf8] sm:$0xff]
        %v2555 = vld [vmem:[#allocation5 + $0x100] sm:$0xff]
        %v2556 = vld [vmem:[#allocation5 + $0x108] sm:$0xff]
        %v2557 = vld [vmem:[#allocation5 + $0x110] sm:$0xff]
        %v2558 = vld [vmem:[#allocation5 + $0x118] sm:$0xff]
        %v2559 = vld [vmem:[#allocation5 + $0x120] sm:$0xff]
        %v2560 = vld [vmem:[#allocation5 + $0x128] sm:$0xff]
        %v2561 = vld [vmem:[#allocation5 + $0x130] sm:$0xff]
        %v2562 = vld [vmem:[#allocation5 + $0x138] sm:$0xff]
        %v2563 = vld [vmem:[#allocation5 + $0x140] sm:$0xff]
        %v2564 = vld [vmem:[#allocation5 + $0x148] sm:$0xff]
        %v2565 = vld [vmem:[#allocation5 + $0x150] sm:$0xff]
        %v2566 = vld [vmem:[#allocation5 + $0x158] sm:$0xff]
        %v2567 = vld [vmem:[#allocation5 + $0x160] sm:$0xff]
        %v2568 = vld [vmem:[#allocation5 + $0x168] sm:$0xff]
        %v2569 = vld [vmem:[#allocation5 + $0x170] sm:$0xff]
        %v2570 = vld [vmem:[#allocation5 + $0x178] sm:$0xff]
        %v2571 = vld [vmem:[#allocation5 + $0x180] sm:$0xff]
        %v2572 = vld [vmem:[#allocation5 + $0x188] sm:$0xff]
        %v2573 = vld [vmem:[#allocation5 + $0x190] sm:$0xff]
        %v2574 = vld [vmem:[#allocation5 + $0x198] sm:$0xff]
        %v2575 = vld [vmem:[#allocation5 + $0x1a0] sm:$0xff]
        %v2576 = vld [vmem:[#allocation5 + $0x1a8] sm:$0xff]
        %v2577 = vld [vmem:[#allocation5 + $0x1b0] sm:$0xff]
        %v2578 = vld [vmem:[#allocation5 + $0x1b8] sm:$0xff]
        %v2579 = vld [vmem:[#allocation5 + $0x1c0] sm:$0xff]
        %v2580 = vld [vmem:[#allocation5 + $0x1c8] sm:$0xff]
        %v2581 = vld [vmem:[#allocation5 + $0x1d0] sm:$0xff]
        %v2582 = vld [vmem:[#allocation5 + $0x1d8] sm:$0xff]
        %v2583 = vld [vmem:[#allocation5 + $0x1e0] sm:$0xff]
        %v2584 = vld [vmem:[#allocation5 + $0x1e8] sm:$0xff]
        %v2585 = vld [vmem:[#allocation5 + $0x1f0] sm:$0xff]
        %v2586 = vld [vmem:[#allocation5 + $0x1f8] sm:$0xff]
        %v2587 = vld [vmem:[%s8] sm:$0x3]
        %v2589 = vlaneseq
        %v2590 = vshrl.u32 %v2589, 7
        %v2591 = vsub.s32 0, %v2590
        %v2592 = vrot.slane %v2587, %v2591
        %v2593 = vlaneseq
        %v2594 = vshrl.u32 %v2593, 7
        %v2595 = vsub.s32 1, %v2594
        %v2596 = vrot.slane %v2587, %v2595
        %v2663 = vunpack.c.l.b16 %v2523
        %v2664 = vunpack.c.h.b16 %v2523
        %v2665 = vunpack.c.l.b16 %v2524
        %v2666 = vunpack.c.h.b16 %v2524
        %v2667 = vunpack.c.l.b16 %v2525
        %v2668 = vunpack.c.h.b16 %v2525
        %v2669 = vunpack.c.l.b16 %v2526
        %v2670 = vunpack.c.h.b16 %v2526
        %v2671 = vunpack.c.l.b16 %v2527
        %v2672 = vunpack.c.h.b16 %v2527
        %v2673 = vunpack.c.l.b16 %v2528
        %v2674 = vunpack.c.h.b16 %v2528
        %v2675 = vunpack.c.l.b16 %v2529
        %v2676 = vunpack.c.h.b16 %v2529
        %v2677 = vunpack.c.l.b16 %v2530
        %v2678 = vunpack.c.h.b16 %v2530
        %v2679 = vunpack.c.l.b16 %v2531
        %v2680 = vunpack.c.h.b16 %v2531
        %v2681 = vunpack.c.l.b16 %v2532
        %v2682 = vunpack.c.h.b16 %v2532
        %v2683 = vunpack.c.l.b16 %v2533
        %v2684 = vunpack.c.h.b16 %v2533
        %v2685 = vunpack.c.l.b16 %v2534
        %v2686 = vunpack.c.h.b16 %v2534
        %v2687 = vunpack.c.l.b16 %v2535
        %v2688 = vunpack.c.h.b16 %v2535
        %v2689 = vunpack.c.l.b16 %v2536
        %v2690 = vunpack.c.h.b16 %v2536
        %v2691 = vunpack.c.l.b16 %v2537
        %v2692 = vunpack.c.h.b16 %v2537
        %v2693 = vunpack.c.l.b16 %v2538
        %v2694 = vunpack.c.h.b16 %v2538
        %v2695 = vunpack.c.l.b16 %v2539
        %v2696 = vunpack.c.h.b16 %v2539
        %v2697 = vunpack.c.l.b16 %v2540
        %v2698 = vunpack.c.h.b16 %v2540
        %v2699 = vunpack.c.l.b16 %v2541
        %v2700 = vunpack.c.h.b16 %v2541
        %v2701 = vunpack.c.l.b16 %v2542
        %v2702 = vunpack.c.h.b16 %v2542
        %v2703 = vunpack.c.l.b16 %v2543
        %v2704 = vunpack.c.h.b16 %v2543
        %v2705 = vunpack.c.l.b16 %v2544
        %v2706 = vunpack.c.h.b16 %v2544
        %v2707 = vunpack.c.l.b16 %v2545
        %v2708 = vunpack.c.h.b16 %v2545
        %v2709 = vunpack.c.l.b16 %v2546
        %v2710 = vunpack.c.h.b16 %v2546
        %v2711 = vunpack.c.l.b16 %v2547
        %v2712 = vunpack.c.h.b16 %v2547
        %v2713 = vunpack.c.l.b16 %v2548
        %v2714 = vunpack.c.h.b16 %v2548
        %v2715 = vunpack.c.l.b16 %v2549
        %v2716 = vunpack.c.h.b16 %v2549
        %v2717 = vunpack.c.l.b16 %v2550
        %v2718 = vunpack.c.h.b16 %v2550
        %v2719 = vunpack.c.l.b16 %v2551
        %v2720 = vunpack.c.h.b16 %v2551
        %v2721 = vunpack.c.l.b16 %v2552
        %v2722 = vunpack.c.h.b16 %v2552
        %v2723 = vunpack.c.l.b16 %v2553
        %v2724 = vunpack.c.h.b16 %v2553
        %v2725 = vunpack.c.l.b16 %v2554
        %v2726 = vunpack.c.h.b16 %v2554
        %v2727 = vunpack.c.l.b16 %v2555
        %v2728 = vunpack.c.h.b16 %v2555
        %v2729 = vunpack.c.l.b16 %v2556
        %v2730 = vunpack.c.h.b16 %v2556
        %v2731 = vunpack.c.l.b16 %v2557
        %v2732 = vunpack.c.h.b16 %v2557
        %v2733 = vunpack.c.l.b16 %v2558
        %v2734 = vunpack.c.h.b16 %v2558
        %v2735 = vunpack.c.l.b16 %v2559
        %v2736 = vunpack.c.h.b16 %v2559
        %v2737 = vunpack.c.l.b16 %v2560
        %v2738 = vunpack.c.h.b16 %v2560
        %v2739 = vunpack.c.l.b16 %v2561
        %v2740 = vunpack.c.h.b16 %v2561
        %v2741 = vunpack.c.l.b16 %v2562
        %v2742 = vunpack.c.h.b16 %v2562
        %v2743 = vunpack.c.l.b16 %v2563
        %v2744 = vunpack.c.h.b16 %v2563
        %v2745 = vunpack.c.l.b16 %v2564
        %v2746 = vunpack.c.h.b16 %v2564
        %v2747 = vunpack.c.l.b16 %v2565
        %v2748 = vunpack.c.h.b16 %v2565
        %v2749 = vunpack.c.l.b16 %v2566
        %v2750 = vunpack.c.h.b16 %v2566
        %v2751 = vunpack.c.l.b16 %v2567
        %v2752 = vunpack.c.h.b16 %v2567
        %v2753 = vunpack.c.l.b16 %v2568
        %v2754 = vunpack.c.h.b16 %v2568
        %v2755 = vunpack.c.l.b16 %v2569
        %v2756 = vunpack.c.h.b16 %v2569
        %v2757 = vunpack.c.l.b16 %v2570
        %v2758 = vunpack.c.h.b16 %v2570
        %v2759 = vunpack.c.l.b16 %v2571
        %v2760 = vunpack.c.h.b16 %v2571
        %v2761 = vunpack.c.l.b16 %v2572
        %v2762 = vunpack.c.h.b16 %v2572
        %v2763 = vunpack.c.l.b16 %v2573
        %v2764 = vunpack.c.h.b16 %v2573
        %v2765 = vunpack.c.l.b16 %v2574
        %v2766 = vunpack.c.h.b16 %v2574
        %v2767 = vunpack.c.l.b16 %v2575
        %v2768 = vunpack.c.h.b16 %v2575
        %v2769 = vunpack.c.l.b16 %v2576
        %v2770 = vunpack.c.h.b16 %v2576
        %v2771 = vunpack.c.l.b16 %v2577
        %v2772 = vunpack.c.h.b16 %v2577
        %v2773 = vunpack.c.l.b16 %v2578
        %v2774 = vunpack.c.h.b16 %v2578
        %v2775 = vunpack.c.l.b16 %v2579
        %v2776 = vunpack.c.h.b16 %v2579
        %v2777 = vunpack.c.l.b16 %v2580
        %v2778 = vunpack.c.h.b16 %v2580
        %v2779 = vunpack.c.l.b16 %v2581
        %v2780 = vunpack.c.h.b16 %v2581
        %v2781 = vunpack.c.l.b16 %v2582
        %v2782 = vunpack.c.h.b16 %v2582
        %v2783 = vunpack.c.l.b16 %v2583
        %v2784 = vunpack.c.h.b16 %v2583
        %v2785 = vunpack.c.l.b16 %v2584
        %v2786 = vunpack.c.h.b16 %v2584
        %v2787 = vunpack.c.l.b16 %v2585
        %v2788 = vunpack.c.h.b16 %v2585
        %v2789 = vunpack.c.l.b16 %v2586
        %v2790 = vunpack.c.h.b16 %v2586
        %v2791 = vpack.c.b16 %v2665, %v2663
        %v2792 = vpack.c.b16 %v2666, %v2664
        %v2793 = vpack.c.b16 %v2669, %v2667
        %v2794 = vpack.c.b16 %v2670, %v2668
        %v2795 = vpack.c.b16 %v2673, %v2671
        %v2796 = vpack.c.b16 %v2674, %v2672
        %v2797 = vpack.c.b16 %v2677, %v2675
        %v2798 = vpack.c.b16 %v2678, %v2676
        %v2799 = vpack.c.b16 %v2681, %v2679
        %v2800 = vpack.c.b16 %v2682, %v2680
        %v2801 = vpack.c.b16 %v2685, %v2683
        %v2802 = vpack.c.b16 %v2686, %v2684
        %v2803 = vpack.c.b16 %v2689, %v2687
        %v2804 = vpack.c.b16 %v2690, %v2688
        %v2805 = vpack.c.b16 %v2693, %v2691
        %v2806 = vpack.c.b16 %v2694, %v2692
        %v2807 = vpack.c.b16 %v2697, %v2695
        %v2808 = vpack.c.b16 %v2698, %v2696
        %v2809 = vpack.c.b16 %v2701, %v2699
        %v2810 = vpack.c.b16 %v2702, %v2700
        %v2811 = vpack.c.b16 %v2705, %v2703
        %v2812 = vpack.c.b16 %v2706, %v2704
        %v2813 = vpack.c.b16 %v2709, %v2707
        %v2814 = vpack.c.b16 %v2710, %v2708
        %v2815 = vpack.c.b16 %v2713, %v2711
        %v2816 = vpack.c.b16 %v2714, %v2712
        %v2817 = vpack.c.b16 %v2717, %v2715
        %v2818 = vpack.c.b16 %v2718, %v2716
        %v2819 = vpack.c.b16 %v2721, %v2719
        %v2820 = vpack.c.b16 %v2722, %v2720
        %v2821 = vpack.c.b16 %v2725, %v2723
        %v2822 = vpack.c.b16 %v2726, %v2724
        %v2823 = vpack.c.b16 %v2729, %v2727
        %v2824 = vpack.c.b16 %v2730, %v2728
        %v2825 = vpack.c.b16 %v2733, %v2731
        %v2826 = vpack.c.b16 %v2734, %v2732
        %v2827 = vpack.c.b16 %v2737, %v2735
        %v2828 = vpack.c.b16 %v2738, %v2736
        %v2829 = vpack.c.b16 %v2741, %v2739
        %v2830 = vpack.c.b16 %v2742, %v2740
        %v2831 = vpack.c.b16 %v2745, %v2743
        %v2832 = vpack.c.b16 %v2746, %v2744
        %v2833 = vpack.c.b16 %v2749, %v2747
        %v2834 = vpack.c.b16 %v2750, %v2748
        %v2835 = vpack.c.b16 %v2753, %v2751
        %v2836 = vpack.c.b16 %v2754, %v2752
        %v2837 = vpack.c.b16 %v2757, %v2755
        %v2838 = vpack.c.b16 %v2758, %v2756
        %v2839 = vpack.c.b16 %v2761, %v2759
        %v2840 = vpack.c.b16 %v2762, %v2760
        %v2841 = vpack.c.b16 %v2765, %v2763
        %v2842 = vpack.c.b16 %v2766, %v2764
        %v2843 = vpack.c.b16 %v2769, %v2767
        %v2844 = vpack.c.b16 %v2770, %v2768
        %v2845 = vpack.c.b16 %v2773, %v2771
        %v2846 = vpack.c.b16 %v2774, %v2772
        %v2847 = vpack.c.b16 %v2777, %v2775
        %v2848 = vpack.c.b16 %v2778, %v2776
        %v2849 = vpack.c.b16 %v2781, %v2779
        %v2850 = vpack.c.b16 %v2782, %v2780
        %v2851 = vpack.c.b16 %v2785, %v2783
        %v2852 = vpack.c.b16 %v2786, %v2784
        %v2853 = vpack.c.b16 %v2789, %v2787
        %v2854 = vpack.c.b16 %v2790, %v2788
        %2919 = vmatprep.subr.bf16.mxu0 %v2806
        %2920 = vmatpush1.bf16.msra.mxu0 %v2805
        %2921 = vmatprep.subr.bf16.mxu0 %v2804
        %2922 = vmatpush1.bf16.msra.mxu0 %v2803
        %2923 = vmatprep.subr.bf16.mxu0 %v2802
        %2924 = vmatpush1.bf16.msra.mxu0 %v2801
        %2925 = vmatprep.subr.bf16.mxu0 %v2800
        %2926 = vmatpush1.bf16.msra.mxu0 %v2799
        %2927 = vmatprep.subr.bf16.mxu0 %v2798
        %2928 = vmatpush1.bf16.msra.mxu0 %v2797
        %2929 = vmatprep.subr.bf16.mxu0 %v2796
        %2930 = vmatpush1.bf16.msra.mxu0 %v2795
        %2931 = vmatprep.subr.bf16.mxu0 %v2794
        %2932 = vmatpush1.bf16.msra.mxu0 %v2793
        %2933 = vmatprep.subr.bf16.mxu0 %v2792
        %2934 = vmatpush1.bf16.msra.mxu0 %v2791
        %2935 = vmatprep.subr.bf16.mxu0 %v2822
        %2936 = vmatpush2.bf16.msra.mxu0 %v2821
        %2937 = vmatprep.subr.bf16.mxu0 %v2820
        %2938 = vmatpush2.bf16.msra.mxu0 %v2819
        %2939 = vmatprep.subr.bf16.mxu0 %v2818
        %2940 = vmatpush2.bf16.msra.mxu0 %v2817
        %2941 = vmatprep.subr.bf16.mxu0 %v2816
        %2942 = vmatpush2.bf16.msra.mxu0 %v2815
        %2943 = vmatprep.subr.bf16.mxu0 %v2814
        %2944 = vmatpush2.bf16.msra.mxu0 %v2813
        %2945 = vmatprep.subr.bf16.mxu0 %v2812
        %2946 = vmatpush2.bf16.msra.mxu0 %v2811
        %2947 = vmatprep.subr.bf16.mxu0 %v2810
        %2948 = vmatpush2.bf16.msra.mxu0 %v2809
        %2949 = vmatprep.subr.bf16.mxu0 %v2808
        %2950 = vmatpush2.bf16.msra.mxu0 %v2807
        %2951 = vmatprep.mubr.bf16.mxu0 %v2460
        %2952 = vmatmul.mubr.bf16.gmra.mxu0 %v2459
        %v2953 = vpop.f32.mrf.mxu0
        %v2954 = vadd.f32 %v2592, %v2953
        %v2955 = vpop.f32.mrf.mxu0
        %v2956 = vadd.f32 %v2596, %v2955
        %v2957 = vpop.f32.mrf.mxu0
        %v2958 = vadd.f32 %v2592, %v2957
        %v2959 = vpop.f32.mrf.mxu0
        %v2960 = vadd.f32 %v2596, %v2959
        %2961 = vmatprep.mubr.bf16.mxu0 %v2464
        %2962 = vmatmul.mubr.bf16.gmra.mxu0 %v2463
        %v2963 = vpop.f32.mrf.mxu0
        %v2964 = vadd.f32 %v2592, %v2963
        %v2965 = vpop.f32.mrf.mxu0
        %v2966 = vadd.f32 %v2596, %v2965
        %v2967 = vpop.f32.mrf.mxu0
        %v2968 = vadd.f32 %v2592, %v2967
        %v2969 = vpop.f32.mrf.mxu0
        %v2970 = vadd.f32 %v2596, %v2969
        %2971 = vmatprep.mubr.bf16.mxu0 %v2468
        %2972 = vmatmul.mubr.bf16.gmra.mxu0 %v2467
        %v2973 = vpop.f32.mrf.mxu0
        %v2974 = vadd.f32 %v2592, %v2973
        %v2975 = vpop.f32.mrf.mxu0
        %v2976 = vadd.f32 %v2596, %v2975
        %v2977 = vpop.f32.mrf.mxu0
        %v2978 = vadd.f32 %v2592, %v2977
        %v2979 = vpop.f32.mrf.mxu0
        %v2980 = vadd.f32 %v2596, %v2979
        %2981 = vmatprep.mubr.bf16.mxu0 %v2472
        %2982 = vmatmul.mubr.bf16.gmra.mxu0 %v2471
        %v2983 = vpop.f32.mrf.mxu0
        %v2984 = vadd.f32 %v2592, %v2983
        %v2985 = vpop.f32.mrf.mxu0
        %v2986 = vadd.f32 %v2596, %v2985
        %v2987 = vpop.f32.mrf.mxu0
        %v2988 = vadd.f32 %v2592, %v2987
        %v2989 = vpop.f32.mrf.mxu0
        %v2990 = vadd.f32 %v2596, %v2989
        %2991 = vmatprep.mubr.bf16.mxu0 %v2476
        %2992 = vmatmul.mubr.bf16.gmra.mxu0 %v2475
        %v2993 = vpop.f32.mrf.mxu0
        %v2994 = vadd.f32 %v2592, %v2993
        %v2995 = vpop.f32.mrf.mxu0
        %v2996 = vadd.f32 %v2596, %v2995
        %v2997 = vpop.f32.mrf.mxu0
        %v2998 = vadd.f32 %v2592, %v2997
        %v2999 = vpop.f32.mrf.mxu0
        %v3000 = vadd.f32 %v2596, %v2999
        %3001 = vmatprep.mubr.bf16.mxu0 %v2480
        %3002 = vmatmul.mubr.bf16.gmra.mxu0 %v2479
        %v3003 = vpop.f32.mrf.mxu0
        %v3004 = vadd.f32 %v2592, %v3003
        %v3005 = vpop.f32.mrf.mxu0
        %v3006 = vadd.f32 %v2596, %v3005
        %v3007 = vpop.f32.mrf.mxu0
        %v3008 = vadd.f32 %v2592, %v3007
        %v3009 = vpop.f32.mrf.mxu0
        %v3010 = vadd.f32 %v2596, %v3009
        %3011 = vmatprep.mubr.bf16.mxu0 %v2484
        %3012 = vmatmul.mubr.bf16.gmra.mxu0 %v2483
        %v3013 = vpop.f32.mrf.mxu0
        %v3014 = vadd.f32 %v2592, %v3013
        %v3015 = vpop.f32.mrf.mxu0
        %v3016 = vadd.f32 %v2596, %v3015
        %v3017 = vpop.f32.mrf.mxu0
        %v3018 = vadd.f32 %v2592, %v3017
        %v3019 = vpop.f32.mrf.mxu0
        %v3020 = vadd.f32 %v2596, %v3019
        %3021 = vmatprep.mubr.bf16.mxu0 %v2488
        %3022 = vmatmul.mubr.bf16.gmra.mxu0 %v2487
        %v3023 = vpop.f32.mrf.mxu0
        %v3024 = vadd.f32 %v2592, %v3023
        %v3025 = vpop.f32.mrf.mxu0
        %v3026 = vadd.f32 %v2596, %v3025
        %v3027 = vpop.f32.mrf.mxu0
        %v3028 = vadd.f32 %v2592, %v3027
        %v3029 = vpop.f32.mrf.mxu0
        %v3030 = vadd.f32 %v2596, %v3029
        %3031 = vmatprep.mubr.bf16.mxu0 %v2492
        %3032 = vmatmul.mubr.bf16.gmra.mxu0 %v2491
        %v3033 = vpop.f32.mrf.mxu0
        %v3034 = vadd.f32 %v2592, %v3033
        %v3035 = vpop.f32.mrf.mxu0
        %v3036 = vadd.f32 %v2596, %v3035
        %v3037 = vpop.f32.mrf.mxu0
        %v3038 = vadd.f32 %v2592, %v3037
        %v3039 = vpop.f32.mrf.mxu0
        %v3040 = vadd.f32 %v2596, %v3039
        %3041 = vmatprep.mubr.bf16.mxu0 %v2496
        %3042 = vmatmul.mubr.bf16.gmra.mxu0 %v2495
        %v3043 = vpop.f32.mrf.mxu0
        %v3044 = vadd.f32 %v2592, %v3043
        %v3045 = vpop.f32.mrf.mxu0
        %v3046 = vadd.f32 %v2596, %v3045
        %v3047 = vpop.f32.mrf.mxu0
        %v3048 = vadd.f32 %v2592, %v3047
        %v3049 = vpop.f32.mrf.mxu0
        %v3050 = vadd.f32 %v2596, %v3049
        %3051 = vmatprep.mubr.bf16.mxu0 %v2500
        %3052 = vmatmul.mubr.bf16.gmra.mxu0 %v2499
        %v3053 = vpop.f32.mrf.mxu0
        %v3054 = vadd.f32 %v2592, %v3053
        %v3055 = vpop.f32.mrf.mxu0
        %v3056 = vadd.f32 %v2596, %v3055
        %v3057 = vpop.f32.mrf.mxu0
        %v3058 = vadd.f32 %v2592, %v3057
        %v3059 = vpop.f32.mrf.mxu0
        %v3060 = vadd.f32 %v2596, %v3059
        %3061 = vmatprep.mubr.bf16.mxu0 %v2504
        %3062 = vmatmul.mubr.bf16.gmra.mxu0 %v2503
        %v3063 = vpop.f32.mrf.mxu0
        %v3064 = vadd.f32 %v2592, %v3063
        %v3065 = vpop.f32.mrf.mxu0
        %v3066 = vadd.f32 %v2596, %v3065
        %v3067 = vpop.f32.mrf.mxu0
        %v3068 = vadd.f32 %v2592, %v3067
        %v3069 = vpop.f32.mrf.mxu0
        %v3070 = vadd.f32 %v2596, %v3069
        %3071 = vmatprep.mubr.bf16.mxu0 %v2508
        %3072 = vmatmul.mubr.bf16.gmra.mxu0 %v2507
        %v3073 = vpop.f32.mrf.mxu0
        %v3074 = vadd.f32 %v2592, %v3073
        %v3075 = vpop.f32.mrf.mxu0
        %v3076 = vadd.f32 %v2596, %v3075
        %v3077 = vpop.f32.mrf.mxu0
        %v3078 = vadd.f32 %v2592, %v3077
        %v3079 = vpop.f32.mrf.mxu0
        %v3080 = vadd.f32 %v2596, %v3079
        %3081 = vmatprep.mubr.bf16.mxu0 %v2512
        %3082 = vmatmul.mubr.bf16.gmra.mxu0 %v2511
        %v3083 = vpop.f32.mrf.mxu0
        %v3084 = vadd.f32 %v2592, %v3083
        %v3085 = vpop.f32.mrf.mxu0
        %v3086 = vadd.f32 %v2596, %v3085
        %v3087 = vpop.f32.mrf.mxu0
        %v3088 = vadd.f32 %v2592, %v3087
        %v3089 = vpop.f32.mrf.mxu0
        %v3090 = vadd.f32 %v2596, %v3089
        %3091 = vmatprep.mubr.bf16.mxu0 %v2516
        %3092 = vmatmul.mubr.bf16.gmra.mxu0 %v2515
        %v3093 = vpop.f32.mrf.mxu0
        %v3094 = vadd.f32 %v2592, %v3093
        %v3095 = vpop.f32.mrf.mxu0
        %v3096 = vadd.f32 %v2596, %v3095
        %v3097 = vpop.f32.mrf.mxu0
        %v3098 = vadd.f32 %v2592, %v3097
        %v3099 = vpop.f32.mrf.mxu0
        %v3100 = vadd.f32 %v2596, %v3099
        %3101 = vmatprep.mubr.bf16.mxu0 %v2520
        %3102 = vmatmul.mubr.bf16.gmra.mxu0 %v2519
        %v3103 = vpop.f32.mrf.mxu0
        %v3104 = vadd.f32 %v2592, %v3103
        %v3105 = vpop.f32.mrf.mxu0
        %v3106 = vadd.f32 %v2596, %v3105
        %v3107 = vpop.f32.mrf.mxu0
        %v3108 = vadd.f32 %v2592, %v3107
        %v3109 = vpop.f32.mrf.mxu0
        %v3110 = vadd.f32 %v2596, %v3109
        %3111 = vdwg.mxu0
        %3112 = vmatprep.subr.bf16.mxu0 %v2838
        %3113 = vmatpush1.bf16.msra.mxu0 %v2837
        %3114 = vmatprep.subr.bf16.mxu0 %v2836
        %3115 = vmatpush1.bf16.msra.mxu0 %v2835
        %3116 = vmatprep.subr.bf16.mxu0 %v2834
        %3117 = vmatpush1.bf16.msra.mxu0 %v2833
        %3118 = vmatprep.subr.bf16.mxu0 %v2832
        %3119 = vmatpush1.bf16.msra.mxu0 %v2831
        %3120 = vmatprep.subr.bf16.mxu0 %v2830
        %3121 = vmatpush1.bf16.msra.mxu0 %v2829
        %3122 = vmatprep.subr.bf16.mxu0 %v2828
        %3123 = vmatpush1.bf16.msra.mxu0 %v2827
        %3124 = vmatprep.subr.bf16.mxu0 %v2826
        %3125 = vmatpush1.bf16.msra.mxu0 %v2825
        %3126 = vmatprep.subr.bf16.mxu0 %v2824
        %3127 = vmatpush1.bf16.msra.mxu0 %v2823
        %3128 = vmatprep.subr.bf16.mxu0 %v2854
        %3129 = vmatpush2.bf16.msra.mxu0 %v2853
        %3130 = vmatprep.subr.bf16.mxu0 %v2852
        %3131 = vmatpush2.bf16.msra.mxu0 %v2851
        %3132 = vmatprep.subr.bf16.mxu0 %v2850
        %3133 = vmatpush2.bf16.msra.mxu0 %v2849
        %3134 = vmatprep.subr.bf16.mxu0 %v2848
        %3135 = vmatpush2.bf16.msra.mxu0 %v2847
        %3136 = vmatprep.subr.bf16.mxu0 %v2846
        %3137 = vmatpush2.bf16.msra.mxu0 %v2845
        %3138 = vmatprep.subr.bf16.mxu0 %v2844
        %3139 = vmatpush2.bf16.msra.mxu0 %v2843
        %3140 = vmatprep.subr.bf16.mxu0 %v2842
        %3141 = vmatpush2.bf16.msra.mxu0 %v2841
        %3142 = vmatprep.subr.bf16.mxu0 %v2840
        %3143 = vmatpush2.bf16.msra.mxu0 %v2839
        %3144 = vmatprep.mubr.bf16.mxu0 %v2462
        %3145 = vmatmul.mubr.bf16.gmra.mxu0 %v2461
        %v3146 = vpop.f32.mrf.mxu0
        %v3147 = vadd.f32 %v2954, %v3146
        %v3148 = vpop.f32.mrf.mxu0
        %v3149 = vadd.f32 %v2956, %v3148
        %v3150 = vpop.f32.mrf.mxu0
        %v3151 = vadd.f32 %v2958, %v3150
        %v3152 = vpop.f32.mrf.mxu0
        %v3153 = vadd.f32 %v2960, %v3152
        %3154 = vmatprep.mubr.bf16.mxu0 %v2466
        %3155 = vmatmul.mubr.bf16.gmra.mxu0 %v2465
        %v3156 = vpop.f32.mrf.mxu0
        %v3157 = vadd.f32 %v2964, %v3156
        %v3158 = vpop.f32.mrf.mxu0
        %v3159 = vadd.f32 %v2966, %v3158
        %v3160 = vpop.f32.mrf.mxu0
        %v3161 = vadd.f32 %v2968, %v3160
        %v3162 = vpop.f32.mrf.mxu0
        %v3163 = vadd.f32 %v2970, %v3162
        %3164 = vmatprep.mubr.bf16.mxu0 %v2470
        %3165 = vmatmul.mubr.bf16.gmra.mxu0 %v2469
        %v3166 = vpop.f32.mrf.mxu0
        %v3167 = vadd.f32 %v2974, %v3166
        %v3168 = vpop.f32.mrf.mxu0
        %v3169 = vadd.f32 %v2976, %v3168
        %v3170 = vpop.f32.mrf.mxu0
        %v3171 = vadd.f32 %v2978, %v3170
        %v3172 = vpop.f32.mrf.mxu0
        %v3173 = vadd.f32 %v2980, %v3172
        %3174 = vmatprep.mubr.bf16.mxu0 %v2474
        %3175 = vmatmul.mubr.bf16.gmra.mxu0 %v2473
        %v3176 = vpop.f32.mrf.mxu0
        %v3177 = vadd.f32 %v2984, %v3176
        %v3178 = vpop.f32.mrf.mxu0
        %v3179 = vadd.f32 %v2986, %v3178
        %v3180 = vpop.f32.mrf.mxu0
        %v3181 = vadd.f32 %v2988, %v3180
        %v3182 = vpop.f32.mrf.mxu0
        %v3183 = vadd.f32 %v2990, %v3182
        %3184 = vmatprep.mubr.bf16.mxu0 %v2478
        %3185 = vmatmul.mubr.bf16.gmra.mxu0 %v2477
        %v3186 = vpop.f32.mrf.mxu0
        %v3187 = vadd.f32 %v2994, %v3186
        %v3188 = vpop.f32.mrf.mxu0
        %v3189 = vadd.f32 %v2996, %v3188
        %v3190 = vpop.f32.mrf.mxu0
        %v3191 = vadd.f32 %v2998, %v3190
        %v3192 = vpop.f32.mrf.mxu0
        %v3193 = vadd.f32 %v3000, %v3192
        %3194 = vmatprep.mubr.bf16.mxu0 %v2482
        %3195 = vmatmul.mubr.bf16.gmra.mxu0 %v2481
        %v3196 = vpop.f32.mrf.mxu0
        %v3197 = vadd.f32 %v3004, %v3196
        %v3198 = vpop.f32.mrf.mxu0
        %v3199 = vadd.f32 %v3006, %v3198
        %v3200 = vpop.f32.mrf.mxu0
        %v3201 = vadd.f32 %v3008, %v3200
        %v3202 = vpop.f32.mrf.mxu0
        %v3203 = vadd.f32 %v3010, %v3202
        %3204 = vmatprep.mubr.bf16.mxu0 %v2486
        %3205 = vmatmul.mubr.bf16.gmra.mxu0 %v2485
        %v3206 = vpop.f32.mrf.mxu0
        %v3207 = vadd.f32 %v3014, %v3206
        %v3208 = vpop.f32.mrf.mxu0
        %v3209 = vadd.f32 %v3016, %v3208
        %v3210 = vpop.f32.mrf.mxu0
        %v3211 = vadd.f32 %v3018, %v3210
        %v3212 = vpop.f32.mrf.mxu0
        %v3213 = vadd.f32 %v3020, %v3212
        %3214 = vmatprep.mubr.bf16.mxu0 %v2490
        %3215 = vmatmul.mubr.bf16.gmra.mxu0 %v2489
        %v3216 = vpop.f32.mrf.mxu0
        %v3217 = vadd.f32 %v3024, %v3216
        %v3218 = vpop.f32.mrf.mxu0
        %v3219 = vadd.f32 %v3026, %v3218
        %v3220 = vpop.f32.mrf.mxu0
        %v3221 = vadd.f32 %v3028, %v3220
        %v3222 = vpop.f32.mrf.mxu0
        %v3223 = vadd.f32 %v3030, %v3222
        %3224 = vmatprep.mubr.bf16.mxu0 %v2494
        %3225 = vmatmul.mubr.bf16.gmra.mxu0 %v2493
        %v3226 = vpop.f32.mrf.mxu0
        %v3227 = vadd.f32 %v3034, %v3226
        %v3228 = vpop.f32.mrf.mxu0
        %v3229 = vadd.f32 %v3036, %v3228
        %v3230 = vpop.f32.mrf.mxu0
        %v3231 = vadd.f32 %v3038, %v3230
        %v3232 = vpop.f32.mrf.mxu0
        %v3233 = vadd.f32 %v3040, %v3232
        %3234 = vmatprep.mubr.bf16.mxu0 %v2498
        %3235 = vmatmul.mubr.bf16.gmra.mxu0 %v2497
        %v3236 = vpop.f32.mrf.mxu0
        %v3237 = vadd.f32 %v3044, %v3236
        %v3238 = vpop.f32.mrf.mxu0
        %v3239 = vadd.f32 %v3046, %v3238
        %v3240 = vpop.f32.mrf.mxu0
        %v3241 = vadd.f32 %v3048, %v3240
        %v3242 = vpop.f32.mrf.mxu0
        %v3243 = vadd.f32 %v3050, %v3242
        %3244 = vmatprep.mubr.bf16.mxu0 %v2502
        %3245 = vmatmul.mubr.bf16.gmra.mxu0 %v2501
        %v3246 = vpop.f32.mrf.mxu0
        %v3247 = vadd.f32 %v3054, %v3246
        %v3248 = vpop.f32.mrf.mxu0
        %v3249 = vadd.f32 %v3056, %v3248
        %v3250 = vpop.f32.mrf.mxu0
        %v3251 = vadd.f32 %v3058, %v3250
        %v3252 = vpop.f32.mrf.mxu0
        %v3253 = vadd.f32 %v3060, %v3252
        %3254 = vmatprep.mubr.bf16.mxu0 %v2506
        %3255 = vmatmul.mubr.bf16.gmra.mxu0 %v2505
        %v3256 = vpop.f32.mrf.mxu0
        %v3257 = vadd.f32 %v3064, %v3256
        %v3258 = vpop.f32.mrf.mxu0
        %v3259 = vadd.f32 %v3066, %v3258
        %v3260 = vpop.f32.mrf.mxu0
        %v3261 = vadd.f32 %v3068, %v3260
        %v3262 = vpop.f32.mrf.mxu0
        %v3263 = vadd.f32 %v3070, %v3262
        %3264 = vmatprep.mubr.bf16.mxu0 %v2510
        %3265 = vmatmul.mubr.bf16.gmra.mxu0 %v2509
        %v3266 = vpop.f32.mrf.mxu0
        %v3267 = vadd.f32 %v3074, %v3266
        %v3268 = vpop.f32.mrf.mxu0
        %v3269 = vadd.f32 %v3076, %v3268
        %v3270 = vpop.f32.mrf.mxu0
        %v3271 = vadd.f32 %v3078, %v3270
        %v3272 = vpop.f32.mrf.mxu0
        %v3273 = vadd.f32 %v3080, %v3272
        %3274 = vmatprep.mubr.bf16.mxu0 %v2514
        %3275 = vmatmul.mubr.bf16.gmra.mxu0 %v2513
        %v3276 = vpop.f32.mrf.mxu0
        %v3277 = vadd.f32 %v3084, %v3276
        %v3278 = vpop.f32.mrf.mxu0
        %v3279 = vadd.f32 %v3086, %v3278
        %v3280 = vpop.f32.mrf.mxu0
        %v3281 = vadd.f32 %v3088, %v3280
        %v3282 = vpop.f32.mrf.mxu0
        %v3283 = vadd.f32 %v3090, %v3282
        %3284 = vmatprep.mubr.bf16.mxu0 %v2518
        %3285 = vmatmul.mubr.bf16.gmra.mxu0 %v2517
        %v3286 = vpop.f32.mrf.mxu0
        %v3287 = vadd.f32 %v3094, %v3286
        %v3288 = vpop.f32.mrf.mxu0
        %v3289 = vadd.f32 %v3096, %v3288
        %v3290 = vpop.f32.mrf.mxu0
        %v3291 = vadd.f32 %v3098, %v3290
        %v3292 = vpop.f32.mrf.mxu0
        %v3293 = vadd.f32 %v3100, %v3292
        %3294 = vmatprep.mubr.bf16.mxu0 %v2522
        %3295 = vmatmul.mubr.bf16.gmra.mxu0 %v2521
        %v3296 = vpop.f32.mrf.mxu0
        %v3297 = vadd.f32 %v3104, %v3296
        %v3298 = vpop.f32.mrf.mxu0
        %v3299 = vadd.f32 %v3106, %v3298
        %v3300 = vpop.f32.mrf.mxu0
        %v3301 = vadd.f32 %v3108, %v3300
        %v3302 = vpop.f32.mrf.mxu0
        %v3303 = vadd.f32 %v3110, %v3302
        %3304 = vdwg.mxu0
        %v3305 = vtanh.pop %v3147
        %v3306 = vtanh.pop %v3149
        %v3307 = vtanh.pop %v3151
        %v3308 = vtanh.pop %v3153
        %v3309 = vtanh.pop %v3157
        %v3310 = vtanh.pop %v3159
        %v3311 = vtanh.pop %v3161
        %v3312 = vtanh.pop %v3163
        %v3313 = vtanh.pop %v3167
        %v3314 = vtanh.pop %v3169
        %v3315 = vtanh.pop %v3171
        %v3316 = vtanh.pop %v3173
        %v3317 = vtanh.pop %v3177
        %v3318 = vtanh.pop %v3179
        %v3319 = vtanh.pop %v3181
        %v3320 = vtanh.pop %v3183
        %v3321 = vtanh.pop %v3187
        %v3322 = vtanh.pop %v3189
        %v3323 = vtanh.pop %v3191
        %v3324 = vtanh.pop %v3193
        %v3325 = vtanh.pop %v3197
        %v3326 = vtanh.pop %v3199
        %v3327 = vtanh.pop %v3201
        %v3328 = vtanh.pop %v3203
        %v3329 = vtanh.pop %v3207
        %v3330 = vtanh.pop %v3209
        %v3331 = vtanh.pop %v3211
        %v3332 = vtanh.pop %v3213
        %v3333 = vtanh.pop %v3217
        %v3334 = vtanh.pop %v3219
        %v3335 = vtanh.pop %v3221
        %v3336 = vtanh.pop %v3223
        %v3337 = vtanh.pop %v3227
        %v3338 = vtanh.pop %v3229
        %v3339 = vtanh.pop %v3231
        %v3340 = vtanh.pop %v3233
        %v3341 = vtanh.pop %v3237
        %v3342 = vtanh.pop %v3239
        %v3343 = vtanh.pop %v3241
        %v3344 = vtanh.pop %v3243
        %v3345 = vtanh.pop %v3247
        %v3346 = vtanh.pop %v3249
        %v3347 = vtanh.pop %v3251
        %v3348 = vtanh.pop %v3253
        %v3349 = vtanh.pop %v3257
        %v3350 = vtanh.pop %v3259
        %v3351 = vtanh.pop %v3261
        %v3352 = vtanh.pop %v3263
        %v3353 = vtanh.pop %v3267
        %v3354 = vtanh.pop %v3269
        %v3355 = vtanh.pop %v3271
        %v3356 = vtanh.pop %v3273
        %v3357 = vtanh.pop %v3277
        %v3358 = vtanh.pop %v3279
        %v3359 = vtanh.pop %v3281
        %v3360 = vtanh.pop %v3283
        %v3361 = vtanh.pop %v3287
        %v3362 = vtanh.pop %v3289
        %v3363 = vtanh.pop %v3291
        %v3364 = vtanh.pop %v3293
        %v3365 = vtanh.pop %v3297
        %v3366 = vtanh.pop %v3299
        %v3367 = vtanh.pop %v3301
        %v3368 = vtanh.pop %v3303
        %3369 = vst [vmem:[%s356] sm:$0xff] %v3305
        %3370 = vst [vmem:[%s356 + $0x8] sm:$0xff] %v3306
        %3371 = vst [vmem:[%s356 + $0x10] sm:$0xff] %v3307
        %3372 = vst [vmem:[%s356 + $0x18] sm:$0xff] %v3308
        %3373 = vst [vmem:[%s356 + $0x20] sm:$0xff] %v3309
        %3374 = vst [vmem:[%s356 + $0x28] sm:$0xff] %v3310
        %3375 = vst [vmem:[%s356 + $0x30] sm:$0xff] %v3311
        %3376 = vst [vmem:[%s356 + $0x38] sm:$0xff] %v3312
        %3377 = vst [vmem:[%s356 + $0x40] sm:$0xff] %v3313
        %3378 = vst [vmem:[%s356 + $0x48] sm:$0xff] %v3314
        %3379 = vst [vmem:[%s356 + $0x50] sm:$0xff] %v3315
        %3380 = vst [vmem:[%s356 + $0x58] sm:$0xff] %v3316
        %3381 = vst [vmem:[%s356 + $0x60] sm:$0xff] %v3317
        %3382 = vst [vmem:[%s356 + $0x68] sm:$0xff] %v3318
        %3383 = vst [vmem:[%s356 + $0x70] sm:$0xff] %v3319
        %3384 = vst [vmem:[%s356 + $0x78] sm:$0xff] %v3320
        %3385 = vst [vmem:[%s356 + $0x80] sm:$0xff] %v3321
        %3386 = vst [vmem:[%s356 + $0x88] sm:$0xff] %v3322
        %3387 = vst [vmem:[%s356 + $0x90] sm:$0xff] %v3323
        %3388 = vst [vmem:[%s356 + $0x98] sm:$0xff] %v3324
        %3389 = vst [vmem:[%s356 + $0xa0] sm:$0xff] %v3325
        %3390 = vst [vmem:[%s356 + $0xa8] sm:$0xff] %v3326
        %3391 = vst [vmem:[%s356 + $0xb0] sm:$0xff] %v3327
        %3392 = vst [vmem:[%s356 + $0xb8] sm:$0xff] %v3328
        %3393 = vst [vmem:[%s356 + $0xc0] sm:$0xff] %v3329
        %3394 = vst [vmem:[%s356 + $0xc8] sm:$0xff] %v3330
        %3395 = vst [vmem:[%s356 + $0xd0] sm:$0xff] %v3331
        %3396 = vst [vmem:[%s356 + $0xd8] sm:$0xff] %v3332
        %3397 = vst [vmem:[%s356 + $0xe0] sm:$0xff] %v3333
        %3398 = vst [vmem:[%s356 + $0xe8] sm:$0xff] %v3334
        %3399 = vst [vmem:[%s356 + $0xf0] sm:$0xff] %v3335
        %3400 = vst [vmem:[%s356 + $0xf8] sm:$0xff] %v3336
        %3401 = vst [vmem:[%s356 + $0x100] sm:$0xff] %v3337
        %3402 = vst [vmem:[%s356 + $0x108] sm:$0xff] %v3338
        %3403 = vst [vmem:[%s356 + $0x110] sm:$0xff] %v3339
        %3404 = vst [vmem:[%s356 + $0x118] sm:$0xff] %v3340
        %3405 = vst [vmem:[%s356 + $0x120] sm:$0xff] %v3341
        %3406 = vst [vmem:[%s356 + $0x128] sm:$0xff] %v3342
        %3407 = vst [vmem:[%s356 + $0x130] sm:$0xff] %v3343
        %3408 = vst [vmem:[%s356 + $0x138] sm:$0xff] %v3344
        %3409 = vst [vmem:[%s356 + $0x140] sm:$0xff] %v3345
        %3410 = vst [vmem:[%s356 + $0x148] sm:$0xff] %v3346
        %3411 = vst [vmem:[%s356 + $0x150] sm:$0xff] %v3347
        %3412 = vst [vmem:[%s356 + $0x158] sm:$0xff] %v3348
        %3413 = vst [vmem:[%s356 + $0x160] sm:$0xff] %v3349
        %3414 = vst [vmem:[%s356 + $0x168] sm:$0xff] %v3350
        %3415 = vst [vmem:[%s356 + $0x170] sm:$0xff] %v3351
        %3416 = vst [vmem:[%s356 + $0x178] sm:$0xff] %v3352
        %3417 = vst [vmem:[%s356 + $0x180] sm:$0xff] %v3353
        %3418 = vst [vmem:[%s356 + $0x188] sm:$0xff] %v3354
        %3419 = vst [vmem:[%s356 + $0x190] sm:$0xff] %v3355
        %3420 = vst [vmem:[%s356 + $0x198] sm:$0xff] %v3356
        %3421 = vst [vmem:[%s356 + $0x1a0] sm:$0xff] %v3357
        %3422 = vst [vmem:[%s356 + $0x1a8] sm:$0xff] %v3358
        %3423 = vst [vmem:[%s356 + $0x1b0] sm:$0xff] %v3359
        %3424 = vst [vmem:[%s356 + $0x1b8] sm:$0xff] %v3360
        %3425 = vst [vmem:[%s356 + $0x1c0] sm:$0xff] %v3361
        %3426 = vst [vmem:[%s356 + $0x1c8] sm:$0xff] %v3362
        %3427 = vst [vmem:[%s356 + $0x1d0] sm:$0xff] %v3363
        %3428 = vst [vmem:[%s356 + $0x1d8] sm:$0xff] %v3364
        %3429 = vst [vmem:[%s356 + $0x1e0] sm:$0xff] %v3365
        %3430 = vst [vmem:[%s356 + $0x1e8] sm:$0xff] %v3366
        %3431 = vst [vmem:[%s356 + $0x1f0] sm:$0xff] %v3367
        %3432 = vst [vmem:[%s356 + $0x1f8] sm:$0xff] %v3368
        %s3433 = sand.u32 %s227, 1
        %s3434 = scalar_lea.sflag [#allocation4], %s3433
        %s3435 = sand.u32 %s227, 1
        %s3436 = smul.addr %s3435, 512
        %s3437 = scalar_lea.vmem [#allocation7], %s3436
        // Predicated region
        $region65: #{tpu_custom_call.1} parent=55 // pred_check
          %p3438 = pneg %p237
        $region66: #{tpu_custom_call.1} parent=55 // pred_check_branch
          %3440 = sbr.rel (%p3438) target = $region68
        $region67: #{tpu_custom_call.1} parent=55 // pred_region
          %s3441 = smul.u32 32, %s25
          %s3443 = ssub.s32 8192, 8192
          %3444 = vsyncadd %s3434, %s3443
          %s3445 = smul.addr %s3441, 2
          %s3446 = smul.addr %s3445, 128
          %s3447 = scalar_lea.hbm %s9, %s3446
          %s3448 = sshll.u32 %s3437, 4
          %s3449 = int_to_ptr.vmem [resolvable:$true] %s3448
          %3454 = dma.vmem_to_hbm [thread:$0]  %s3449, 8192, %s3447, %s3434, 256, 256, 16
        $region68: #{tpu_custom_call.1} parent=55 // pred_fallthru
          _
      $region56: #{tpu_custom_call.1} parent=5 // pred_fallthru
        _
      %p3455 = scmp.le.s32.totalorder 2, %s20
      // Predicated region
      $region69: #{tpu_custom_call.1} parent=5 // pred_check
        %p3456 = pneg %p3455
      $region70: #{tpu_custom_call.1} parent=5 // pred_check_branch
        %3458 = sbr.rel (%p3456) target = $region72
      $region71: #{tpu_custom_call.1} parent=5 // pred_region
        %s3459 = ssub.s32 %s20, 2
        // Predicated region
        $region73: #{tpu_custom_call.1} parent=71 // pred_check
          %p3460 = pneg %p243
        $region74: #{tpu_custom_call.1} parent=71 // pred_check_branch
          %3462 = sbr.rel (%p3460) target = $region76
        $region75: #{tpu_custom_call.1} parent=71 // pred_region
          %s3463 = sand.u32 %s228, 1
          %s3464 = scalar_lea.sflag [#allocation4], %s3463
          %s3465 = sand.u32 %s228, 1
          %s3466 = smul.addr %s3465, 512
          %s3467 = scalar_lea.vmem [#allocation7], %s3466
          %3468 = dma.done %s3464, 8192
        $region76: #{tpu_custom_call.1} parent=71 // pred_fallthru
          _
      $region72: #{tpu_custom_call.1} parent=5 // pred_fallthru
        _
    $region6: #{tpu_custom_call.1} parent=1 // loop_footer
      %s24 = sadd.s32 1, %s20
    $region7: #{tpu_custom_call.1} parent=1 // loop_footer_branch
      %19 = sbr.rel target = $region3
    $region8: #{tpu_custom_call.1} parent=1 // loop_exit
      _
    %3469 = vsyncpa [#allocation3], 1
    %s3470 = scalar_lea.sflag [#allocation3], 1
    %3471 = vsyncpa %s3470, 1
    %3472 = vsyncpa [#allocation6], 1
    %3473 = vsyncpa [#allocation4], 1
    %s3474 = scalar_lea.sflag [#allocation4], 1
    %3475 = vsyncpa %s3474, 1

</llo_original>
